<compile_context>
chip_gen: v5e
topology: v5e:2x2
jax: 0.10.0
libtpu: 0.0.40
codegen_flags: <defaults>
</compile_context>

<pallas_src>
import jax
import jax.numpy as jnp
from jax import lax
from jax.experimental import pallas as pl
from jax.experimental.pallas import tpu as pltpu


def _rnn_mlp_kernel(
    lens_ref,        # [Bp, 1]    int32  lengths (padded rows have length 1)
    emb_ref,         # [T*Bp, D]  bf16   time-major embedded input, row = t*Bp + b
    wih1_ref,        # [D, Hp]    bf16
    b1_ref,          # [1, Hp]    f32
    whh1_ref,        # [Hp, Hp]   bf16
    wih2_ref,        # [Hp, Hp]   bf16
    b2_ref,          # [1, Hp]    f32
    whh2_ref,        # [Hp, Hp]   bf16
    wfc1_ref,        # [Hp, Hp]   bf16
    bfc1_ref,        # [1, Hp]    f32
    wfc2_ref,        # [Hp, 128]  bf16   (output lane-padded, col 0 valid)
    bfc2_ref,        # [1, 128]   f32
    out_ref,         # [Bp, 128]  f32
    xw1_sc,          # [T*Bp, Hp] f32  hoisted layer-1 input projection
    h1_sc,           # [T*Bp, Hp] f32  layer-1 outputs for all timesteps
    xw2_sc,          # [T*Bp, Hp] f32  hoisted layer-2 input projection
):
    Bp = lens_ref.shape[0]
    TBp, Hp = xw1_sc.shape
    T = TBp // Bp

    # --- hoisted non-recurrent projection for layer 1: one MXU matmul for all
    #     timesteps, bias b1 folded in (removes T tiny matmuls from the chain). ---
    xw1_sc[...] = (
        jnp.dot(emb_ref[...], wih1_ref[...], preferred_element_type=jnp.float32)
        + b1_ref[...]
    )

    zeros = jnp.zeros((Bp, Hp), jnp.float32)

    # --- loop A: layer-1 recurrence only (one [Bp,Hp]x[Hp,Hp] matmul per step). ---
    def step_a(t, h1_prev):
        start = pl.multiple_of(t * Bp, Bp)         # Bp = 8 -> sublane-aligned slice
        xw1_t = xw1_sc[pl.ds(start, Bp), :]        # [Bp, Hp] f32
        h1 = jnp.tanh(
            xw1_t
            + jnp.dot(h1_prev.astype(jnp.bfloat16), whh1_ref[...],
                      preferred_element_type=jnp.float32)
        )
        h1_sc[pl.ds(start, Bp), :] = h1
        return h1

    lax.fori_loop(0, T, step_a, zeros, unroll=True)

    # --- hoisted non-recurrent projection for layer 2: one big MXU matmul over all
    #     timesteps of h1, bias b2 folded in. ---
    xw2_sc[...] = (
        jnp.dot(h1_sc[...].astype(jnp.bfloat16), wih2_ref[...],
                preferred_element_type=jnp.float32)
        + b2_ref[...]
    )

    # Hoisted scalars / broadcasts (JAX does not CSE broadcast_in_dim in loops).
    lens_m1 = lens_ref[...] - 1                    # [Bp, 1]

    # --- loop B: layer-2 recurrence + latch of h2 at each row's last valid step
    #     (emulates pack_padded_sequence + gather(output, lengths - 1)). ---
    def step_b(t, carry):
        h2_prev, hlast = carry
        start = pl.multiple_of(t * Bp, Bp)
        xw2_t = xw2_sc[pl.ds(start, Bp), :]        # [Bp, Hp] f32
        h2 = jnp.tanh(
            xw2_t
            + jnp.dot(h2_prev.astype(jnp.bfloat16), whh2_ref[...],
                      preferred_element_type=jnp.float32)
        )
        hlast = jnp.where(lens_m1 == t, h2, hlast)
        return h2, hlast

    _, hlast = lax.fori_loop(0, T, step_b, (zeros, zeros), unroll=True)

    # fc1 -> relu -> fc2 (lane-dense 128-wide output store).
    h = jnp.maximum(
        jnp.dot(hlast.astype(jnp.bfloat16), wfc1_ref[...],
                preferred_element_type=jnp.float32)
        + bfc1_ref[...],
        0.0,
    )
    out_ref[...] = (
        jnp.dot(h.astype(jnp.bfloat16), wfc2_ref[...],
                preferred_element_type=jnp.float32)
        + bfc2_ref[...]
    )


def vanilla_rnn_forward(embedded_btd, lengths, params, *, hidden_pad=256):
    """embedded_btd: [B, T, D] f32 (batch_first, like the PyTorch module),
    lengths: [B] int, params: f32 weights in [in, out] layout (see _init_params)."""
    B, T, D = embedded_btd.shape
    H = params["whh1"].shape[0]
    Hp = hidden_pad
    assert H <= Hp
    Bp = max(8, ((B + 7) // 8) * 8)                 # sublane-aligned batch

    def padw(w, rows, cols):
        return jnp.zeros((rows, cols), jnp.float32).at[: w.shape[0], : w.shape[1]].set(w)

    # weights: zero-pad H -> Hp (padded h-columns stay exactly 0 through tanh/relu),
    # cast MXU operands to bf16 (accumulation stays f32 in the kernel).
    wih1 = padw(params["wih1"], D, Hp).astype(jnp.bfloat16)
    b1 = padw(params["b1"], 1, Hp)
    whh1 = padw(params["whh1"], Hp, Hp).astype(jnp.bfloat16)
    wih2 = padw(params["wih2"], Hp, Hp).astype(jnp.bfloat16)
    b2 = padw(params["b2"], 1, Hp)
    whh2 = padw(params["whh2"], Hp, Hp).astype(jnp.bfloat16)
    wfc1 = padw(params["wfc1"], Hp, Hp).astype(jnp.bfloat16)
    bfc1 = padw(params["bfc1"], 1, Hp)
    wfc2 = padw(params["wfc2"], Hp, 128).astype(jnp.bfloat16)   # lane-dense output
    bfc2 = padw(params["bfc2"], 1, 128)

    # activations: pad batch, go time-major, flatten to [T*Bp, D], cast to bf16
    emb_p = jnp.zeros((Bp, T, D), jnp.float32).at[:B].set(embedded_btd.astype(jnp.float32))
    emb2d = jnp.transpose(emb_p, (1, 0, 2)).reshape(T * Bp, D).astype(jnp.bfloat16)
    lens_p = jnp.ones((Bp,), jnp.int32).at[:B].set(lengths.astype(jnp.int32)).reshape(Bp, 1)

    inputs = (lens_p, emb2d, wih1, b1, whh1, wih2, b2, whh2, wfc1, bfc1, wfc2, bfc2)
    vmem = pl.BlockSpec(memory_space=pltpu.MemorySpace.VMEM)

    out = pl.pallas_call(
        _rnn_mlp_kernel,
        out_shape=jax.ShapeDtypeStruct((Bp, 128), jnp.float32),
        in_specs=[vmem] * len(inputs),               # derived from inputs -> no mismatch
        out_specs=vmem,
        scratch_shapes=[
            pltpu.VMEM((T * Bp, Hp), jnp.float32),   # xw1
            pltpu.VMEM((T * Bp, Hp), jnp.float32),   # h1 (all timesteps)
            pltpu.VMEM((T * Bp, Hp), jnp.float32),   # xw2
        ],
    )(*inputs)

    return out[:B, :1]


def _reference(embedded_btd, lengths, params):
    """Pure-JAX reference mirroring the kernel numerics (bf16 MXU operands,
    f32 accumulation and elementwise math)."""
    B, T, D = embedded_btd.shape
    H = params["whh1"].shape[0]

    def dot(a, b):
        return jnp.dot(a.astype(jnp.bfloat16), b.astype(jnp.bfloat16),
                       preferred_element_type=jnp.float32)

    h1 = jnp.zeros((B, H), jnp.float32)
    h2 = jnp.zeros((B, H), jnp.float32)
    hlast = jnp.zeros((B, H), jnp.float32)
    for t in range(T):
        x_t = embedded_btd[:, t, :].astype(jnp.float32)
        h1 = jnp.tanh(dot(x_t, params["wih1"]) + dot(h1, params["whh1"]) + params["b1"])
        h2 = jnp.tanh(dot(h1, params["wih2"]) + dot(h2, params["whh2"]) + params["b2"])
        hlast = jnp.where((lengths[:, None] - 1) == t, h2, hlast)
    h = jax.nn.relu(dot(hlast, params["wfc1"]) + params["bfc1"])
    return dot(h, params["wfc2"]) + params["bfc2"]


def _init_params(key, embed_dim=300, hidden=150):
    """Deterministic init matching the module's shapes; stored as [in, out] f32.
    RNN weights: U(-1/sqrt(H), 1/sqrt(H)) (PyTorch nn.RNN default; b = b_ih + b_hh).
    Linear: kaiming-normal fan_in (std=sqrt(2/fan_in)), bias = 0."""
    ks = jax.random.split(key, 10)
    bound = 1.0 / (hidden ** 0.5)

    def u(k, shape):
        return jax.random.uniform(k, shape, jnp.float32, -bound, bound)

    wih1 = u(ks[0], (hidden, embed_dim)).T                # [300, H]
    whh1 = u(ks[1], (hidden, hidden)).T
    b1 = (u(ks[2], (hidden,)) + u(ks[3], (hidden,))).reshape(1, hidden)
    wih2 = u(ks[4], (hidden, hidden)).T
    whh2 = u(ks[5], (hidden, hidden)).T
    b2 = (u(ks[6], (hidden,)) + u(ks[7], (hidden,))).reshape(1, hidden)
    wfc1 = (jax.random.normal(ks[8], (hidden, hidden)) * (2.0 / hidden) ** 0.5).T
    bfc1 = jnp.zeros((1, hidden), jnp.float32)
    wfc2 = (jax.random.normal(ks[9], (1, hidden)) * (2.0 / hidden) ** 0.5).T   # [H, 1]
    bfc2 = jnp.zeros((1, 1), jnp.float32)

    return dict(
        wih1=wih1.astype(jnp.float32), whh1=whh1.astype(jnp.float32), b1=b1,
        wih2=wih2.astype(jnp.float32), whh2=whh2.astype(jnp.float32), b2=b2,
        wfc1=wfc1.astype(jnp.float32), bfc1=bfc1,
        wfc2=wfc2.astype(jnp.float32), bfc2=bfc2,
    )


if __name__ == "__main__":
    B, T, V, EMBED, HIDDEN = 2, 8, 50, 300, 150

    key = jax.random.PRNGKey(0)
    k_emb, k_tok, k_par = jax.random.split(key, 3)

    # embedding table + integer token ids (embedding lookup is plain-JAX glue)
    emb_matrix = jax.random.normal(k_emb, (V, EMBED), jnp.float32)
    x_tokens = jax.random.randint(k_tok, (B, T), 0, V)            # [B, T] ids
    lengths = jnp.array([5, 8], dtype=jnp.int32)                  # [B]

    params = _init_params(k_par, embed_dim=EMBED, hidden=HIDDEN)
    embedded = emb_matrix[x_tokens]                               # [B, T, 300]

    out = vanilla_rnn_forward(embedded, lengths, params)
    out = jax.block_until_ready(out)

    ref = jax.block_until_ready(_reference(embedded, lengths, params))
    assert out.shape == (B, 1)
    assert jnp.allclose(out, ref, rtol=1e-2, atol=1e-2), (out, ref)

    print("KERNEL_OK")
</pallas_src>

<mosaic_0001>
module attributes {stable_mosaic.version = 11 : i64} {
  func.func @_rnn_mlp_kernel(%arg0: memref<8x1xi32, #tpu.memory_space<vmem>>, %arg1: memref<64x300xbf16, #tpu.memory_space<vmem>>, %arg2: memref<300x256xbf16, #tpu.memory_space<vmem>>, %arg3: memref<1x256xf32, #tpu.memory_space<vmem>>, %arg4: memref<256x256xbf16, #tpu.memory_space<vmem>>, %arg5: memref<256x256xbf16, #tpu.memory_space<vmem>>, %arg6: memref<1x256xf32, #tpu.memory_space<vmem>>, %arg7: memref<256x256xbf16, #tpu.memory_space<vmem>>, %arg8: memref<256x256xbf16, #tpu.memory_space<vmem>>, %arg9: memref<1x256xf32, #tpu.memory_space<vmem>>, %arg10: memref<256x128xbf16, #tpu.memory_space<vmem>>, %arg11: memref<1x128xf32, #tpu.memory_space<vmem>>, %arg12: memref<8x128xf32, #tpu.memory_space<vmem>>, %arg13: memref<64x256xf32, #tpu.memory_space<vmem>>, %arg14: memref<64x256xf32, #tpu.memory_space<vmem>>, %arg15: memref<64x256xf32, #tpu.memory_space<vmem>>) attributes {dimension_semantics = [], scalar_prefetch = 0 : i64, scratch_operands = 3 : i64, tpu.core_type = #tpu.core_type<tc>} {
    %c0 = arith.constant 0 : index
    %c0_0 = arith.constant 0 : index
    %0 = vector.load %arg1[%c0, %c0_0] : memref<64x300xbf16, #tpu.memory_space<vmem>>, vector<64x300xbf16>
    %c0_1 = arith.constant 0 : index
    %c0_2 = arith.constant 0 : index
    %1 = vector.load %arg2[%c0_1, %c0_2] : memref<300x256xbf16, #tpu.memory_space<vmem>>, vector<300x256xbf16>
    %cst = arith.constant dense<0.000000e+00> : vector<64x256xf32>
    %2 = tpu.matmul %0, %1, %cst {dimension_numbers = #tpu.dot_dimension_numbers<[1], [0], [0], [1], [0, 0, 1, 1], [], []>} : vector<64x300xbf16>, vector<300x256xbf16>, vector<64x256xf32> -> vector<64x256xf32>
    %c0_3 = arith.constant 0 : index
    %c0_4 = arith.constant 0 : index
    %3 = vector.load %arg3[%c0_3, %c0_4] : memref<1x256xf32, #tpu.memory_space<vmem>>, vector<1x256xf32>
    %4 = vector.broadcast %3 : vector<1x256xf32> to vector<64x256xf32>
    %5 = arith.addf %2, %4 : vector<64x256xf32>
    %c0_5 = arith.constant 0 : index
    %c0_6 = arith.constant 0 : index
    %6 = vector.load %arg13[%c0_5, %c0_6] : memref<64x256xf32, #tpu.memory_space<vmem>>, vector<64x256xf32>
    tpu.vector_store %arg13[%c0_5, %c0_6], %5 {strides = array<i32>} : memref<64x256xf32, #tpu.memory_space<vmem>>, vector<64x256xf32>,
    %cst_7 = arith.constant 0.000000e+00 : f32
    %7 = vector.broadcast %cst_7 : f32 to vector<8x256xf32>
    %c0_i32 = arith.constant 0 : i32
    %c8_i32 = arith.constant 8 : i32
    %8 = arith.muli %c0_i32, %c8_i32 : i32
    %9 = tpu.assume_multiple %8, 8 : i32
    %10 = arith.index_cast %9 : i32 to index
    %c0_8 = arith.constant 0 : index
    %11 = vector.load %arg13[%10, %c0_8] : memref<64x256xf32, #tpu.memory_space<vmem>>, vector<8x256xf32>
    %12 = arith.truncf %7 : vector<8x256xf32> to vector<8x256xbf16>
    %c0_9 = arith.constant 0 : index
    %c0_10 = arith.constant 0 : index
    %13 = vector.load %arg4[%c0_9, %c0_10] : memref<256x256xbf16, #tpu.memory_space<vmem>>, vector<256x256xbf16>
    %cst_11 = arith.constant dense<0.000000e+00> : vector<8x256xf32>
    %14 = tpu.matmul %12, %13, %cst_11 {dimension_numbers = #tpu.dot_dimension_numbers<[1], [0], [0], [1], [0, 0, 1, 1], [], []>} : vector<8x256xbf16>, vector<256x256xbf16>, vector<8x256xf32> -> vector<8x256xf32>
    %15 = arith.addf %11, %14 : vector<8x256xf32>
    %16 = math.tanh %15 : vector<8x256xf32>
    %17 = arith.index_cast %9 : i32 to index
    %c0_12 = arith.constant 0 : index
    %18 = vector.load %arg14[%17, %c0_12] : memref<64x256xf32, #tpu.memory_space<vmem>>, vector<8x256xf32>
    tpu.vector_store %arg14[%17, %c0_12], %16 {strides = array<i32>} : memref<64x256xf32, #tpu.memory_space<vmem>>, vector<8x256xf32>,
    %c1_i32 = arith.constant 1 : i32
    %c8_i32_13 = arith.constant 8 : i32
    %19 = arith.muli %c1_i32, %c8_i32_13 : i32
    %20 = tpu.assume_multiple %19, 8 : i32
    %21 = arith.index_cast %20 : i32 to index
    %c0_14 = arith.constant 0 : index
    %22 = vector.load %arg13[%21, %c0_14] : memref<64x256xf32, #tpu.memory_space<vmem>>, vector<8x256xf32>
    %23 = arith.truncf %16 : vector<8x256xf32> to vector<8x256xbf16>
    %c0_15 = arith.constant 0 : index
    %c0_16 = arith.constant 0 : index
    %24 = vector.load %arg4[%c0_15, %c0_16] : memref<256x256xbf16, #tpu.memory_space<vmem>>, vector<256x256xbf16>
    %cst_17 = arith.constant dense<0.000000e+00> : vector<8x256xf32>
    %25 = tpu.matmul %23, %24, %cst_17 {dimension_numbers = #tpu.dot_dimension_numbers<[1], [0], [0], [1], [0, 0, 1, 1], [], []>} : vector<8x256xbf16>, vector<256x256xbf16>, vector<8x256xf32> -> vector<8x256xf32>
    %26 = arith.addf %22, %25 : vector<8x256xf32>
    %27 = math.tanh %26 : vector<8x256xf32>
    %28 = arith.index_cast %20 : i32 to index
    %c0_18 = arith.constant 0 : index
    %29 = vector.load %arg14[%28, %c0_18] : memref<64x256xf32, #tpu.memory_space<vmem>>, vector<8x256xf32>
    tpu.vector_store %arg14[%28, %c0_18], %27 {strides = array<i32>} : memref<64x256xf32, #tpu.memory_space<vmem>>, vector<8x256xf32>,
    %c2_i32 = arith.constant 2 : i32
    %c8_i32_19 = arith.constant 8 : i32
    %30 = arith.muli %c2_i32, %c8_i32_19 : i32
    %31 = tpu.assume_multiple %30, 8 : i32
    %32 = arith.index_cast %31 : i32 to index
    %c0_20 = arith.constant 0 : index
    %33 = vector.load %arg13[%32, %c0_20] : memref<64x256xf32, #tpu.memory_space<vmem>>, vector<8x256xf32>
    %34 = arith.truncf %27 : vector<8x256xf32> to vector<8x256xbf16>
    %c0_21 = arith.constant 0 : index
    %c0_22 = arith.constant 0 : index
    %35 = vector.load %arg4[%c0_21, %c0_22] : memref<256x256xbf16, #tpu.memory_space<vmem>>, vector<256x256xbf16>
    %cst_23 = arith.constant dense<0.000000e+00> : vector<8x256xf32>
    %36 = tpu.matmul %34, %35, %cst_23 {dimension_numbers = #tpu.dot_dimension_numbers<[1], [0], [0], [1], [0, 0, 1, 1], [], []>} : vector<8x256xbf16>, vector<256x256xbf16>, vector<8x256xf32> -> vector<8x256xf32>
    %37 = arith.addf %33, %36 : vector<8x256xf32>
    %38 = math.tanh %37 : vector<8x256xf32>
    %39 = arith.index_cast %31 : i32 to index
    %c0_24 = arith.constant 0 : index
    %40 = vector.load %arg14[%39, %c0_24] : memref<64x256xf32, #tpu.memory_space<vmem>>, vector<8x256xf32>
    tpu.vector_store %arg14[%39, %c0_24], %38 {strides = array<i32>} : memref<64x256xf32, #tpu.memory_space<vmem>>, vector<8x256xf32>,
    %c3_i32 = arith.constant 3 : i32
    %c8_i32_25 = arith.constant 8 : i32
    %41 = arith.muli %c3_i32, %c8_i32_25 : i32
    %42 = tpu.assume_multiple %41, 8 : i32
    %43 = arith.index_cast %42 : i32 to index
    %c0_26 = arith.constant 0 : index
    %44 = vector.load %arg13[%43, %c0_26] : memref<64x256xf32, #tpu.memory_space<vmem>>, vector<8x256xf32>
    %45 = arith.truncf %38 : vector<8x256xf32> to vector<8x256xbf16>
    %c0_27 = arith.constant 0 : index
    %c0_28 = arith.constant 0 : index
    %46 = vector.load %arg4[%c0_27, %c0_28] : memref<256x256xbf16, #tpu.memory_space<vmem>>, vector<256x256xbf16>
    %cst_29 = arith.constant dense<0.000000e+00> : vector<8x256xf32>
    %47 = tpu.matmul %45, %46, %cst_29 {dimension_numbers = #tpu.dot_dimension_numbers<[1], [0], [0], [1], [0, 0, 1, 1], [], []>} : vector<8x256xbf16>, vector<256x256xbf16>, vector<8x256xf32> -> vector<8x256xf32>
    %48 = arith.addf %44, %47 : vector<8x256xf32>
    %49 = math.tanh %48 : vector<8x256xf32>
    %50 = arith.index_cast %42 : i32 to index
    %c0_30 = arith.constant 0 : index
    %51 = vector.load %arg14[%50, %c0_30] : memref<64x256xf32, #tpu.memory_space<vmem>>, vector<8x256xf32>
    tpu.vector_store %arg14[%50, %c0_30], %49 {strides = array<i32>} : memref<64x256xf32, #tpu.memory_space<vmem>>, vector<8x256xf32>,
    %c4_i32 = arith.constant 4 : i32
    %c8_i32_31 = arith.constant 8 : i32
    %52 = arith.muli %c4_i32, %c8_i32_31 : i32
    %53 = tpu.assume_multiple %52, 8 : i32
    %54 = arith.index_cast %53 : i32 to index
    %c0_32 = arith.constant 0 : index
    %55 = vector.load %arg13[%54, %c0_32] : memref<64x256xf32, #tpu.memory_space<vmem>>, vector<8x256xf32>
    %56 = arith.truncf %49 : vector<8x256xf32> to vector<8x256xbf16>
    %c0_33 = arith.constant 0 : index
    %c0_34 = arith.constant 0 : index
    %57 = vector.load %arg4[%c0_33, %c0_34] : memref<256x256xbf16, #tpu.memory_space<vmem>>, vector<256x256xbf16>
    %cst_35 = arith.constant dense<0.000000e+00> : vector<8x256xf32>
    %58 = tpu.matmul %56, %57, %cst_35 {dimension_numbers = #tpu.dot_dimension_numbers<[1], [0], [0], [1], [0, 0, 1, 1], [], []>} : vector<8x256xbf16>, vector<256x256xbf16>, vector<8x256xf32> -> vector<8x256xf32>
    %59 = arith.addf %55, %58 : vector<8x256xf32>
    %60 = math.tanh %59 : vector<8x256xf32>
    %61 = arith.index_cast %53 : i32 to index
    %c0_36 = arith.constant 0 : index
    %62 = vector.load %arg14[%61, %c0_36] : memref<64x256xf32, #tpu.memory_space<vmem>>, vector<8x256xf32>
    tpu.vector_store %arg14[%61, %c0_36], %60 {strides = array<i32>} : memref<64x256xf32, #tpu.memory_space<vmem>>, vector<8x256xf32>,
    %c5_i32 = arith.constant 5 : i32
    %c8_i32_37 = arith.constant 8 : i32
    %63 = arith.muli %c5_i32, %c8_i32_37 : i32
    %64 = tpu.assume_multiple %63, 8 : i32
    %65 = arith.index_cast %64 : i32 to index
    %c0_38 = arith.constant 0 : index
    %66 = vector.load %arg13[%65, %c0_38] : memref<64x256xf32, #tpu.memory_space<vmem>>, vector<8x256xf32>
    %67 = arith.truncf %60 : vector<8x256xf32> to vector<8x256xbf16>
    %c0_39 = arith.constant 0 : index
    %c0_40 = arith.constant 0 : index
    %68 = vector.load %arg4[%c0_39, %c0_40] : memref<256x256xbf16, #tpu.memory_space<vmem>>, vector<256x256xbf16>
    %cst_41 = arith.constant dense<0.000000e+00> : vector<8x256xf32>
    %69 = tpu.matmul %67, %68, %cst_41 {dimension_numbers = #tpu.dot_dimension_numbers<[1], [0], [0], [1], [0, 0, 1, 1], [], []>} : vector<8x256xbf16>, vector<256x256xbf16>, vector<8x256xf32> -> vector<8x256xf32>
    %70 = arith.addf %66, %69 : vector<8x256xf32>
    %71 = math.tanh %70 : vector<8x256xf32>
    %72 = arith.index_cast %64 : i32 to index
    %c0_42 = arith.constant 0 : index
    %73 = vector.load %arg14[%72, %c0_42] : memref<64x256xf32, #tpu.memory_space<vmem>>, vector<8x256xf32>
    tpu.vector_store %arg14[%72, %c0_42], %71 {strides = array<i32>} : memref<64x256xf32, #tpu.memory_space<vmem>>, vector<8x256xf32>,
    %c6_i32 = arith.constant 6 : i32
    %c8_i32_43 = arith.constant 8 : i32
    %74 = arith.muli %c6_i32, %c8_i32_43 : i32
    %75 = tpu.assume_multiple %74, 8 : i32
    %76 = arith.index_cast %75 : i32 to index
    %c0_44 = arith.constant 0 : index
    %77 = vector.load %arg13[%76, %c0_44] : memref<64x256xf32, #tpu.memory_space<vmem>>, vector<8x256xf32>
    %78 = arith.truncf %71 : vector<8x256xf32> to vector<8x256xbf16>
    %c0_45 = arith.constant 0 : index
    %c0_46 = arith.constant 0 : index
    %79 = vector.load %arg4[%c0_45, %c0_46] : memref<256x256xbf16, #tpu.memory_space<vmem>>, vector<256x256xbf16>
    %cst_47 = arith.constant dense<0.000000e+00> : vector<8x256xf32>
    %80 = tpu.matmul %78, %79, %cst_47 {dimension_numbers = #tpu.dot_dimension_numbers<[1], [0], [0], [1], [0, 0, 1, 1], [], []>} : vector<8x256xbf16>, vector<256x256xbf16>, vector<8x256xf32> -> vector<8x256xf32>
    %81 = arith.addf %77, %80 : vector<8x256xf32>
    %82 = math.tanh %81 : vector<8x256xf32>
    %83 = arith.index_cast %75 : i32 to index
    %c0_48 = arith.constant 0 : index
    %84 = vector.load %arg14[%83, %c0_48] : memref<64x256xf32, #tpu.memory_space<vmem>>, vector<8x256xf32>
    tpu.vector_store %arg14[%83, %c0_48], %82 {strides = array<i32>} : memref<64x256xf32, #tpu.memory_space<vmem>>, vector<8x256xf32>,
    %c7_i32 = arith.constant 7 : i32
    %c8_i32_49 = arith.constant 8 : i32
    %85 = arith.muli %c7_i32, %c8_i32_49 : i32
    %86 = tpu.assume_multiple %85, 8 : i32
    %87 = arith.index_cast %86 : i32 to index
    %c0_50 = arith.constant 0 : index
    %88 = vector.load %arg13[%87, %c0_50] : memref<64x256xf32, #tpu.memory_space<vmem>>, vector<8x256xf32>
    %89 = arith.truncf %82 : vector<8x256xf32> to vector<8x256xbf16>
    %c0_51 = arith.constant 0 : index
    %c0_52 = arith.constant 0 : index
    %90 = vector.load %arg4[%c0_51, %c0_52] : memref<256x256xbf16, #tpu.memory_space<vmem>>, vector<256x256xbf16>
    %cst_53 = arith.constant dense<0.000000e+00> : vector<8x256xf32>
    %91 = tpu.matmul %89, %90, %cst_53 {dimension_numbers = #tpu.dot_dimension_numbers<[1], [0], [0], [1], [0, 0, 1, 1], [], []>} : vector<8x256xbf16>, vector<256x256xbf16>, vector<8x256xf32> -> vector<8x256xf32>
    %92 = arith.addf %88, %91 : vector<8x256xf32>
    %93 = math.tanh %92 : vector<8x256xf32>
    %94 = arith.index_cast %86 : i32 to index
    %c0_54 = arith.constant 0 : index
    %95 = vector.load %arg14[%94, %c0_54] : memref<64x256xf32, #tpu.memory_space<vmem>>, vector<8x256xf32>
    tpu.vector_store %arg14[%94, %c0_54], %93 {strides = array<i32>} : memref<64x256xf32, #tpu.memory_space<vmem>>, vector<8x256xf32>,
    %c8_i32_55 = arith.constant 8 : i32
    %c0_56 = arith.constant 0 : index
    %c0_57 = arith.constant 0 : index
    %96 = vector.load %arg14[%c0_56, %c0_57] : memref<64x256xf32, #tpu.memory_space<vmem>>, vector<64x256xf32>
    %97 = arith.truncf %96 : vector<64x256xf32> to vector<64x256xbf16>
    %c0_58 = arith.constant 0 : index
    %c0_59 = arith.constant 0 : index
    %98 = vector.load %arg5[%c0_58, %c0_59] : memref<256x256xbf16, #tpu.memory_space<vmem>>, vector<256x256xbf16>
    %cst_60 = arith.constant dense<0.000000e+00> : vector<64x256xf32>
    %99 = tpu.matmul %97, %98, %cst_60 {dimension_numbers = #tpu.dot_dimension_numbers<[1], [0], [0], [1], [0, 0, 1, 1], [], []>} : vector<64x256xbf16>, vector<256x256xbf16>, vector<64x256xf32> -> vector<64x256xf32>
    %c0_61 = arith.constant 0 : index
    %c0_62 = arith.constant 0 : index
    %100 = vector.load %arg6[%c0_61, %c0_62] : memref<1x256xf32, #tpu.memory_space<vmem>>, vector<1x256xf32>
    %101 = vector.broadcast %100 : vector<1x256xf32> to vector<64x256xf32>
    %102 = arith.addf %99, %101 : vector<64x256xf32>
    %c0_63 = arith.constant 0 : index
    %c0_64 = arith.constant 0 : index
    %103 = vector.load %arg15[%c0_63, %c0_64] : memref<64x256xf32, #tpu.memory_space<vmem>>, vector<64x256xf32>
    tpu.vector_store %arg15[%c0_63, %c0_64], %102 {strides = array<i32>} : memref<64x256xf32, #tpu.memory_space<vmem>>, vector<64x256xf32>,
    %c0_65 = arith.constant 0 : index
    %c0_66 = arith.constant 0 : index
    %104 = vector.load %arg0[%c0_65, %c0_66] : memref<8x1xi32, #tpu.memory_space<vmem>>, vector<8x1xi32>
    %c1_i32_67 = arith.constant 1 : i32
    %105 = vector.broadcast %c1_i32_67 : i32 to vector<8x1xi32>
    %106 = arith.subi %104, %105 : vector<8x1xi32>
    %c0_i32_68 = arith.constant 0 : i32
    %c8_i32_69 = arith.constant 8 : i32
    %107 = arith.muli %c0_i32_68, %c8_i32_69 : i32
    %108 = tpu.assume_multiple %107, 8 : i32
    %109 = arith.index_cast %108 : i32 to index
    %c0_70 = arith.constant 0 : index
    %110 = vector.load %arg15[%109, %c0_70] : memref<64x256xf32, #tpu.memory_space<vmem>>, vector<8x256xf32>
    %111 = arith.truncf %7 : vector<8x256xf32> to vector<8x256xbf16>
    %c0_71 = arith.constant 0 : index
    %c0_72 = arith.constant 0 : index
    %112 = vector.load %arg7[%c0_71, %c0_72] : memref<256x256xbf16, #tpu.memory_space<vmem>>, vector<256x256xbf16>
    %cst_73 = arith.constant dense<0.000000e+00> : vector<8x256xf32>
    %113 = tpu.matmul %111, %112, %cst_73 {dimension_numbers = #tpu.dot_dimension_numbers<[1], [0], [0], [1], [0, 0, 1, 1], [], []>} : vector<8x256xbf16>, vector<256x256xbf16>, vector<8x256xf32> -> vector<8x256xf32>
    %114 = arith.addf %110, %113 : vector<8x256xf32>
    %115 = math.tanh %114 : vector<8x256xf32>
    %116 = vector.broadcast %c0_i32_68 : i32 to vector<8x1xi32>
    %117 = arith.cmpi eq, %106, %116 : vector<8x1xi32>
    %118 = vector.shape_cast %117 : vector<8x1xi1> to vector<8x1xi1>
    %119 = vector.broadcast %118 : vector<8x1xi1> to vector<8x256xi1>
    %120 = arith.select %119, %115, %7 : vector<8x256xi1>, vector<8x256xf32>
    %c1_i32_74 = arith.constant 1 : i32
    %c8_i32_75 = arith.constant 8 : i32
    %121 = arith.muli %c1_i32_74, %c8_i32_75 : i32
    %122 = tpu.assume_multiple %121, 8 : i32
    %123 = arith.index_cast %122 : i32 to index
    %c0_76 = arith.constant 0 : index
    %124 = vector.load %arg15[%123, %c0_76] : memref<64x256xf32, #tpu.memory_space<vmem>>, vector<8x256xf32>
    %125 = arith.truncf %115 : vector<8x256xf32> to vector<8x256xbf16>
    %c0_77 = arith.constant 0 : index
    %c0_78 = arith.constant 0 : index
    %126 = vector.load %arg7[%c0_77, %c0_78] : memref<256x256xbf16, #tpu.memory_space<vmem>>, vector<256x256xbf16>
    %cst_79 = arith.constant dense<0.000000e+00> : vector<8x256xf32>
    %127 = tpu.matmul %125, %126, %cst_79 {dimension_numbers = #tpu.dot_dimension_numbers<[1], [0], [0], [1], [0, 0, 1, 1], [], []>} : vector<8x256xbf16>, vector<256x256xbf16>, vector<8x256xf32> -> vector<8x256xf32>
    %128 = arith.addf %124, %127 : vector<8x256xf32>
    %129 = math.tanh %128 : vector<8x256xf32>
    %130 = vector.broadcast %c1_i32_74 : i32 to vector<8x1xi32>
    %131 = arith.cmpi eq, %106, %130 : vector<8x1xi32>
    %132 = vector.shape_cast %131 : vector<8x1xi1> to vector<8x1xi1>
    %133 = vector.broadcast %132 : vector<8x1xi1> to vector<8x256xi1>
    %134 = arith.select %133, %129, %120 : vector<8x256xi1>, vector<8x256xf32>
    %c2_i32_80 = arith.constant 2 : i32
    %c8_i32_81 = arith.constant 8 : i32
    %135 = arith.muli %c2_i32_80, %c8_i32_81 : i32
    %136 = tpu.assume_multiple %135, 8 : i32
    %137 = arith.index_cast %136 : i32 to index
    %c0_82 = arith.constant 0 : index
    %138 = vector.load %arg15[%137, %c0_82] : memref<64x256xf32, #tpu.memory_space<vmem>>, vector<8x256xf32>
    %139 = arith.truncf %129 : vector<8x256xf32> to vector<8x256xbf16>
    %c0_83 = arith.constant 0 : index
    %c0_84 = arith.constant 0 : index
    %140 = vector.load %arg7[%c0_83, %c0_84] : memref<256x256xbf16, #tpu.memory_space<vmem>>, vector<256x256xbf16>
    %cst_85 = arith.constant dense<0.000000e+00> : vector<8x256xf32>
    %141 = tpu.matmul %139, %140, %cst_85 {dimension_numbers = #tpu.dot_dimension_numbers<[1], [0], [0], [1], [0, 0, 1, 1], [], []>} : vector<8x256xbf16>, vector<256x256xbf16>, vector<8x256xf32> -> vector<8x256xf32>
    %142 = arith.addf %138, %141 : vector<8x256xf32>
    %143 = math.tanh %142 : vector<8x256xf32>
    %144 = vector.broadcast %c2_i32_80 : i32 to vector<8x1xi32>
    %145 = arith.cmpi eq, %106, %144 : vector<8x1xi32>
    %146 = vector.shape_cast %145 : vector<8x1xi1> to vector<8x1xi1>
    %147 = vector.broadcast %146 : vector<8x1xi1> to vector<8x256xi1>
    %148 = arith.select %147, %143, %134 : vector<8x256xi1>, vector<8x256xf32>
    %c3_i32_86 = arith.constant 3 : i32
    %c8_i32_87 = arith.constant 8 : i32
    %149 = arith.muli %c3_i32_86, %c8_i32_87 : i32
    %150 = tpu.assume_multiple %149, 8 : i32
    %151 = arith.index_cast %150 : i32 to index
    %c0_88 = arith.constant 0 : index
    %152 = vector.load %arg15[%151, %c0_88] : memref<64x256xf32, #tpu.memory_space<vmem>>, vector<8x256xf32>
    %153 = arith.truncf %143 : vector<8x256xf32> to vector<8x256xbf16>
    %c0_89 = arith.constant 0 : index
    %c0_90 = arith.constant 0 : index
    %154 = vector.load %arg7[%c0_89, %c0_90] : memref<256x256xbf16, #tpu.memory_space<vmem>>, vector<256x256xbf16>
    %cst_91 = arith.constant dense<0.000000e+00> : vector<8x256xf32>
    %155 = tpu.matmul %153, %154, %cst_91 {dimension_numbers = #tpu.dot_dimension_numbers<[1], [0], [0], [1], [0, 0, 1, 1], [], []>} : vector<8x256xbf16>, vector<256x256xbf16>, vector<8x256xf32> -> vector<8x256xf32>
    %156 = arith.addf %152, %155 : vector<8x256xf32>
    %157 = math.tanh %156 : vector<8x256xf32>
    %158 = vector.broadcast %c3_i32_86 : i32 to vector<8x1xi32>
    %159 = arith.cmpi eq, %106, %158 : vector<8x1xi32>
    %160 = vector.shape_cast %159 : vector<8x1xi1> to vector<8x1xi1>
    %161 = vector.broadcast %160 : vector<8x1xi1> to vector<8x256xi1>
    %162 = arith.select %161, %157, %148 : vector<8x256xi1>, vector<8x256xf32>
    %c4_i32_92 = arith.constant 4 : i32
    %c8_i32_93 = arith.constant 8 : i32
    %163 = arith.muli %c4_i32_92, %c8_i32_93 : i32
    %164 = tpu.assume_multiple %163, 8 : i32
    %165 = arith.index_cast %164 : i32 to index
    %c0_94 = arith.constant 0 : index
    %166 = vector.load %arg15[%165, %c0_94] : memref<64x256xf32, #tpu.memory_space<vmem>>, vector<8x256xf32>
    %167 = arith.truncf %157 : vector<8x256xf32> to vector<8x256xbf16>
    %c0_95 = arith.constant 0 : index
    %c0_96 = arith.constant 0 : index
    %168 = vector.load %arg7[%c0_95, %c0_96] : memref<256x256xbf16, #tpu.memory_space<vmem>>, vector<256x256xbf16>
    %cst_97 = arith.constant dense<0.000000e+00> : vector<8x256xf32>
    %169 = tpu.matmul %167, %168, %cst_97 {dimension_numbers = #tpu.dot_dimension_numbers<[1], [0], [0], [1], [0, 0, 1, 1], [], []>} : vector<8x256xbf16>, vector<256x256xbf16>, vector<8x256xf32> -> vector<8x256xf32>
    %170 = arith.addf %166, %169 : vector<8x256xf32>
    %171 = math.tanh %170 : vector<8x256xf32>
    %172 = vector.broadcast %c4_i32_92 : i32 to vector<8x1xi32>
    %173 = arith.cmpi eq, %106, %172 : vector<8x1xi32>
    %174 = vector.shape_cast %173 : vector<8x1xi1> to vector<8x1xi1>
    %175 = vector.broadcast %174 : vector<8x1xi1> to vector<8x256xi1>
    %176 = arith.select %175, %171, %162 : vector<8x256xi1>, vector<8x256xf32>
    %c5_i32_98 = arith.constant 5 : i32
    %c8_i32_99 = arith.constant 8 : i32
    %177 = arith.muli %c5_i32_98, %c8_i32_99 : i32
    %178 = tpu.assume_multiple %177, 8 : i32
    %179 = arith.index_cast %178 : i32 to index
    %c0_100 = arith.constant 0 : index
    %180 = vector.load %arg15[%179, %c0_100] : memref<64x256xf32, #tpu.memory_space<vmem>>, vector<8x256xf32>
    %181 = arith.truncf %171 : vector<8x256xf32> to vector<8x256xbf16>
    %c0_101 = arith.constant 0 : index
    %c0_102 = arith.constant 0 : index
    %182 = vector.load %arg7[%c0_101, %c0_102] : memref<256x256xbf16, #tpu.memory_space<vmem>>, vector<256x256xbf16>
    %cst_103 = arith.constant dense<0.000000e+00> : vector<8x256xf32>
    %183 = tpu.matmul %181, %182, %cst_103 {dimension_numbers = #tpu.dot_dimension_numbers<[1], [0], [0], [1], [0, 0, 1, 1], [], []>} : vector<8x256xbf16>, vector<256x256xbf16>, vector<8x256xf32> -> vector<8x256xf32>
    %184 = arith.addf %180, %183 : vector<8x256xf32>
    %185 = math.tanh %184 : vector<8x256xf32>
    %186 = vector.broadcast %c5_i32_98 : i32 to vector<8x1xi32>
    %187 = arith.cmpi eq, %106, %186 : vector<8x1xi32>
    %188 = vector.shape_cast %187 : vector<8x1xi1> to vector<8x1xi1>
    %189 = vector.broadcast %188 : vector<8x1xi1> to vector<8x256xi1>
    %190 = arith.select %189, %185, %176 : vector<8x256xi1>, vector<8x256xf32>
    %c6_i32_104 = arith.constant 6 : i32
    %c8_i32_105 = arith.constant 8 : i32
    %191 = arith.muli %c6_i32_104, %c8_i32_105 : i32
    %192 = tpu.assume_multiple %191, 8 : i32
    %193 = arith.index_cast %192 : i32 to index
    %c0_106 = arith.constant 0 : index
    %194 = vector.load %arg15[%193, %c0_106] : memref<64x256xf32, #tpu.memory_space<vmem>>, vector<8x256xf32>
    %195 = arith.truncf %185 : vector<8x256xf32> to vector<8x256xbf16>
    %c0_107 = arith.constant 0 : index
    %c0_108 = arith.constant 0 : index
    %196 = vector.load %arg7[%c0_107, %c0_108] : memref<256x256xbf16, #tpu.memory_space<vmem>>, vector<256x256xbf16>
    %cst_109 = arith.constant dense<0.000000e+00> : vector<8x256xf32>
    %197 = tpu.matmul %195, %196, %cst_109 {dimension_numbers = #tpu.dot_dimension_numbers<[1], [0], [0], [1], [0, 0, 1, 1], [], []>} : vector<8x256xbf16>, vector<256x256xbf16>, vector<8x256xf32> -> vector<8x256xf32>
    %198 = arith.addf %194, %197 : vector<8x256xf32>
    %199 = math.tanh %198 : vector<8x256xf32>
    %200 = vector.broadcast %c6_i32_104 : i32 to vector<8x1xi32>
    %201 = arith.cmpi eq, %106, %200 : vector<8x1xi32>
    %202 = vector.shape_cast %201 : vector<8x1xi1> to vector<8x1xi1>
    %203 = vector.broadcast %202 : vector<8x1xi1> to vector<8x256xi1>
    %204 = arith.select %203, %199, %190 : vector<8x256xi1>, vector<8x256xf32>
    %c7_i32_110 = arith.constant 7 : i32
    %c8_i32_111 = arith.constant 8 : i32
    %205 = arith.muli %c7_i32_110, %c8_i32_111 : i32
    %206 = tpu.assume_multiple %205, 8 : i32
    %207 = arith.index_cast %206 : i32 to index
    %c0_112 = arith.constant 0 : index
    %208 = vector.load %arg15[%207, %c0_112] : memref<64x256xf32, #tpu.memory_space<vmem>>, vector<8x256xf32>
    %209 = arith.truncf %199 : vector<8x256xf32> to vector<8x256xbf16>
    %c0_113 = arith.constant 0 : index
    %c0_114 = arith.constant 0 : index
    %210 = vector.load %arg7[%c0_113, %c0_114] : memref<256x256xbf16, #tpu.memory_space<vmem>>, vector<256x256xbf16>
    %cst_115 = arith.constant dense<0.000000e+00> : vector<8x256xf32>
    %211 = tpu.matmul %209, %210, %cst_115 {dimension_numbers = #tpu.dot_dimension_numbers<[1], [0], [0], [1], [0, 0, 1, 1], [], []>} : vector<8x256xbf16>, vector<256x256xbf16>, vector<8x256xf32> -> vector<8x256xf32>
    %212 = arith.addf %208, %211 : vector<8x256xf32>
    %213 = math.tanh %212 : vector<8x256xf32>
    %214 = vector.broadcast %c7_i32_110 : i32 to vector<8x1xi32>
    %215 = arith.cmpi eq, %106, %214 : vector<8x1xi32>
    %216 = vector.shape_cast %215 : vector<8x1xi1> to vector<8x1xi1>
    %217 = vector.broadcast %216 : vector<8x1xi1> to vector<8x256xi1>
    %218 = arith.select %217, %213, %204 : vector<8x256xi1>, vector<8x256xf32>
    %c8_i32_116 = arith.constant 8 : i32
    %219 = arith.truncf %218 : vector<8x256xf32> to vector<8x256xbf16>
    %c0_117 = arith.constant 0 : index
    %c0_118 = arith.constant 0 : index
    %220 = vector.load %arg8[%c0_117, %c0_118] : memref<256x256xbf16, #tpu.memory_space<vmem>>, vector<256x256xbf16>
    %cst_119 = arith.constant dense<0.000000e+00> : vector<8x256xf32>
    %221 = tpu.matmul %219, %220, %cst_119 {dimension_numbers = #tpu.dot_dimension_numbers<[1], [0], [0], [1], [0, 0, 1, 1], [], []>} : vector<8x256xbf16>, vector<256x256xbf16>, vector<8x256xf32> -> vector<8x256xf32>
    %c0_120 = arith.constant 0 : index
    %c0_121 = arith.constant 0 : index
    %222 = vector.load %arg9[%c0_120, %c0_121] : memref<1x256xf32, #tpu.memory_space<vmem>>, vector<1x256xf32>
    %223 = vector.broadcast %222 : vector<1x256xf32> to vector<8x256xf32>
    %224 = arith.addf %221, %223 : vector<8x256xf32>
    %cst_122 = arith.constant 0.000000e+00 : f32
    %225 = vector.broadcast %cst_122 : f32 to vector<8x256xf32>
    %226 = arith.maximumf %224, %225 : vector<8x256xf32>
    %227 = arith.truncf %226 : vector<8x256xf32> to vector<8x256xbf16>
    %c0_123 = arith.constant 0 : index
    %c0_124 = arith.constant 0 : index
    %228 = vector.load %arg10[%c0_123, %c0_124] : memref<256x128xbf16, #tpu.memory_space<vmem>>, vector<256x128xbf16>
    %cst_125 = arith.constant dense<0.000000e+00> : vector<8x128xf32>
    %229 = tpu.matmul %227, %228, %cst_125 {dimension_numbers = #tpu.dot_dimension_numbers<[1], [0], [0], [1], [0, 0, 1, 1], [], []>} : vector<8x256xbf16>, vector<256x128xbf16>, vector<8x128xf32> -> vector<8x128xf32>
    %c0_126 = arith.constant 0 : index
    %c0_127 = arith.constant 0 : index
    %230 = vector.load %arg11[%c0_126, %c0_127] : memref<1x128xf32, #tpu.memory_space<vmem>>, vector<1x128xf32>
    %231 = vector.broadcast %230 : vector<1x128xf32> to vector<8x128xf32>
    %232 = arith.addf %229, %231 : vector<8x128xf32>
    %c0_128 = arith.constant 0 : index
    %c0_129 = arith.constant 0 : index
    %233 = vector.load %arg12[%c0_128, %c0_129] : memref<8x128xf32, #tpu.memory_space<vmem>>, vector<8x128xf32>
    tpu.vector_store %arg12[%c0_128, %c0_129], %232 {strides = array<i32>} : memref<8x128xf32, #tpu.memory_space<vmem>>, vector<8x128xf32>,
    return
  }
}

</mosaic_0001>

<llo_original>
// kernel: tpu_custom_call.1
$region0: #{tpu_custom_call.1}
  #allocation0 [shape = 'u32[]', space=smem, size = 0x4, offset = 0x4, fixed_abs, tag = 'smem constant byte address 0x4 - core index']
  #allocation1 [shape = 'u32[72,128]{1,0:T(1,128)}', space=vmem, size = 0x9000, scoped, tag = 'internal scratch']
  #allocation2 [shape = 'f32[64,256]{1,0:T(8,128)}', space=vmem, size = 0x10000, scoped, tag = 'scratch operand']
  #allocation3 [shape = 'f32[64,256]{1,0:T(8,128)}', space=vmem, size = 0x10000, scoped, tag = 'scratch operand']
  #allocation4 [shape = 'f32[64,256]{1,0:T(8,128)}', space=vmem, size = 0x10000, scoped, tag = 'scratch operand']
  %s0 = inlined_call_operand.vmem [shape: s32[8,1], index: 0, kind: input, shape index: {}]
  %s1 = inlined_call_operand.hbm [shape: bf16[64,300], index: 1, kind: input, shape index: {}]
  %s2 = inlined_call_operand.hbm [shape: bf16[300,256], index: 2, kind: input, shape index: {}]
  %s3 = inlined_call_operand.vmem [shape: f32[1,256], index: 3, kind: input, shape index: {}]
  %s4 = inlined_call_operand.hbm [shape: bf16[256,256], index: 4, kind: input, shape index: {}]
  %s5 = inlined_call_operand.hbm [shape: bf16[256,256], index: 5, kind: input, shape index: {}]
  %s6 = inlined_call_operand.vmem [shape: f32[1,256], index: 6, kind: input, shape index: {}]
  %s7 = inlined_call_operand.hbm [shape: bf16[256,256], index: 7, kind: input, shape index: {}]
  %s8 = inlined_call_operand.hbm [shape: bf16[256,256], index: 8, kind: input, shape index: {}]
  %s9 = inlined_call_operand.vmem [shape: f32[1,256], index: 9, kind: input, shape index: {}]
  %s10 = inlined_call_operand.hbm [shape: bf16[256,128], index: 10, kind: input, shape index: {}]
  %s11 = inlined_call_operand.vmem [shape: f32[1,128], index: 11, kind: input, shape index: {}]
  %s12 = inlined_call_operand.hbm [shape: f32[8,128], index: 12, kind: output, shape index: {}]
  %s13 = sld [smem:[#allocation0]]
  $region86: #{tpu_custom_call.1} parent=0
    _
  %s15 = ssub.s32 1, %s13
  %s16 = scalar_select 0, %s15, %s13
  $region1: #{tpu_custom_call.1} parent=0
    #allocation5 [shape = 'u8[49152]{0}', space=vmem, size = 0xc000, scoped, tag = 'input window, operand 1, single buffered']
    #allocation6 [shape = 's32[1]{0}', space=sflag, size = 0x4, scoped, tag = 'scoped memory for tpu_custom_call.1']
    #allocation7 [shape = 's32[1]{0}', space=sflag, size = 0x4, scoped, tag = 'scoped memory for tpu_custom_call.1']
    #allocation8 [shape = 'u8[155648]{0}', space=vmem, size = 0x26000, scoped, tag = 'input window, operand 2, single buffered']
    #allocation9 [shape = 's32[1]{0}', space=sflag, size = 0x4, scoped, tag = 'scoped memory for tpu_custom_call.1']
    #allocation10 [shape = 'u8[131072]{0}', space=vmem, size = 0x20000, scoped, tag = 'input window, operand 4, single buffered']
    #allocation11 [shape = 'u8[131072]{0}', space=vmem, size = 0x20000, scoped, tag = 'input window, operand 5, single buffered']
    #allocation12 [shape = 's32[1]{0}', space=sflag, size = 0x4, scoped, tag = 'scoped memory for tpu_custom_call.1']
    #allocation13 [shape = 'u8[131072]{0}', space=vmem, size = 0x20000, scoped, tag = 'input window, operand 7, single buffered']
    #allocation14 [shape = 'u8[131072]{0}', space=vmem, size = 0x20000, scoped, tag = 'input window, operand 8, single buffered']
    #allocation15 [shape = 's32[1]{0}', space=sflag, size = 0x4, scoped, tag = 'scoped memory for tpu_custom_call.1']
    #allocation16 [shape = 'u8[65536]{0}', space=vmem, size = 0x10000, scoped, tag = 'input window, operand 10, single buffered']
    #allocation17 [shape = 'u8[4096]{0}', space=vmem, size = 0x1000, scoped, tag = 'output window, operand 0, single buffered']
    %17 = vsyncpa [#allocation6], 0
    %18 = vsyncpa [#allocation9], 0
    %19 = vsyncpa [#allocation12], 0
    %20 = vsyncpa [#allocation15], 0
    %21 = vsyncpa [#allocation7], 0
    // Predicated region
    $region2: #{tpu_custom_call.1} parent=1 // pred_check
      _
    $region3: #{tpu_custom_call.1} parent=1 // pred_check_branch
      %23 = sbr.rel (0) target = $region5
    $region4: #{tpu_custom_call.1} parent=1 // pred_region
      _
    $region5: #{tpu_custom_call.1} parent=1 // pred_fallthru
      _
    // Predicated region
    $region6: #{tpu_custom_call.1} parent=1 // pred_check
      _
    $region7: #{tpu_custom_call.1} parent=1 // pred_check_branch
      %25 = sbr.rel (0) target = $region9
    $region8: #{tpu_custom_call.1} parent=1 // pred_region
      %27 = vsyncadd [#allocation6], 0
      %s28 = sshll.u32 %s1, 4
      %s29 = int_to_ptr.hbm [resolvable:$true] %s28
      %s30 = sshll.u32 [#allocation5], 4
      %s31 = int_to_ptr.vmem [resolvable:$true] %s30
      %36 = dma.hbm_to_vmem [thread:$0]  %s29, 1536, %s31, [#allocation6], 192, 192, 12
    $region9: #{tpu_custom_call.1} parent=1 // pred_fallthru
      _
    // Predicated region
    $region10: #{tpu_custom_call.1} parent=1 // pred_check
      _
    $region11: #{tpu_custom_call.1} parent=1 // pred_check_branch
      %38 = sbr.rel (0) target = $region13
    $region12: #{tpu_custom_call.1} parent=1 // pred_region
      %40 = vsyncadd [#allocation9], 0
      %s41 = sshll.u32 %s2, 4
      %s42 = int_to_ptr.hbm [resolvable:$true] %s41
      %s43 = sshll.u32 [#allocation8], 4
      %s44 = int_to_ptr.vmem [resolvable:$true] %s43
      %49 = dma.hbm_to_vmem [thread:$0]  %s42, 4864, %s44, [#allocation9], 128, 128, 8
    $region13: #{tpu_custom_call.1} parent=1 // pred_fallthru
      _
    // Predicated region
    $region14: #{tpu_custom_call.1} parent=1 // pred_check
      _
    $region15: #{tpu_custom_call.1} parent=1 // pred_check_branch
      %51 = sbr.rel (0) target = $region17
    $region16: #{tpu_custom_call.1} parent=1 // pred_region
      _
    $region17: #{tpu_custom_call.1} parent=1 // pred_fallthru
      _
    // Predicated region
    $region18: #{tpu_custom_call.1} parent=1 // pred_check
      _
    $region19: #{tpu_custom_call.1} parent=1 // pred_check_branch
      %53 = sbr.rel (0) target = $region21
    $region20: #{tpu_custom_call.1} parent=1 // pred_region
      %55 = vsyncadd [#allocation9], 0
      %s56 = sshll.u32 %s4, 4
      %s57 = int_to_ptr.hbm [resolvable:$true] %s56
      %s58 = sshll.u32 [#allocation10], 4
      %s59 = int_to_ptr.vmem [resolvable:$true] %s58
      %64 = dma.hbm_to_vmem [thread:$0]  %s57, 4096, %s59, [#allocation9], 128, 128, 8
    $region21: #{tpu_custom_call.1} parent=1 // pred_fallthru
      _
    // Predicated region
    $region22: #{tpu_custom_call.1} parent=1 // pred_check
      _
    $region23: #{tpu_custom_call.1} parent=1 // pred_check_branch
      %66 = sbr.rel (0) target = $region25
    $region24: #{tpu_custom_call.1} parent=1 // pred_region
      %68 = vsyncadd [#allocation12], 0
      %s69 = sshll.u32 %s5, 4
      %s70 = int_to_ptr.hbm [resolvable:$true] %s69
      %s71 = sshll.u32 [#allocation11], 4
      %s72 = int_to_ptr.vmem [resolvable:$true] %s71
      %77 = dma.hbm_to_vmem [thread:$0]  %s70, 4096, %s72, [#allocation12], 128, 128, 8
    $region25: #{tpu_custom_call.1} parent=1 // pred_fallthru
      _
    // Predicated region
    $region26: #{tpu_custom_call.1} parent=1 // pred_check
      _
    $region27: #{tpu_custom_call.1} parent=1 // pred_check_branch
      %79 = sbr.rel (0) target = $region29
    $region28: #{tpu_custom_call.1} parent=1 // pred_region
      _
    $region29: #{tpu_custom_call.1} parent=1 // pred_fallthru
      _
    // Predicated region
    $region30: #{tpu_custom_call.1} parent=1 // pred_check
      _
    $region31: #{tpu_custom_call.1} parent=1 // pred_check_branch
      %81 = sbr.rel (0) target = $region33
    $region32: #{tpu_custom_call.1} parent=1 // pred_region
      %83 = vsyncadd [#allocation12], 0
      %s84 = sshll.u32 %s7, 4
      %s85 = int_to_ptr.hbm [resolvable:$true] %s84
      %s86 = sshll.u32 [#allocation13], 4
      %s87 = int_to_ptr.vmem [resolvable:$true] %s86
      %92 = dma.hbm_to_vmem [thread:$0]  %s85, 4096, %s87, [#allocation12], 128, 128, 8
    $region33: #{tpu_custom_call.1} parent=1 // pred_fallthru
      _
    // Predicated region
    $region34: #{tpu_custom_call.1} parent=1 // pred_check
      _
    $region35: #{tpu_custom_call.1} parent=1 // pred_check_branch
      %94 = sbr.rel (0) target = $region37
    $region36: #{tpu_custom_call.1} parent=1 // pred_region
      %96 = vsyncadd [#allocation15], 0
      %s97 = sshll.u32 %s8, 4
      %s98 = int_to_ptr.hbm [resolvable:$true] %s97
      %s99 = sshll.u32 [#allocation14], 4
      %s100 = int_to_ptr.vmem [resolvable:$true] %s99
      %105 = dma.hbm_to_vmem [thread:$0]  %s98, 4096, %s100, [#allocation15], 128, 128, 8
    $region37: #{tpu_custom_call.1} parent=1 // pred_fallthru
      _
    // Predicated region
    $region38: #{tpu_custom_call.1} parent=1 // pred_check
      _
    $region39: #{tpu_custom_call.1} parent=1 // pred_check_branch
      %107 = sbr.rel (0) target = $region41
    $region40: #{tpu_custom_call.1} parent=1 // pred_region
      _
    $region41: #{tpu_custom_call.1} parent=1 // pred_fallthru
      _
    // Predicated region
    $region42: #{tpu_custom_call.1} parent=1 // pred_check
      _
    $region43: #{tpu_custom_call.1} parent=1 // pred_check_branch
      %109 = sbr.rel (0) target = $region45
    $region44: #{tpu_custom_call.1} parent=1 // pred_region
      %111 = vsyncadd [#allocation15], 0
      %s112 = sshll.u32 %s10, 4
      %s113 = int_to_ptr.hbm [resolvable:$true] %s112
      %s114 = sshll.u32 [#allocation16], 4
      %s115 = int_to_ptr.vmem [resolvable:$true] %s114
      %120 = dma.hbm_to_vmem [thread:$0]  %s113, 2048, %s115, [#allocation15], 64, 64, 4
    $region45: #{tpu_custom_call.1} parent=1 // pred_fallthru
      _
    // Predicated region
    $region46: #{tpu_custom_call.1} parent=1 // pred_check
      _
    $region47: #{tpu_custom_call.1} parent=1 // pred_check_branch
      %122 = sbr.rel (0) target = $region49
    $region48: #{tpu_custom_call.1} parent=1 // pred_region
      _
    $region49: #{tpu_custom_call.1} parent=1 // pred_fallthru
      _
    // Predicated region
    $region50: #{tpu_custom_call.1} parent=1 // pred_check
      _
    $region51: #{tpu_custom_call.1} parent=1 // pred_check_branch
      %124 = sbr.rel (0) target = $region53
    $region52: #{tpu_custom_call.1} parent=1 // pred_region
      %126 = dma.done [#allocation6], 1536
    $region53: #{tpu_custom_call.1} parent=1 // pred_fallthru
      _
    // Predicated region
    $region54: #{tpu_custom_call.1} parent=1 // pred_check
      _
    $region55: #{tpu_custom_call.1} parent=1 // pred_check_branch
      %128 = sbr.rel (0) target = $region57
    $region56: #{tpu_custom_call.1} parent=1 // pred_region
      %130 = dma.done [#allocation9], 4864
    $region57: #{tpu_custom_call.1} parent=1 // pred_fallthru
      _
    // Predicated region
    $region58: #{tpu_custom_call.1} parent=1 // pred_check
      _
    $region59: #{tpu_custom_call.1} parent=1 // pred_check_branch
      %132 = sbr.rel (0) target = $region61
    $region60: #{tpu_custom_call.1} parent=1 // pred_region
      %134 = dma.done [#allocation9], 4096
    $region61: #{tpu_custom_call.1} parent=1 // pred_fallthru
      _
    // Predicated region
    $region62: #{tpu_custom_call.1} parent=1 // pred_check
      _
    $region63: #{tpu_custom_call.1} parent=1 // pred_check_branch
      %136 = sbr.rel (0) target = $region65
    $region64: #{tpu_custom_call.1} parent=1 // pred_region
      %138 = dma.done [#allocation12], 4096
    $region65: #{tpu_custom_call.1} parent=1 // pred_fallthru
      _
    // Predicated region
    $region66: #{tpu_custom_call.1} parent=1 // pred_check
      _
    $region67: #{tpu_custom_call.1} parent=1 // pred_check_branch
      %140 = sbr.rel (0) target = $region69
    $region68: #{tpu_custom_call.1} parent=1 // pred_region
      %142 = dma.done [#allocation12], 4096
    $region69: #{tpu_custom_call.1} parent=1 // pred_fallthru
      _
    // Predicated region
    $region70: #{tpu_custom_call.1} parent=1 // pred_check
      _
    $region71: #{tpu_custom_call.1} parent=1 // pred_check_branch
      %144 = sbr.rel (0) target = $region73
    $region72: #{tpu_custom_call.1} parent=1 // pred_region
      %146 = dma.done [#allocation15], 4096
    $region73: #{tpu_custom_call.1} parent=1 // pred_fallthru
      _
    // Predicated region
    $region74: #{tpu_custom_call.1} parent=1 // pred_check
      _
    $region75: #{tpu_custom_call.1} parent=1 // pred_check_branch
      %148 = sbr.rel (0) target = $region77
    $region76: #{tpu_custom_call.1} parent=1 // pred_region
      %150 = dma.done [#allocation15], 2048
    $region77: #{tpu_custom_call.1} parent=1 // pred_fallthru
      _
    %v152 = vld [vmem:[#allocation5] sm:$0xff]
    %v153 = vld [vmem:[#allocation5 + $0x8] sm:$0xf]
    %v154 = vld [vmem:[#allocation5 + $0xc] sm:$0xff]
    %v155 = vld [vmem:[#allocation5 + $0x14] sm:$0xf]
    %v156 = vld [vmem:[#allocation5 + $0x18] sm:$0xff]
    %v157 = vld [vmem:[#allocation5 + $0x20] sm:$0xf]
    %v158 = vld [vmem:[#allocation5 + $0x24] sm:$0xff]
    %v159 = vld [vmem:[#allocation5 + $0x2c] sm:$0xf]
    %v160 = vld [vmem:[#allocation5 + $0x30] sm:$0xff]
    %v161 = vld [vmem:[#allocation5 + $0x38] sm:$0xf]
    %v162 = vld [vmem:[#allocation5 + $0x3c] sm:$0xff]
    %v163 = vld [vmem:[#allocation5 + $0x44] sm:$0xf]
    %v164 = vld [vmem:[#allocation5 + $0x48] sm:$0xff]
    %v165 = vld [vmem:[#allocation5 + $0x50] sm:$0xf]
    %v166 = vld [vmem:[#allocation5 + $0x54] sm:$0xff]
    %v167 = vld [vmem:[#allocation5 + $0x5c] sm:$0xf]
    %v168 = vld [vmem:[#allocation8] sm:$0xff]
    %v169 = vld [vmem:[#allocation8 + $0x8] sm:$0xff]
    %v170 = vld [vmem:[#allocation8 + $0x10] sm:$0xff]
    %v171 = vld [vmem:[#allocation8 + $0x18] sm:$0xff]
    %v172 = vld [vmem:[#allocation8 + $0x20] sm:$0xff]
    %v173 = vld [vmem:[#allocation8 + $0x28] sm:$0xff]
    %v174 = vld [vmem:[#allocation8 + $0x30] sm:$0xff]
    %v175 = vld [vmem:[#allocation8 + $0x38] sm:$0xff]
    %v176 = vld [vmem:[#allocation8 + $0x40] sm:$0xff]
    %v177 = vld [vmem:[#allocation8 + $0x48] sm:$0xff]
    %v178 = vld [vmem:[#allocation8 + $0x50] sm:$0xff]
    %v179 = vld [vmem:[#allocation8 + $0x58] sm:$0xff]
    %v180 = vld [vmem:[#allocation8 + $0x60] sm:$0xff]
    %v181 = vld [vmem:[#allocation8 + $0x68] sm:$0xff]
    %v182 = vld [vmem:[#allocation8 + $0x70] sm:$0xff]
    %v183 = vld [vmem:[#allocation8 + $0x78] sm:$0xff]
    %v184 = vld [vmem:[#allocation8 + $0x80] sm:$0xff]
    %v185 = vld [vmem:[#allocation8 + $0x88] sm:$0xff]
    %v186 = vld [vmem:[#allocation8 + $0x90] sm:$0xff]
    %v187 = vld [vmem:[#allocation8 + $0x98] sm:$0xff]
    %v188 = vld [vmem:[#allocation8 + $0xa0] sm:$0xff]
    %v189 = vld [vmem:[#allocation8 + $0xa8] sm:$0xff]
    %v190 = vld [vmem:[#allocation8 + $0xb0] sm:$0xff]
    %v191 = vld [vmem:[#allocation8 + $0xb8] sm:$0xff]
    %v192 = vld [vmem:[#allocation8 + $0xc0] sm:$0xff]
    %v193 = vld [vmem:[#allocation8 + $0xc8] sm:$0xff]
    %v194 = vld [vmem:[#allocation8 + $0xd0] sm:$0xff]
    %v195 = vld [vmem:[#allocation8 + $0xd8] sm:$0xff]
    %v196 = vld [vmem:[#allocation8 + $0xe0] sm:$0xff]
    %v197 = vld [vmem:[#allocation8 + $0xe8] sm:$0xff]
    %v198 = vld [vmem:[#allocation8 + $0xf0] sm:$0xff]
    %v199 = vld [vmem:[#allocation8 + $0xf8] sm:$0xff]
    %v200 = vld [vmem:[#allocation8 + $0x100] sm:$0xff]
    %v201 = vld [vmem:[#allocation8 + $0x108] sm:$0xff]
    %v202 = vld [vmem:[#allocation8 + $0x110] sm:$0xff]
    %v203 = vld [vmem:[#allocation8 + $0x118] sm:$0xff]
    %v204 = vld [vmem:[#allocation8 + $0x120] sm:$0xff]
    %v205 = vld [vmem:[#allocation8 + $0x128] sm:$0x33]
    %v206 = vld [vmem:[%s3] sm:$0x3]
    %v208 = vperm.slane %v206, 0
    %v209 = vperm.slane %v206, 1
    %v228 = vunpack.c.l.b16 %v152
    %v229 = vunpack.c.h.b16 %v152
    %v230 = vunpack.c.l.b16 %v153
    %v231 = vunpack.c.l.b16 %v154
    %v232 = vunpack.c.h.b16 %v154
    %v233 = vunpack.c.l.b16 %v155
    %v234 = vunpack.c.l.b16 %v156
    %v235 = vunpack.c.h.b16 %v156
    %v236 = vunpack.c.l.b16 %v157
    %v237 = vunpack.c.l.b16 %v158
    %v238 = vunpack.c.h.b16 %v158
    %v239 = vunpack.c.l.b16 %v159
    %v240 = vunpack.c.l.b16 %v160
    %v241 = vunpack.c.h.b16 %v160
    %v242 = vunpack.c.l.b16 %v161
    %v243 = vunpack.c.l.b16 %v162
    %v244 = vunpack.c.h.b16 %v162
    %v245 = vunpack.c.l.b16 %v163
    %v246 = vunpack.c.l.b16 %v164
    %v247 = vunpack.c.h.b16 %v164
    %v248 = vunpack.c.l.b16 %v165
    %v249 = vunpack.c.l.b16 %v166
    %v250 = vunpack.c.h.b16 %v166
    %v251 = vunpack.c.l.b16 %v167
    %v252 = vpack.c.b16 %v231, %v228
    %v253 = vpack.c.b16 %v232, %v229
    %v254 = vpack.c.b16 %v233, %v230
    %v255 = vpack.c.b16 %v237, %v234
    %v256 = vpack.c.b16 %v238, %v235
    %v257 = vpack.c.b16 %v239, %v236
    %v258 = vpack.c.b16 %v243, %v240
    %v259 = vpack.c.b16 %v244, %v241
    %v260 = vpack.c.b16 %v245, %v242
    %v261 = vpack.c.b16 %v249, %v246
    %v262 = vpack.c.b16 %v250, %v247
    %v263 = vpack.c.b16 %v251, %v248
    %v310 = vunpack.c.l.b16 %v168
    %v311 = vunpack.c.h.b16 %v168
    %v312 = vunpack.c.l.b16 %v169
    %v313 = vunpack.c.h.b16 %v169
    %v314 = vunpack.c.l.b16 %v170
    %v315 = vunpack.c.h.b16 %v170
    %v316 = vunpack.c.l.b16 %v171
    %v317 = vunpack.c.h.b16 %v171
    %v318 = vunpack.c.l.b16 %v172
    %v319 = vunpack.c.h.b16 %v172
    %v320 = vunpack.c.l.b16 %v173
    %v321 = vunpack.c.h.b16 %v173
    %v322 = vunpack.c.l.b16 %v174
    %v323 = vunpack.c.h.b16 %v174
    %v324 = vunpack.c.l.b16 %v175
    %v325 = vunpack.c.h.b16 %v175
    %v326 = vunpack.c.l.b16 %v176
    %v327 = vunpack.c.h.b16 %v176
    %v328 = vunpack.c.l.b16 %v177
    %v329 = vunpack.c.h.b16 %v177
    %v330 = vunpack.c.l.b16 %v178
    %v331 = vunpack.c.h.b16 %v178
    %v332 = vunpack.c.l.b16 %v179
    %v333 = vunpack.c.h.b16 %v179
    %v334 = vunpack.c.l.b16 %v180
    %v335 = vunpack.c.h.b16 %v180
    %v336 = vunpack.c.l.b16 %v181
    %v337 = vunpack.c.h.b16 %v181
    %v338 = vunpack.c.l.b16 %v182
    %v339 = vunpack.c.h.b16 %v182
    %v340 = vunpack.c.l.b16 %v183
    %v341 = vunpack.c.h.b16 %v183
    %v342 = vunpack.c.l.b16 %v184
    %v343 = vunpack.c.h.b16 %v184
    %v344 = vunpack.c.l.b16 %v185
    %v345 = vunpack.c.h.b16 %v185
    %v346 = vunpack.c.l.b16 %v186
    %v347 = vunpack.c.h.b16 %v186
    %v348 = vunpack.c.l.b16 %v187
    %v349 = vunpack.c.h.b16 %v187
    %v350 = vunpack.c.l.b16 %v188
    %v351 = vunpack.c.h.b16 %v188
    %v352 = vunpack.c.l.b16 %v189
    %v353 = vunpack.c.h.b16 %v189
    %v354 = vunpack.c.l.b16 %v190
    %v355 = vunpack.c.h.b16 %v190
    %v356 = vunpack.c.l.b16 %v191
    %v357 = vunpack.c.h.b16 %v191
    %v358 = vunpack.c.l.b16 %v192
    %v359 = vunpack.c.h.b16 %v192
    %v360 = vunpack.c.l.b16 %v193
    %v361 = vunpack.c.h.b16 %v193
    %v362 = vunpack.c.l.b16 %v194
    %v363 = vunpack.c.h.b16 %v194
    %v364 = vunpack.c.l.b16 %v195
    %v365 = vunpack.c.h.b16 %v195
    %v366 = vunpack.c.l.b16 %v196
    %v367 = vunpack.c.h.b16 %v196
    %v368 = vunpack.c.l.b16 %v197
    %v369 = vunpack.c.h.b16 %v197
    %v370 = vunpack.c.l.b16 %v198
    %v371 = vunpack.c.h.b16 %v198
    %v372 = vunpack.c.l.b16 %v199
    %v373 = vunpack.c.h.b16 %v199
    %v374 = vunpack.c.l.b16 %v200
    %v375 = vunpack.c.h.b16 %v200
    %v376 = vunpack.c.l.b16 %v201
    %v377 = vunpack.c.h.b16 %v201
    %v378 = vunpack.c.l.b16 %v202
    %v379 = vunpack.c.h.b16 %v202
    %v380 = vunpack.c.l.b16 %v203
    %v381 = vunpack.c.h.b16 %v203
    %v382 = vunpack.c.l.b16 %v204
    %v383 = vunpack.c.h.b16 %v204
    %v384 = vunpack.c.l.b16 %v205
    %v385 = vunpack.c.h.b16 %v205
    %v386 = vpack.c.b16 %v312, %v310
    %v387 = vpack.c.b16 %v313, %v311
    %v388 = vpack.c.b16 %v316, %v314
    %v389 = vpack.c.b16 %v317, %v315
    %v390 = vpack.c.b16 %v320, %v318
    %v391 = vpack.c.b16 %v321, %v319
    %v392 = vpack.c.b16 %v324, %v322
    %v393 = vpack.c.b16 %v325, %v323
    %v394 = vpack.c.b16 %v328, %v326
    %v395 = vpack.c.b16 %v329, %v327
    %v396 = vpack.c.b16 %v332, %v330
    %v397 = vpack.c.b16 %v333, %v331
    %v398 = vpack.c.b16 %v336, %v334
    %v399 = vpack.c.b16 %v337, %v335
    %v400 = vpack.c.b16 %v340, %v338
    %v401 = vpack.c.b16 %v341, %v339
    %v402 = vpack.c.b16 %v344, %v342
    %v403 = vpack.c.b16 %v345, %v343
    %v404 = vpack.c.b16 %v348, %v346
    %v405 = vpack.c.b16 %v349, %v347
    %v406 = vpack.c.b16 %v352, %v350
    %v407 = vpack.c.b16 %v353, %v351
    %v408 = vpack.c.b16 %v356, %v354
    %v409 = vpack.c.b16 %v357, %v355
    %v410 = vpack.c.b16 %v360, %v358
    %v411 = vpack.c.b16 %v361, %v359
    %v412 = vpack.c.b16 %v364, %v362
    %v413 = vpack.c.b16 %v365, %v363
    %v414 = vpack.c.b16 %v368, %v366
    %v415 = vpack.c.b16 %v369, %v367
    %v416 = vpack.c.b16 %v372, %v370
    %v417 = vpack.c.b16 %v373, %v371
    %v418 = vpack.c.b16 %v376, %v374
    %v419 = vpack.c.b16 %v377, %v375
    %v420 = vpack.c.b16 %v380, %v378
    %v421 = vpack.c.b16 %v381, %v379
    %v422 = vpack.c.b16 %v384, %v382
    %v423 = vpack.c.b16 %v385, %v383
    %vm460 = vcmask 359424
    %v462 = vsel %vm460, %v254, 0
    %v465 = vsel %vm460, %v257, 0
    %v468 = vsel %vm460, %v260, 0
    %v471 = vsel %vm460, %v263, 0
    %vm473 = vcmask 1045504
    %v475 = vsel %vm473, %v422, 0
    %v478 = vsel %vm473, %v423, 0
    %480 = vmatpush.bf16.msra.mxu0 %v400
    %481 = vmatpush.bf16.msra.mxu0 %v398
    %482 = vmatpush.bf16.msra.mxu0 %v396
    %483 = vmatpush.bf16.msra.mxu0 %v394
    %484 = vmatpush.bf16.msra.mxu0 %v392
    %485 = vmatpush.bf16.msra.mxu0 %v390
    %486 = vmatpush.bf16.msra.mxu0 %v388
    %487 = vmatpush.bf16.msra.mxu0 %v386
    %488 = vmatmul.bf16.gmra.mxu0 %v252
    %v489 = vpop.f32.mrf.mxu0
    %v490 = vadd.f32 %v208, %v489
    %v491 = vpop.f32.mrf.mxu0
    %v492 = vadd.f32 %v208, %v491
    %493 = vmatmul.bf16.gmra.mxu0 %v255
    %v494 = vpop.f32.mrf.mxu0
    %v495 = vadd.f32 %v208, %v494
    %v496 = vpop.f32.mrf.mxu0
    %v497 = vadd.f32 %v208, %v496
    %498 = vmatmul.bf16.gmra.mxu0 %v258
    %v499 = vpop.f32.mrf.mxu0
    %v500 = vadd.f32 %v208, %v499
    %v501 = vpop.f32.mrf.mxu0
    %v502 = vadd.f32 %v208, %v501
    %503 = vmatmul.bf16.gmra.mxu0 %v261
    %v504 = vpop.f32.mrf.mxu0
    %v505 = vadd.f32 %v208, %v504
    %v506 = vpop.f32.mrf.mxu0
    %v507 = vadd.f32 %v208, %v506
    %508 = vdwg.mxu0
    %509 = vmatpush.bf16.msra.mxu0 %v416
    %510 = vmatpush.bf16.msra.mxu0 %v414
    %511 = vmatpush.bf16.msra.mxu0 %v412
    %512 = vmatpush.bf16.msra.mxu0 %v410
    %513 = vmatpush.bf16.msra.mxu0 %v408
    %514 = vmatpush.bf16.msra.mxu0 %v406
    %515 = vmatpush.bf16.msra.mxu0 %v404
    %516 = vmatpush.bf16.msra.mxu0 %v402
    %517 = vmatmul.bf16.gmra.mxu0 %v253
    %v518 = vpop.f32.mrf.mxu0
    %v519 = vadd.f32 %v490, %v518
    %v520 = vpop.f32.mrf.mxu0
    %v521 = vadd.f32 %v492, %v520
    %522 = vmatmul.bf16.gmra.mxu0 %v256
    %v523 = vpop.f32.mrf.mxu0
    %v524 = vadd.f32 %v495, %v523
    %v525 = vpop.f32.mrf.mxu0
    %v526 = vadd.f32 %v497, %v525
    %527 = vmatmul.bf16.gmra.mxu0 %v259
    %v528 = vpop.f32.mrf.mxu0
    %v529 = vadd.f32 %v500, %v528
    %v530 = vpop.f32.mrf.mxu0
    %v531 = vadd.f32 %v502, %v530
    %532 = vmatmul.bf16.gmra.mxu0 %v262
    %v533 = vpop.f32.mrf.mxu0
    %v534 = vadd.f32 %v505, %v533
    %v535 = vpop.f32.mrf.mxu0
    %v536 = vadd.f32 %v507, %v535
    %537 = vdwg.mxu0
    %538 = vmatpush.bf16.msra.mxu0 0
    %539 = vmatpush.bf16.msra.mxu0 0
    %540 = vmatpush.bf16.msra.mxu0 0
    %541 = vmatpush.bf16.msra.mxu0 0
    %542 = vmatpush.bf16.msra.mxu0 0
    %543 = vmatpush.bf16.msra.mxu0 %v475
    %544 = vmatpush.bf16.msra.mxu0 %v420
    %545 = vmatpush.bf16.msra.mxu0 %v418
    %546 = vmatmul.bf16.gmra.mxu0 %v462
    %v547 = vpop.f32.mrf.mxu0
    %v548 = vadd.f32 %v519, %v547
    %v549 = vpop.f32.mrf.mxu0
    %v550 = vadd.f32 %v521, %v549
    %551 = vmatmul.bf16.gmra.mxu0 %v465
    %v552 = vpop.f32.mrf.mxu0
    %v553 = vadd.f32 %v524, %v552
    %v554 = vpop.f32.mrf.mxu0
    %v555 = vadd.f32 %v526, %v554
    %556 = vmatmul.bf16.gmra.mxu0 %v468
    %v557 = vpop.f32.mrf.mxu0
    %v558 = vadd.f32 %v529, %v557
    %v559 = vpop.f32.mrf.mxu0
    %v560 = vadd.f32 %v531, %v559
    %561 = vmatmul.bf16.gmra.mxu0 %v471
    %v562 = vpop.f32.mrf.mxu0
    %v563 = vadd.f32 %v534, %v562
    %v564 = vpop.f32.mrf.mxu0
    %v565 = vadd.f32 %v536, %v564
    %566 = vdwg.mxu0
    %567 = vmatpush.bf16.msra.mxu0 %v401
    %568 = vmatpush.bf16.msra.mxu0 %v399
    %569 = vmatpush.bf16.msra.mxu0 %v397
    %570 = vmatpush.bf16.msra.mxu0 %v395
    %571 = vmatpush.bf16.msra.mxu0 %v393
    %572 = vmatpush.bf16.msra.mxu0 %v391
    %573 = vmatpush.bf16.msra.mxu0 %v389
    %574 = vmatpush.bf16.msra.mxu0 %v387
    %575 = vmatmul.bf16.gmra.mxu0 %v252
    %v576 = vpop.f32.mrf.mxu0
    %v577 = vadd.f32 %v209, %v576
    %v578 = vpop.f32.mrf.mxu0
    %v579 = vadd.f32 %v209, %v578
    %580 = vmatmul.bf16.gmra.mxu0 %v255
    %v581 = vpop.f32.mrf.mxu0
    %v582 = vadd.f32 %v209, %v581
    %v583 = vpop.f32.mrf.mxu0
    %v584 = vadd.f32 %v209, %v583
    %585 = vmatmul.bf16.gmra.mxu0 %v258
    %v586 = vpop.f32.mrf.mxu0
    %v587 = vadd.f32 %v209, %v586
    %v588 = vpop.f32.mrf.mxu0
    %v589 = vadd.f32 %v209, %v588
    %590 = vmatmul.bf16.gmra.mxu0 %v261
    %v591 = vpop.f32.mrf.mxu0
    %v592 = vadd.f32 %v209, %v591
    %v593 = vpop.f32.mrf.mxu0
    %v594 = vadd.f32 %v209, %v593
    %595 = vdwg.mxu0
    %596 = vmatpush.bf16.msra.mxu0 %v417
    %597 = vmatpush.bf16.msra.mxu0 %v415
    %598 = vmatpush.bf16.msra.mxu0 %v413
    %599 = vmatpush.bf16.msra.mxu0 %v411
    %600 = vmatpush.bf16.msra.mxu0 %v409
    %601 = vmatpush.bf16.msra.mxu0 %v407
    %602 = vmatpush.bf16.msra.mxu0 %v405
    %603 = vmatpush.bf16.msra.mxu0 %v403
    %604 = vmatmul.bf16.gmra.mxu0 %v253
    %v605 = vpop.f32.mrf.mxu0
    %v606 = vadd.f32 %v577, %v605
    %v607 = vpop.f32.mrf.mxu0
    %v608 = vadd.f32 %v579, %v607
    %609 = vmatmul.bf16.gmra.mxu0 %v256
    %v610 = vpop.f32.mrf.mxu0
    %v611 = vadd.f32 %v582, %v610
    %v612 = vpop.f32.mrf.mxu0
    %v613 = vadd.f32 %v584, %v612
    %614 = vmatmul.bf16.gmra.mxu0 %v259
    %v615 = vpop.f32.mrf.mxu0
    %v616 = vadd.f32 %v587, %v615
    %v617 = vpop.f32.mrf.mxu0
    %v618 = vadd.f32 %v589, %v617
    %619 = vmatmul.bf16.gmra.mxu0 %v262
    %v620 = vpop.f32.mrf.mxu0
    %v621 = vadd.f32 %v592, %v620
    %v622 = vpop.f32.mrf.mxu0
    %v623 = vadd.f32 %v594, %v622
    %624 = vdwg.mxu0
    %625 = vmatpush.bf16.msra.mxu0 0
    %626 = vmatpush.bf16.msra.mxu0 0
    %627 = vmatpush.bf16.msra.mxu0 0
    %628 = vmatpush.bf16.msra.mxu0 0
    %629 = vmatpush.bf16.msra.mxu0 0
    %630 = vmatpush.bf16.msra.mxu0 %v478
    %631 = vmatpush.bf16.msra.mxu0 %v421
    %632 = vmatpush.bf16.msra.mxu0 %v419
    %633 = vmatmul.bf16.gmra.mxu0 %v462
    %v634 = vpop.f32.mrf.mxu0
    %v635 = vadd.f32 %v606, %v634
    %v636 = vpop.f32.mrf.mxu0
    %v637 = vadd.f32 %v608, %v636
    %638 = vmatmul.bf16.gmra.mxu0 %v465
    %v639 = vpop.f32.mrf.mxu0
    %v640 = vadd.f32 %v611, %v639
    %v641 = vpop.f32.mrf.mxu0
    %v642 = vadd.f32 %v613, %v641
    %643 = vmatmul.bf16.gmra.mxu0 %v468
    %v644 = vpop.f32.mrf.mxu0
    %v645 = vadd.f32 %v616, %v644
    %v646 = vpop.f32.mrf.mxu0
    %v647 = vadd.f32 %v618, %v646
    %648 = vmatmul.bf16.gmra.mxu0 %v471
    %v649 = vpop.f32.mrf.mxu0
    %v650 = vadd.f32 %v621, %v649
    %v651 = vpop.f32.mrf.mxu0
    %v652 = vadd.f32 %v623, %v651
    %653 = vdwg.mxu0
    %654 = vst [vmem:[#allocation2] sm:$0xff] %v548
    %655 = vst [vmem:[#allocation2 + $0x8] sm:$0xff] %v635
    %656 = vst [vmem:[#allocation2 + $0x10] sm:$0xff] %v550
    %657 = vst [vmem:[#allocation2 + $0x18] sm:$0xff] %v637
    %658 = vst [vmem:[#allocation2 + $0x20] sm:$0xff] %v553
    %659 = vst [vmem:[#allocation2 + $0x28] sm:$0xff] %v640
    %660 = vst [vmem:[#allocation2 + $0x30] sm:$0xff] %v555
    %661 = vst [vmem:[#allocation2 + $0x38] sm:$0xff] %v642
    %662 = vst [vmem:[#allocation2 + $0x40] sm:$0xff] %v558
    %663 = vst [vmem:[#allocation2 + $0x48] sm:$0xff] %v645
    %664 = vst [vmem:[#allocation2 + $0x50] sm:$0xff] %v560
    %665 = vst [vmem:[#allocation2 + $0x58] sm:$0xff] %v647
    %666 = vst [vmem:[#allocation2 + $0x60] sm:$0xff] %v563
    %667 = vst [vmem:[#allocation2 + $0x68] sm:$0xff] %v650
    %668 = vst [vmem:[#allocation2 + $0x70] sm:$0xff] %v565
    %669 = vst [vmem:[#allocation2 + $0x78] sm:$0xff] %v652
    %s670 = smul.u32 0, 2
    %s671 = smul.addr %s670, 8
    %s672 = scalar_lea.vmem [#allocation2], %s671
    %v673 = vld [vmem:[%s672] sm:$0xff]
    %v674 = vld [vmem:[%s672 + $0x8] sm:$0xff]
    %v675 = vld [vmem:[#allocation10] sm:$0xff]
    %v676 = vld [vmem:[#allocation10 + $0x8] sm:$0xff]
    %v677 = vld [vmem:[#allocation10 + $0x10] sm:$0xff]
    %v678 = vld [vmem:[#allocation10 + $0x18] sm:$0xff]
    %v679 = vld [vmem:[#allocation10 + $0x20] sm:$0xff]
    %v680 = vld [vmem:[#allocation10 + $0x28] sm:$0xff]
    %v681 = vld [vmem:[#allocation10 + $0x30] sm:$0xff]
    %v682 = vld [vmem:[#allocation10 + $0x38] sm:$0xff]
    %v683 = vld [vmem:[#allocation10 + $0x40] sm:$0xff]
    %v684 = vld [vmem:[#allocation10 + $0x48] sm:$0xff]
    %v685 = vld [vmem:[#allocation10 + $0x50] sm:$0xff]
    %v686 = vld [vmem:[#allocation10 + $0x58] sm:$0xff]
    %v687 = vld [vmem:[#allocation10 + $0x60] sm:$0xff]
    %v688 = vld [vmem:[#allocation10 + $0x68] sm:$0xff]
    %v689 = vld [vmem:[#allocation10 + $0x70] sm:$0xff]
    %v690 = vld [vmem:[#allocation10 + $0x78] sm:$0xff]
    %v691 = vld [vmem:[#allocation10 + $0x80] sm:$0xff]
    %v692 = vld [vmem:[#allocation10 + $0x88] sm:$0xff]
    %v693 = vld [vmem:[#allocation10 + $0x90] sm:$0xff]
    %v694 = vld [vmem:[#allocation10 + $0x98] sm:$0xff]
    %v695 = vld [vmem:[#allocation10 + $0xa0] sm:$0xff]
    %v696 = vld [vmem:[#allocation10 + $0xa8] sm:$0xff]
    %v697 = vld [vmem:[#allocation10 + $0xb0] sm:$0xff]
    %v698 = vld [vmem:[#allocation10 + $0xb8] sm:$0xff]
    %v699 = vld [vmem:[#allocation10 + $0xc0] sm:$0xff]
    %v700 = vld [vmem:[#allocation10 + $0xc8] sm:$0xff]
    %v701 = vld [vmem:[#allocation10 + $0xd0] sm:$0xff]
    %v702 = vld [vmem:[#allocation10 + $0xd8] sm:$0xff]
    %v703 = vld [vmem:[#allocation10 + $0xe0] sm:$0xff]
    %v704 = vld [vmem:[#allocation10 + $0xe8] sm:$0xff]
    %v705 = vld [vmem:[#allocation10 + $0xf0] sm:$0xff]
    %v706 = vld [vmem:[#allocation10 + $0xf8] sm:$0xff]
    %v739 = vunpack.c.l.b16 %v675
    %v740 = vunpack.c.h.b16 %v675
    %v741 = vunpack.c.l.b16 %v676
    %v742 = vunpack.c.h.b16 %v676
    %v743 = vunpack.c.l.b16 %v677
    %v744 = vunpack.c.h.b16 %v677
    %v745 = vunpack.c.l.b16 %v678
    %v746 = vunpack.c.h.b16 %v678
    %v747 = vunpack.c.l.b16 %v679
    %v748 = vunpack.c.h.b16 %v679
    %v749 = vunpack.c.l.b16 %v680
    %v750 = vunpack.c.h.b16 %v680
    %v751 = vunpack.c.l.b16 %v681
    %v752 = vunpack.c.h.b16 %v681
    %v753 = vunpack.c.l.b16 %v682
    %v754 = vunpack.c.h.b16 %v682
    %v755 = vunpack.c.l.b16 %v683
    %v756 = vunpack.c.h.b16 %v683
    %v757 = vunpack.c.l.b16 %v684
    %v758 = vunpack.c.h.b16 %v684
    %v759 = vunpack.c.l.b16 %v685
    %v760 = vunpack.c.h.b16 %v685
    %v761 = vunpack.c.l.b16 %v686
    %v762 = vunpack.c.h.b16 %v686
    %v763 = vunpack.c.l.b16 %v687
    %v764 = vunpack.c.h.b16 %v687
    %v765 = vunpack.c.l.b16 %v688
    %v766 = vunpack.c.h.b16 %v688
    %v767 = vunpack.c.l.b16 %v689
    %v768 = vunpack.c.h.b16 %v689
    %v769 = vunpack.c.l.b16 %v690
    %v770 = vunpack.c.h.b16 %v690
    %v771 = vunpack.c.l.b16 %v691
    %v772 = vunpack.c.h.b16 %v691
    %v773 = vunpack.c.l.b16 %v692
    %v774 = vunpack.c.h.b16 %v692
    %v775 = vunpack.c.l.b16 %v693
    %v776 = vunpack.c.h.b16 %v693
    %v777 = vunpack.c.l.b16 %v694
    %v778 = vunpack.c.h.b16 %v694
    %v779 = vunpack.c.l.b16 %v695
    %v780 = vunpack.c.h.b16 %v695
    %v781 = vunpack.c.l.b16 %v696
    %v782 = vunpack.c.h.b16 %v696
    %v783 = vunpack.c.l.b16 %v697
    %v784 = vunpack.c.h.b16 %v697
    %v785 = vunpack.c.l.b16 %v698
    %v786 = vunpack.c.h.b16 %v698
    %v787 = vunpack.c.l.b16 %v699
    %v788 = vunpack.c.h.b16 %v699
    %v789 = vunpack.c.l.b16 %v700
    %v790 = vunpack.c.h.b16 %v700
    %v791 = vunpack.c.l.b16 %v701
    %v792 = vunpack.c.h.b16 %v701
    %v793 = vunpack.c.l.b16 %v702
    %v794 = vunpack.c.h.b16 %v702
    %v795 = vunpack.c.l.b16 %v703
    %v796 = vunpack.c.h.b16 %v703
    %v797 = vunpack.c.l.b16 %v704
    %v798 = vunpack.c.h.b16 %v704
    %v799 = vunpack.c.l.b16 %v705
    %v800 = vunpack.c.h.b16 %v705
    %v801 = vunpack.c.l.b16 %v706
    %v802 = vunpack.c.h.b16 %v706
    %v803 = vpack.c.b16 %v741, %v739
    %v804 = vpack.c.b16 %v742, %v740
    %v805 = vpack.c.b16 %v745, %v743
    %v806 = vpack.c.b16 %v746, %v744
    %v807 = vpack.c.b16 %v749, %v747
    %v808 = vpack.c.b16 %v750, %v748
    %v809 = vpack.c.b16 %v753, %v751
    %v810 = vpack.c.b16 %v754, %v752
    %v811 = vpack.c.b16 %v757, %v755
    %v812 = vpack.c.b16 %v758, %v756
    %v813 = vpack.c.b16 %v761, %v759
    %v814 = vpack.c.b16 %v762, %v760
    %v815 = vpack.c.b16 %v765, %v763
    %v816 = vpack.c.b16 %v766, %v764
    %v817 = vpack.c.b16 %v769, %v767
    %v818 = vpack.c.b16 %v770, %v768
    %v819 = vpack.c.b16 %v773, %v771
    %v820 = vpack.c.b16 %v774, %v772
    %v821 = vpack.c.b16 %v777, %v775
    %v822 = vpack.c.b16 %v778, %v776
    %v823 = vpack.c.b16 %v781, %v779
    %v824 = vpack.c.b16 %v782, %v780
    %v825 = vpack.c.b16 %v785, %v783
    %v826 = vpack.c.b16 %v786, %v784
    %v827 = vpack.c.b16 %v789, %v787
    %v828 = vpack.c.b16 %v790, %v788
    %v829 = vpack.c.b16 %v793, %v791
    %v830 = vpack.c.b16 %v794, %v792
    %v831 = vpack.c.b16 %v797, %v795
    %v832 = vpack.c.b16 %v798, %v796
    %v833 = vpack.c.b16 %v801, %v799
    %v834 = vpack.c.b16 %v802, %v800
    %867 = vmatpush.bf16.msra.mxu0 %v817
    %868 = vmatpush.bf16.msra.mxu0 %v815
    %869 = vmatpush.bf16.msra.mxu0 %v813
    %870 = vmatpush.bf16.msra.mxu0 %v811
    %871 = vmatpush.bf16.msra.mxu0 %v809
    %872 = vmatpush.bf16.msra.mxu0 %v807
    %873 = vmatpush.bf16.msra.mxu0 %v805
    %874 = vmatpush.bf16.msra.mxu0 %v803
    %875 = vmatmul.bf16.gmra.mxu0 0
    %v876 = vpop.f32.mrf.mxu0
    %v877 = vadd.f32 0.0, %v876
    %v878 = vpop.f32.mrf.mxu0
    %879 = vdwg.mxu0
    %880 = vmatpush.bf16.msra.mxu0 %v833
    %881 = vmatpush.bf16.msra.mxu0 %v831
    %882 = vmatpush.bf16.msra.mxu0 %v829
    %883 = vmatpush.bf16.msra.mxu0 %v827
    %884 = vmatpush.bf16.msra.mxu0 %v825
    %885 = vmatpush.bf16.msra.mxu0 %v823
    %886 = vmatpush.bf16.msra.mxu0 %v821
    %887 = vmatpush.bf16.msra.mxu0 %v819
    %888 = vmatmul.bf16.gmra.mxu0 0
    %v889 = vpop.f32.mrf.mxu0
    %v890 = vadd.f32 %v877, %v889
    %v891 = vpop.f32.mrf.mxu0
    %892 = vdwg.mxu0
    %893 = vmatpush.bf16.msra.mxu0 %v818
    %894 = vmatpush.bf16.msra.mxu0 %v816
    %895 = vmatpush.bf16.msra.mxu0 %v814
    %896 = vmatpush.bf16.msra.mxu0 %v812
    %897 = vmatpush.bf16.msra.mxu0 %v810
    %898 = vmatpush.bf16.msra.mxu0 %v808
    %899 = vmatpush.bf16.msra.mxu0 %v806
    %900 = vmatpush.bf16.msra.mxu0 %v804
    %901 = vmatmul.bf16.gmra.mxu0 0
    %v902 = vpop.f32.mrf.mxu0
    %v903 = vadd.f32 0.0, %v902
    %v904 = vpop.f32.mrf.mxu0
    %905 = vdwg.mxu0
    %906 = vmatpush.bf16.msra.mxu0 %v834
    %907 = vmatpush.bf16.msra.mxu0 %v832
    %908 = vmatpush.bf16.msra.mxu0 %v830
    %909 = vmatpush.bf16.msra.mxu0 %v828
    %910 = vmatpush.bf16.msra.mxu0 %v826
    %911 = vmatpush.bf16.msra.mxu0 %v824
    %912 = vmatpush.bf16.msra.mxu0 %v822
    %913 = vmatpush.bf16.msra.mxu0 %v820
    %914 = vmatmul.bf16.gmra.mxu0 0
    %v915 = vpop.f32.mrf.mxu0
    %v916 = vadd.f32 %v903, %v915
    %v917 = vpop.f32.mrf.mxu0
    %918 = vdwg.mxu0
    %v919 = vadd.f32 %v673, %v890
    %v920 = vadd.f32 %v674, %v916
    %v921 = vtanh.pop %v919
    %v922 = vtanh.pop %v920
    %s923 = smul.addr %s670, 8
    %s924 = scalar_lea.vmem [#allocation3], %s923
    %925 = vst [vmem:[%s924] sm:$0xff] %v921
    %926 = vst [vmem:[%s924 + $0x8] sm:$0xff] %v922
    %s927 = smul.u32 1, 2
    %s928 = smul.addr %s927, 8
    %s929 = scalar_lea.vmem [#allocation2], %s928
    %v930 = vld [vmem:[%s929] sm:$0xff]
    %v931 = vld [vmem:[%s929 + $0x8] sm:$0xff]
    %v932 = vpack.c.bf16 %v921, %v921
    %v933 = vpack.c.bf16 %v922, %v922
    %v934 = vld [vmem:[#allocation10] sm:$0xff]
    %v935 = vld [vmem:[#allocation10 + $0x8] sm:$0xff]
    %v936 = vld [vmem:[#allocation10 + $0x10] sm:$0xff]
    %v937 = vld [vmem:[#allocation10 + $0x18] sm:$0xff]
    %v938 = vld [vmem:[#allocation10 + $0x20] sm:$0xff]
    %v939 = vld [vmem:[#allocation10 + $0x28] sm:$0xff]
    %v940 = vld [vmem:[#allocation10 + $0x30] sm:$0xff]
    %v941 = vld [vmem:[#allocation10 + $0x38] sm:$0xff]
    %v942 = vld [vmem:[#allocation10 + $0x40] sm:$0xff]
    %v943 = vld [vmem:[#allocation10 + $0x48] sm:$0xff]
    %v944 = vld [vmem:[#allocation10 + $0x50] sm:$0xff]
    %v945 = vld [vmem:[#allocation10 + $0x58] sm:$0xff]
    %v946 = vld [vmem:[#allocation10 + $0x60] sm:$0xff]
    %v947 = vld [vmem:[#allocation10 + $0x68] sm:$0xff]
    %v948 = vld [vmem:[#allocation10 + $0x70] sm:$0xff]
    %v949 = vld [vmem:[#allocation10 + $0x78] sm:$0xff]
    %v950 = vld [vmem:[#allocation10 + $0x80] sm:$0xff]
    %v951 = vld [vmem:[#allocation10 + $0x88] sm:$0xff]
    %v952 = vld [vmem:[#allocation10 + $0x90] sm:$0xff]
    %v953 = vld [vmem:[#allocation10 + $0x98] sm:$0xff]
    %v954 = vld [vmem:[#allocation10 + $0xa0] sm:$0xff]
    %v955 = vld [vmem:[#allocation10 + $0xa8] sm:$0xff]
    %v956 = vld [vmem:[#allocation10 + $0xb0] sm:$0xff]
    %v957 = vld [vmem:[#allocation10 + $0xb8] sm:$0xff]
    %v958 = vld [vmem:[#allocation10 + $0xc0] sm:$0xff]
    %v959 = vld [vmem:[#allocation10 + $0xc8] sm:$0xff]
    %v960 = vld [vmem:[#allocation10 + $0xd0] sm:$0xff]
    %v961 = vld [vmem:[#allocation10 + $0xd8] sm:$0xff]
    %v962 = vld [vmem:[#allocation10 + $0xe0] sm:$0xff]
    %v963 = vld [vmem:[#allocation10 + $0xe8] sm:$0xff]
    %v964 = vld [vmem:[#allocation10 + $0xf0] sm:$0xff]
    %v965 = vld [vmem:[#allocation10 + $0xf8] sm:$0xff]
    %v998 = vunpack.c.l.b16 %v934
    %v999 = vunpack.c.h.b16 %v934
    %v1000 = vunpack.c.l.b16 %v935
    %v1001 = vunpack.c.h.b16 %v935
    %v1002 = vunpack.c.l.b16 %v936
    %v1003 = vunpack.c.h.b16 %v936
    %v1004 = vunpack.c.l.b16 %v937
    %v1005 = vunpack.c.h.b16 %v937
    %v1006 = vunpack.c.l.b16 %v938
    %v1007 = vunpack.c.h.b16 %v938
    %v1008 = vunpack.c.l.b16 %v939
    %v1009 = vunpack.c.h.b16 %v939
    %v1010 = vunpack.c.l.b16 %v940
    %v1011 = vunpack.c.h.b16 %v940
    %v1012 = vunpack.c.l.b16 %v941
    %v1013 = vunpack.c.h.b16 %v941
    %v1014 = vunpack.c.l.b16 %v942
    %v1015 = vunpack.c.h.b16 %v942
    %v1016 = vunpack.c.l.b16 %v943
    %v1017 = vunpack.c.h.b16 %v943
    %v1018 = vunpack.c.l.b16 %v944
    %v1019 = vunpack.c.h.b16 %v944
    %v1020 = vunpack.c.l.b16 %v945
    %v1021 = vunpack.c.h.b16 %v945
    %v1022 = vunpack.c.l.b16 %v946
    %v1023 = vunpack.c.h.b16 %v946
    %v1024 = vunpack.c.l.b16 %v947
    %v1025 = vunpack.c.h.b16 %v947
    %v1026 = vunpack.c.l.b16 %v948
    %v1027 = vunpack.c.h.b16 %v948
    %v1028 = vunpack.c.l.b16 %v949
    %v1029 = vunpack.c.h.b16 %v949
    %v1030 = vunpack.c.l.b16 %v950
    %v1031 = vunpack.c.h.b16 %v950
    %v1032 = vunpack.c.l.b16 %v951
    %v1033 = vunpack.c.h.b16 %v951
    %v1034 = vunpack.c.l.b16 %v952
    %v1035 = vunpack.c.h.b16 %v952
    %v1036 = vunpack.c.l.b16 %v953
    %v1037 = vunpack.c.h.b16 %v953
    %v1038 = vunpack.c.l.b16 %v954
    %v1039 = vunpack.c.h.b16 %v954
    %v1040 = vunpack.c.l.b16 %v955
    %v1041 = vunpack.c.h.b16 %v955
    %v1042 = vunpack.c.l.b16 %v956
    %v1043 = vunpack.c.h.b16 %v956
    %v1044 = vunpack.c.l.b16 %v957
    %v1045 = vunpack.c.h.b16 %v957
    %v1046 = vunpack.c.l.b16 %v958
    %v1047 = vunpack.c.h.b16 %v958
    %v1048 = vunpack.c.l.b16 %v959
    %v1049 = vunpack.c.h.b16 %v959
    %v1050 = vunpack.c.l.b16 %v960
    %v1051 = vunpack.c.h.b16 %v960
    %v1052 = vunpack.c.l.b16 %v961
    %v1053 = vunpack.c.h.b16 %v961
    %v1054 = vunpack.c.l.b16 %v962
    %v1055 = vunpack.c.h.b16 %v962
    %v1056 = vunpack.c.l.b16 %v963
    %v1057 = vunpack.c.h.b16 %v963
    %v1058 = vunpack.c.l.b16 %v964
    %v1059 = vunpack.c.h.b16 %v964
    %v1060 = vunpack.c.l.b16 %v965
    %v1061 = vunpack.c.h.b16 %v965
    %v1062 = vpack.c.b16 %v1000, %v998
    %v1063 = vpack.c.b16 %v1001, %v999
    %v1064 = vpack.c.b16 %v1004, %v1002
    %v1065 = vpack.c.b16 %v1005, %v1003
    %v1066 = vpack.c.b16 %v1008, %v1006
    %v1067 = vpack.c.b16 %v1009, %v1007
    %v1068 = vpack.c.b16 %v1012, %v1010
    %v1069 = vpack.c.b16 %v1013, %v1011
    %v1070 = vpack.c.b16 %v1016, %v1014
    %v1071 = vpack.c.b16 %v1017, %v1015
    %v1072 = vpack.c.b16 %v1020, %v1018
    %v1073 = vpack.c.b16 %v1021, %v1019
    %v1074 = vpack.c.b16 %v1024, %v1022
    %v1075 = vpack.c.b16 %v1025, %v1023
    %v1076 = vpack.c.b16 %v1028, %v1026
    %v1077 = vpack.c.b16 %v1029, %v1027
    %v1078 = vpack.c.b16 %v1032, %v1030
    %v1079 = vpack.c.b16 %v1033, %v1031
    %v1080 = vpack.c.b16 %v1036, %v1034
    %v1081 = vpack.c.b16 %v1037, %v1035
    %v1082 = vpack.c.b16 %v1040, %v1038
    %v1083 = vpack.c.b16 %v1041, %v1039
    %v1084 = vpack.c.b16 %v1044, %v1042
    %v1085 = vpack.c.b16 %v1045, %v1043
    %v1086 = vpack.c.b16 %v1048, %v1046
    %v1087 = vpack.c.b16 %v1049, %v1047
    %v1088 = vpack.c.b16 %v1052, %v1050
    %v1089 = vpack.c.b16 %v1053, %v1051
    %v1090 = vpack.c.b16 %v1056, %v1054
    %v1091 = vpack.c.b16 %v1057, %v1055
    %v1092 = vpack.c.b16 %v1060, %v1058
    %v1093 = vpack.c.b16 %v1061, %v1059
    %1126 = vmatpush.bf16.msra.mxu0 %v1076
    %1127 = vmatpush.bf16.msra.mxu0 %v1074
    %1128 = vmatpush.bf16.msra.mxu0 %v1072
    %1129 = vmatpush.bf16.msra.mxu0 %v1070
    %1130 = vmatpush.bf16.msra.mxu0 %v1068
    %1131 = vmatpush.bf16.msra.mxu0 %v1066
    %1132 = vmatpush.bf16.msra.mxu0 %v1064
    %1133 = vmatpush.bf16.msra.mxu0 %v1062
    %1134 = vmatmul.bf16.gmra.mxu0 %v932
    %v1135 = vpop.f32.mrf.mxu0
    %v1136 = vadd.f32 0.0, %v1135
    %v1137 = vpop.f32.mrf.mxu0
    %1138 = vdwg.mxu0
    %1139 = vmatpush.bf16.msra.mxu0 %v1092
    %1140 = vmatpush.bf16.msra.mxu0 %v1090
    %1141 = vmatpush.bf16.msra.mxu0 %v1088
    %1142 = vmatpush.bf16.msra.mxu0 %v1086
    %1143 = vmatpush.bf16.msra.mxu0 %v1084
    %1144 = vmatpush.bf16.msra.mxu0 %v1082
    %1145 = vmatpush.bf16.msra.mxu0 %v1080
    %1146 = vmatpush.bf16.msra.mxu0 %v1078
    %1147 = vmatmul.bf16.gmra.mxu0 %v933
    %v1148 = vpop.f32.mrf.mxu0
    %v1149 = vadd.f32 %v1136, %v1148
    %v1150 = vpop.f32.mrf.mxu0
    %1151 = vdwg.mxu0
    %1152 = vmatpush.bf16.msra.mxu0 %v1077
    %1153 = vmatpush.bf16.msra.mxu0 %v1075
    %1154 = vmatpush.bf16.msra.mxu0 %v1073
    %1155 = vmatpush.bf16.msra.mxu0 %v1071
    %1156 = vmatpush.bf16.msra.mxu0 %v1069
    %1157 = vmatpush.bf16.msra.mxu0 %v1067
    %1158 = vmatpush.bf16.msra.mxu0 %v1065
    %1159 = vmatpush.bf16.msra.mxu0 %v1063
    %1160 = vmatmul.bf16.gmra.mxu0 %v932
    %v1161 = vpop.f32.mrf.mxu0
    %v1162 = vadd.f32 0.0, %v1161
    %v1163 = vpop.f32.mrf.mxu0
    %1164 = vdwg.mxu0
    %1165 = vmatpush.bf16.msra.mxu0 %v1093
    %1166 = vmatpush.bf16.msra.mxu0 %v1091
    %1167 = vmatpush.bf16.msra.mxu0 %v1089
    %1168 = vmatpush.bf16.msra.mxu0 %v1087
    %1169 = vmatpush.bf16.msra.mxu0 %v1085
    %1170 = vmatpush.bf16.msra.mxu0 %v1083
    %1171 = vmatpush.bf16.msra.mxu0 %v1081
    %1172 = vmatpush.bf16.msra.mxu0 %v1079
    %1173 = vmatmul.bf16.gmra.mxu0 %v933
    %v1174 = vpop.f32.mrf.mxu0
    %v1175 = vadd.f32 %v1162, %v1174
    %v1176 = vpop.f32.mrf.mxu0
    %1177 = vdwg.mxu0
    %v1178 = vadd.f32 %v930, %v1149
    %v1179 = vadd.f32 %v931, %v1175
    %v1180 = vtanh.pop %v1178
    %v1181 = vtanh.pop %v1179
    %s1182 = smul.addr %s927, 8
    %s1183 = scalar_lea.vmem [#allocation3], %s1182
    %1184 = vst [vmem:[%s1183] sm:$0xff] %v1180
    %1185 = vst [vmem:[%s1183 + $0x8] sm:$0xff] %v1181
    %s1186 = smul.u32 2, 2
    %s1187 = smul.addr %s1186, 8
    %s1188 = scalar_lea.vmem [#allocation2], %s1187
    %v1189 = vld [vmem:[%s1188] sm:$0xff]
    %v1190 = vld [vmem:[%s1188 + $0x8] sm:$0xff]
    %v1191 = vpack.c.bf16 %v1180, %v1180
    %v1192 = vpack.c.bf16 %v1181, %v1181
    %v1193 = vld [vmem:[#allocation10] sm:$0xff]
    %v1194 = vld [vmem:[#allocation10 + $0x8] sm:$0xff]
    %v1195 = vld [vmem:[#allocation10 + $0x10] sm:$0xff]
    %v1196 = vld [vmem:[#allocation10 + $0x18] sm:$0xff]
    %v1197 = vld [vmem:[#allocation10 + $0x20] sm:$0xff]
    %v1198 = vld [vmem:[#allocation10 + $0x28] sm:$0xff]
    %v1199 = vld [vmem:[#allocation10 + $0x30] sm:$0xff]
    %v1200 = vld [vmem:[#allocation10 + $0x38] sm:$0xff]
    %v1201 = vld [vmem:[#allocation10 + $0x40] sm:$0xff]
    %v1202 = vld [vmem:[#allocation10 + $0x48] sm:$0xff]
    %v1203 = vld [vmem:[#allocation10 + $0x50] sm:$0xff]
    %v1204 = vld [vmem:[#allocation10 + $0x58] sm:$0xff]
    %v1205 = vld [vmem:[#allocation10 + $0x60] sm:$0xff]
    %v1206 = vld [vmem:[#allocation10 + $0x68] sm:$0xff]
    %v1207 = vld [vmem:[#allocation10 + $0x70] sm:$0xff]
    %v1208 = vld [vmem:[#allocation10 + $0x78] sm:$0xff]
    %v1209 = vld [vmem:[#allocation10 + $0x80] sm:$0xff]
    %v1210 = vld [vmem:[#allocation10 + $0x88] sm:$0xff]
    %v1211 = vld [vmem:[#allocation10 + $0x90] sm:$0xff]
    %v1212 = vld [vmem:[#allocation10 + $0x98] sm:$0xff]
    %v1213 = vld [vmem:[#allocation10 + $0xa0] sm:$0xff]
    %v1214 = vld [vmem:[#allocation10 + $0xa8] sm:$0xff]
    %v1215 = vld [vmem:[#allocation10 + $0xb0] sm:$0xff]
    %v1216 = vld [vmem:[#allocation10 + $0xb8] sm:$0xff]
    %v1217 = vld [vmem:[#allocation10 + $0xc0] sm:$0xff]
    %v1218 = vld [vmem:[#allocation10 + $0xc8] sm:$0xff]
    %v1219 = vld [vmem:[#allocation10 + $0xd0] sm:$0xff]
    %v1220 = vld [vmem:[#allocation10 + $0xd8] sm:$0xff]
    %v1221 = vld [vmem:[#allocation10 + $0xe0] sm:$0xff]
    %v1222 = vld [vmem:[#allocation10 + $0xe8] sm:$0xff]
    %v1223 = vld [vmem:[#allocation10 + $0xf0] sm:$0xff]
    %v1224 = vld [vmem:[#allocation10 + $0xf8] sm:$0xff]
    %v1257 = vunpack.c.l.b16 %v1193
    %v1258 = vunpack.c.h.b16 %v1193
    %v1259 = vunpack.c.l.b16 %v1194
    %v1260 = vunpack.c.h.b16 %v1194
    %v1261 = vunpack.c.l.b16 %v1195
    %v1262 = vunpack.c.h.b16 %v1195
    %v1263 = vunpack.c.l.b16 %v1196
    %v1264 = vunpack.c.h.b16 %v1196
    %v1265 = vunpack.c.l.b16 %v1197
    %v1266 = vunpack.c.h.b16 %v1197
    %v1267 = vunpack.c.l.b16 %v1198
    %v1268 = vunpack.c.h.b16 %v1198
    %v1269 = vunpack.c.l.b16 %v1199
    %v1270 = vunpack.c.h.b16 %v1199
    %v1271 = vunpack.c.l.b16 %v1200
    %v1272 = vunpack.c.h.b16 %v1200
    %v1273 = vunpack.c.l.b16 %v1201
    %v1274 = vunpack.c.h.b16 %v1201
    %v1275 = vunpack.c.l.b16 %v1202
    %v1276 = vunpack.c.h.b16 %v1202
    %v1277 = vunpack.c.l.b16 %v1203
    %v1278 = vunpack.c.h.b16 %v1203
    %v1279 = vunpack.c.l.b16 %v1204
    %v1280 = vunpack.c.h.b16 %v1204
    %v1281 = vunpack.c.l.b16 %v1205
    %v1282 = vunpack.c.h.b16 %v1205
    %v1283 = vunpack.c.l.b16 %v1206
    %v1284 = vunpack.c.h.b16 %v1206
    %v1285 = vunpack.c.l.b16 %v1207
    %v1286 = vunpack.c.h.b16 %v1207
    %v1287 = vunpack.c.l.b16 %v1208
    %v1288 = vunpack.c.h.b16 %v1208
    %v1289 = vunpack.c.l.b16 %v1209
    %v1290 = vunpack.c.h.b16 %v1209
    %v1291 = vunpack.c.l.b16 %v1210
    %v1292 = vunpack.c.h.b16 %v1210
    %v1293 = vunpack.c.l.b16 %v1211
    %v1294 = vunpack.c.h.b16 %v1211
    %v1295 = vunpack.c.l.b16 %v1212
    %v1296 = vunpack.c.h.b16 %v1212
    %v1297 = vunpack.c.l.b16 %v1213
    %v1298 = vunpack.c.h.b16 %v1213
    %v1299 = vunpack.c.l.b16 %v1214
    %v1300 = vunpack.c.h.b16 %v1214
    %v1301 = vunpack.c.l.b16 %v1215
    %v1302 = vunpack.c.h.b16 %v1215
    %v1303 = vunpack.c.l.b16 %v1216
    %v1304 = vunpack.c.h.b16 %v1216
    %v1305 = vunpack.c.l.b16 %v1217
    %v1306 = vunpack.c.h.b16 %v1217
    %v1307 = vunpack.c.l.b16 %v1218
    %v1308 = vunpack.c.h.b16 %v1218
    %v1309 = vunpack.c.l.b16 %v1219
    %v1310 = vunpack.c.h.b16 %v1219
    %v1311 = vunpack.c.l.b16 %v1220
    %v1312 = vunpack.c.h.b16 %v1220
    %v1313 = vunpack.c.l.b16 %v1221
    %v1314 = vunpack.c.h.b16 %v1221
    %v1315 = vunpack.c.l.b16 %v1222
    %v1316 = vunpack.c.h.b16 %v1222
    %v1317 = vunpack.c.l.b16 %v1223
    %v1318 = vunpack.c.h.b16 %v1223
    %v1319 = vunpack.c.l.b16 %v1224
    %v1320 = vunpack.c.h.b16 %v1224
    %v1321 = vpack.c.b16 %v1259, %v1257
    %v1322 = vpack.c.b16 %v1260, %v1258
    %v1323 = vpack.c.b16 %v1263, %v1261
    %v1324 = vpack.c.b16 %v1264, %v1262
    %v1325 = vpack.c.b16 %v1267, %v1265
    %v1326 = vpack.c.b16 %v1268, %v1266
    %v1327 = vpack.c.b16 %v1271, %v1269
    %v1328 = vpack.c.b16 %v1272, %v1270
    %v1329 = vpack.c.b16 %v1275, %v1273
    %v1330 = vpack.c.b16 %v1276, %v1274
    %v1331 = vpack.c.b16 %v1279, %v1277
    %v1332 = vpack.c.b16 %v1280, %v1278
    %v1333 = vpack.c.b16 %v1283, %v1281
    %v1334 = vpack.c.b16 %v1284, %v1282
    %v1335 = vpack.c.b16 %v1287, %v1285
    %v1336 = vpack.c.b16 %v1288, %v1286
    %v1337 = vpack.c.b16 %v1291, %v1289
    %v1338 = vpack.c.b16 %v1292, %v1290
    %v1339 = vpack.c.b16 %v1295, %v1293
    %v1340 = vpack.c.b16 %v1296, %v1294
    %v1341 = vpack.c.b16 %v1299, %v1297
    %v1342 = vpack.c.b16 %v1300, %v1298
    %v1343 = vpack.c.b16 %v1303, %v1301
    %v1344 = vpack.c.b16 %v1304, %v1302
    %v1345 = vpack.c.b16 %v1307, %v1305
    %v1346 = vpack.c.b16 %v1308, %v1306
    %v1347 = vpack.c.b16 %v1311, %v1309
    %v1348 = vpack.c.b16 %v1312, %v1310
    %v1349 = vpack.c.b16 %v1315, %v1313
    %v1350 = vpack.c.b16 %v1316, %v1314
    %v1351 = vpack.c.b16 %v1319, %v1317
    %v1352 = vpack.c.b16 %v1320, %v1318
    %1385 = vmatpush.bf16.msra.mxu0 %v1335
    %1386 = vmatpush.bf16.msra.mxu0 %v1333
    %1387 = vmatpush.bf16.msra.mxu0 %v1331
    %1388 = vmatpush.bf16.msra.mxu0 %v1329
    %1389 = vmatpush.bf16.msra.mxu0 %v1327
    %1390 = vmatpush.bf16.msra.mxu0 %v1325
    %1391 = vmatpush.bf16.msra.mxu0 %v1323
    %1392 = vmatpush.bf16.msra.mxu0 %v1321
    %1393 = vmatmul.bf16.gmra.mxu0 %v1191
    %v1394 = vpop.f32.mrf.mxu0
    %v1395 = vadd.f32 0.0, %v1394
    %v1396 = vpop.f32.mrf.mxu0
    %1397 = vdwg.mxu0
    %1398 = vmatpush.bf16.msra.mxu0 %v1351
    %1399 = vmatpush.bf16.msra.mxu0 %v1349
    %1400 = vmatpush.bf16.msra.mxu0 %v1347
    %1401 = vmatpush.bf16.msra.mxu0 %v1345
    %1402 = vmatpush.bf16.msra.mxu0 %v1343
    %1403 = vmatpush.bf16.msra.mxu0 %v1341
    %1404 = vmatpush.bf16.msra.mxu0 %v1339
    %1405 = vmatpush.bf16.msra.mxu0 %v1337
    %1406 = vmatmul.bf16.gmra.mxu0 %v1192
    %v1407 = vpop.f32.mrf.mxu0
    %v1408 = vadd.f32 %v1395, %v1407
    %v1409 = vpop.f32.mrf.mxu0
    %1410 = vdwg.mxu0
    %1411 = vmatpush.bf16.msra.mxu0 %v1336
    %1412 = vmatpush.bf16.msra.mxu0 %v1334
    %1413 = vmatpush.bf16.msra.mxu0 %v1332
    %1414 = vmatpush.bf16.msra.mxu0 %v1330
    %1415 = vmatpush.bf16.msra.mxu0 %v1328
    %1416 = vmatpush.bf16.msra.mxu0 %v1326
    %1417 = vmatpush.bf16.msra.mxu0 %v1324
    %1418 = vmatpush.bf16.msra.mxu0 %v1322
    %1419 = vmatmul.bf16.gmra.mxu0 %v1191
    %v1420 = vpop.f32.mrf.mxu0
    %v1421 = vadd.f32 0.0, %v1420
    %v1422 = vpop.f32.mrf.mxu0
    %1423 = vdwg.mxu0
    %1424 = vmatpush.bf16.msra.mxu0 %v1352
    %1425 = vmatpush.bf16.msra.mxu0 %v1350
    %1426 = vmatpush.bf16.msra.mxu0 %v1348
    %1427 = vmatpush.bf16.msra.mxu0 %v1346
    %1428 = vmatpush.bf16.msra.mxu0 %v1344
    %1429 = vmatpush.bf16.msra.mxu0 %v1342
    %1430 = vmatpush.bf16.msra.mxu0 %v1340
    %1431 = vmatpush.bf16.msra.mxu0 %v1338
    %1432 = vmatmul.bf16.gmra.mxu0 %v1192
    %v1433 = vpop.f32.mrf.mxu0
    %v1434 = vadd.f32 %v1421, %v1433
    %v1435 = vpop.f32.mrf.mxu0
    %1436 = vdwg.mxu0
    %v1437 = vadd.f32 %v1189, %v1408
    %v1438 = vadd.f32 %v1190, %v1434
    %v1439 = vtanh.pop %v1437
    %v1440 = vtanh.pop %v1438
    %s1441 = smul.addr %s1186, 8
    %s1442 = scalar_lea.vmem [#allocation3], %s1441
    %1443 = vst [vmem:[%s1442] sm:$0xff] %v1439
    %1444 = vst [vmem:[%s1442 + $0x8] sm:$0xff] %v1440
    %s1445 = smul.u32 3, 2
    %s1446 = smul.addr %s1445, 8
    %s1447 = scalar_lea.vmem [#allocation2], %s1446
    %v1448 = vld [vmem:[%s1447] sm:$0xff]
    %v1449 = vld [vmem:[%s1447 + $0x8] sm:$0xff]
    %v1450 = vpack.c.bf16 %v1439, %v1439
    %v1451 = vpack.c.bf16 %v1440, %v1440
    %v1452 = vld [vmem:[#allocation10] sm:$0xff]
    %v1453 = vld [vmem:[#allocation10 + $0x8] sm:$0xff]
    %v1454 = vld [vmem:[#allocation10 + $0x10] sm:$0xff]
    %v1455 = vld [vmem:[#allocation10 + $0x18] sm:$0xff]
    %v1456 = vld [vmem:[#allocation10 + $0x20] sm:$0xff]
    %v1457 = vld [vmem:[#allocation10 + $0x28] sm:$0xff]
    %v1458 = vld [vmem:[#allocation10 + $0x30] sm:$0xff]
    %v1459 = vld [vmem:[#allocation10 + $0x38] sm:$0xff]
    %v1460 = vld [vmem:[#allocation10 + $0x40] sm:$0xff]
    %v1461 = vld [vmem:[#allocation10 + $0x48] sm:$0xff]
    %v1462 = vld [vmem:[#allocation10 + $0x50] sm:$0xff]
    %v1463 = vld [vmem:[#allocation10 + $0x58] sm:$0xff]
    %v1464 = vld [vmem:[#allocation10 + $0x60] sm:$0xff]
    %v1465 = vld [vmem:[#allocation10 + $0x68] sm:$0xff]
    %v1466 = vld [vmem:[#allocation10 + $0x70] sm:$0xff]
    %v1467 = vld [vmem:[#allocation10 + $0x78] sm:$0xff]
    %v1468 = vld [vmem:[#allocation10 + $0x80] sm:$0xff]
    %v1469 = vld [vmem:[#allocation10 + $0x88] sm:$0xff]
    %v1470 = vld [vmem:[#allocation10 + $0x90] sm:$0xff]
    %v1471 = vld [vmem:[#allocation10 + $0x98] sm:$0xff]
    %v1472 = vld [vmem:[#allocation10 + $0xa0] sm:$0xff]
    %v1473 = vld [vmem:[#allocation10 + $0xa8] sm:$0xff]
    %v1474 = vld [vmem:[#allocation10 + $0xb0] sm:$0xff]
    %v1475 = vld [vmem:[#allocation10 + $0xb8] sm:$0xff]
    %v1476 = vld [vmem:[#allocation10 + $0xc0] sm:$0xff]
    %v1477 = vld [vmem:[#allocation10 + $0xc8] sm:$0xff]
    %v1478 = vld [vmem:[#allocation10 + $0xd0] sm:$0xff]
    %v1479 = vld [vmem:[#allocation10 + $0xd8] sm:$0xff]
    %v1480 = vld [vmem:[#allocation10 + $0xe0] sm:$0xff]
    %v1481 = vld [vmem:[#allocation10 + $0xe8] sm:$0xff]
    %v1482 = vld [vmem:[#allocation10 + $0xf0] sm:$0xff]
    %v1483 = vld [vmem:[#allocation10 + $0xf8] sm:$0xff]
    %v1516 = vunpack.c.l.b16 %v1452
    %v1517 = vunpack.c.h.b16 %v1452
    %v1518 = vunpack.c.l.b16 %v1453
    %v1519 = vunpack.c.h.b16 %v1453
    %v1520 = vunpack.c.l.b16 %v1454
    %v1521 = vunpack.c.h.b16 %v1454
    %v1522 = vunpack.c.l.b16 %v1455
    %v1523 = vunpack.c.h.b16 %v1455
    %v1524 = vunpack.c.l.b16 %v1456
    %v1525 = vunpack.c.h.b16 %v1456
    %v1526 = vunpack.c.l.b16 %v1457
    %v1527 = vunpack.c.h.b16 %v1457
    %v1528 = vunpack.c.l.b16 %v1458
    %v1529 = vunpack.c.h.b16 %v1458
    %v1530 = vunpack.c.l.b16 %v1459
    %v1531 = vunpack.c.h.b16 %v1459
    %v1532 = vunpack.c.l.b16 %v1460
    %v1533 = vunpack.c.h.b16 %v1460
    %v1534 = vunpack.c.l.b16 %v1461
    %v1535 = vunpack.c.h.b16 %v1461
    %v1536 = vunpack.c.l.b16 %v1462
    %v1537 = vunpack.c.h.b16 %v1462
    %v1538 = vunpack.c.l.b16 %v1463
    %v1539 = vunpack.c.h.b16 %v1463
    %v1540 = vunpack.c.l.b16 %v1464
    %v1541 = vunpack.c.h.b16 %v1464
    %v1542 = vunpack.c.l.b16 %v1465
    %v1543 = vunpack.c.h.b16 %v1465
    %v1544 = vunpack.c.l.b16 %v1466
    %v1545 = vunpack.c.h.b16 %v1466
    %v1546 = vunpack.c.l.b16 %v1467
    %v1547 = vunpack.c.h.b16 %v1467
    %v1548 = vunpack.c.l.b16 %v1468
    %v1549 = vunpack.c.h.b16 %v1468
    %v1550 = vunpack.c.l.b16 %v1469
    %v1551 = vunpack.c.h.b16 %v1469
    %v1552 = vunpack.c.l.b16 %v1470
    %v1553 = vunpack.c.h.b16 %v1470
    %v1554 = vunpack.c.l.b16 %v1471
    %v1555 = vunpack.c.h.b16 %v1471
    %v1556 = vunpack.c.l.b16 %v1472
    %v1557 = vunpack.c.h.b16 %v1472
    %v1558 = vunpack.c.l.b16 %v1473
    %v1559 = vunpack.c.h.b16 %v1473
    %v1560 = vunpack.c.l.b16 %v1474
    %v1561 = vunpack.c.h.b16 %v1474
    %v1562 = vunpack.c.l.b16 %v1475
    %v1563 = vunpack.c.h.b16 %v1475
    %v1564 = vunpack.c.l.b16 %v1476
    %v1565 = vunpack.c.h.b16 %v1476
    %v1566 = vunpack.c.l.b16 %v1477
    %v1567 = vunpack.c.h.b16 %v1477
    %v1568 = vunpack.c.l.b16 %v1478
    %v1569 = vunpack.c.h.b16 %v1478
    %v1570 = vunpack.c.l.b16 %v1479
    %v1571 = vunpack.c.h.b16 %v1479
    %v1572 = vunpack.c.l.b16 %v1480
    %v1573 = vunpack.c.h.b16 %v1480
    %v1574 = vunpack.c.l.b16 %v1481
    %v1575 = vunpack.c.h.b16 %v1481
    %v1576 = vunpack.c.l.b16 %v1482
    %v1577 = vunpack.c.h.b16 %v1482
    %v1578 = vunpack.c.l.b16 %v1483
    %v1579 = vunpack.c.h.b16 %v1483
    %v1580 = vpack.c.b16 %v1518, %v1516
    %v1581 = vpack.c.b16 %v1519, %v1517
    %v1582 = vpack.c.b16 %v1522, %v1520
    %v1583 = vpack.c.b16 %v1523, %v1521
    %v1584 = vpack.c.b16 %v1526, %v1524
    %v1585 = vpack.c.b16 %v1527, %v1525
    %v1586 = vpack.c.b16 %v1530, %v1528
    %v1587 = vpack.c.b16 %v1531, %v1529
    %v1588 = vpack.c.b16 %v1534, %v1532
    %v1589 = vpack.c.b16 %v1535, %v1533
    %v1590 = vpack.c.b16 %v1538, %v1536
    %v1591 = vpack.c.b16 %v1539, %v1537
    %v1592 = vpack.c.b16 %v1542, %v1540
    %v1593 = vpack.c.b16 %v1543, %v1541
    %v1594 = vpack.c.b16 %v1546, %v1544
    %v1595 = vpack.c.b16 %v1547, %v1545
    %v1596 = vpack.c.b16 %v1550, %v1548
    %v1597 = vpack.c.b16 %v1551, %v1549
    %v1598 = vpack.c.b16 %v1554, %v1552
    %v1599 = vpack.c.b16 %v1555, %v1553
    %v1600 = vpack.c.b16 %v1558, %v1556
    %v1601 = vpack.c.b16 %v1559, %v1557
    %v1602 = vpack.c.b16 %v1562, %v1560
    %v1603 = vpack.c.b16 %v1563, %v1561
    %v1604 = vpack.c.b16 %v1566, %v1564
    %v1605 = vpack.c.b16 %v1567, %v1565
    %v1606 = vpack.c.b16 %v1570, %v1568
    %v1607 = vpack.c.b16 %v1571, %v1569
    %v1608 = vpack.c.b16 %v1574, %v1572
    %v1609 = vpack.c.b16 %v1575, %v1573
    %v1610 = vpack.c.b16 %v1578, %v1576
    %v1611 = vpack.c.b16 %v1579, %v1577
    %1644 = vmatpush.bf16.msra.mxu0 %v1594
    %1645 = vmatpush.bf16.msra.mxu0 %v1592
    %1646 = vmatpush.bf16.msra.mxu0 %v1590
    %1647 = vmatpush.bf16.msra.mxu0 %v1588
    %1648 = vmatpush.bf16.msra.mxu0 %v1586
    %1649 = vmatpush.bf16.msra.mxu0 %v1584
    %1650 = vmatpush.bf16.msra.mxu0 %v1582
    %1651 = vmatpush.bf16.msra.mxu0 %v1580
    %1652 = vmatmul.bf16.gmra.mxu0 %v1450
    %v1653 = vpop.f32.mrf.mxu0
    %v1654 = vadd.f32 0.0, %v1653
    %v1655 = vpop.f32.mrf.mxu0
    %1656 = vdwg.mxu0
    %1657 = vmatpush.bf16.msra.mxu0 %v1610
    %1658 = vmatpush.bf16.msra.mxu0 %v1608
    %1659 = vmatpush.bf16.msra.mxu0 %v1606
    %1660 = vmatpush.bf16.msra.mxu0 %v1604
    %1661 = vmatpush.bf16.msra.mxu0 %v1602
    %1662 = vmatpush.bf16.msra.mxu0 %v1600
    %1663 = vmatpush.bf16.msra.mxu0 %v1598
    %1664 = vmatpush.bf16.msra.mxu0 %v1596
    %1665 = vmatmul.bf16.gmra.mxu0 %v1451
    %v1666 = vpop.f32.mrf.mxu0
    %v1667 = vadd.f32 %v1654, %v1666
    %v1668 = vpop.f32.mrf.mxu0
    %1669 = vdwg.mxu0
    %1670 = vmatpush.bf16.msra.mxu0 %v1595
    %1671 = vmatpush.bf16.msra.mxu0 %v1593
    %1672 = vmatpush.bf16.msra.mxu0 %v1591
    %1673 = vmatpush.bf16.msra.mxu0 %v1589
    %1674 = vmatpush.bf16.msra.mxu0 %v1587
    %1675 = vmatpush.bf16.msra.mxu0 %v1585
    %1676 = vmatpush.bf16.msra.mxu0 %v1583
    %1677 = vmatpush.bf16.msra.mxu0 %v1581
    %1678 = vmatmul.bf16.gmra.mxu0 %v1450
    %v1679 = vpop.f32.mrf.mxu0
    %v1680 = vadd.f32 0.0, %v1679
    %v1681 = vpop.f32.mrf.mxu0
    %1682 = vdwg.mxu0
    %1683 = vmatpush.bf16.msra.mxu0 %v1611
    %1684 = vmatpush.bf16.msra.mxu0 %v1609
    %1685 = vmatpush.bf16.msra.mxu0 %v1607
    %1686 = vmatpush.bf16.msra.mxu0 %v1605
    %1687 = vmatpush.bf16.msra.mxu0 %v1603
    %1688 = vmatpush.bf16.msra.mxu0 %v1601
    %1689 = vmatpush.bf16.msra.mxu0 %v1599
    %1690 = vmatpush.bf16.msra.mxu0 %v1597
    %1691 = vmatmul.bf16.gmra.mxu0 %v1451
    %v1692 = vpop.f32.mrf.mxu0
    %v1693 = vadd.f32 %v1680, %v1692
    %v1694 = vpop.f32.mrf.mxu0
    %1695 = vdwg.mxu0
    %v1696 = vadd.f32 %v1448, %v1667
    %v1697 = vadd.f32 %v1449, %v1693
    %v1698 = vtanh.pop %v1696
    %v1699 = vtanh.pop %v1697
    %s1700 = smul.addr %s1445, 8
    %s1701 = scalar_lea.vmem [#allocation3], %s1700
    %1702 = vst [vmem:[%s1701] sm:$0xff] %v1698
    %1703 = vst [vmem:[%s1701 + $0x8] sm:$0xff] %v1699
    %s1704 = smul.u32 4, 2
    %s1705 = smul.addr %s1704, 8
    %s1706 = scalar_lea.vmem [#allocation2], %s1705
    %v1707 = vld [vmem:[%s1706] sm:$0xff]
    %v1708 = vld [vmem:[%s1706 + $0x8] sm:$0xff]
    %v1709 = vpack.c.bf16 %v1698, %v1698
    %v1710 = vpack.c.bf16 %v1699, %v1699
    %v1711 = vld [vmem:[#allocation10] sm:$0xff]
    %v1712 = vld [vmem:[#allocation10 + $0x8] sm:$0xff]
    %v1713 = vld [vmem:[#allocation10 + $0x10] sm:$0xff]
    %v1714 = vld [vmem:[#allocation10 + $0x18] sm:$0xff]
    %v1715 = vld [vmem:[#allocation10 + $0x20] sm:$0xff]
    %v1716 = vld [vmem:[#allocation10 + $0x28] sm:$0xff]
    %v1717 = vld [vmem:[#allocation10 + $0x30] sm:$0xff]
    %v1718 = vld [vmem:[#allocation10 + $0x38] sm:$0xff]
    %v1719 = vld [vmem:[#allocation10 + $0x40] sm:$0xff]
    %v1720 = vld [vmem:[#allocation10 + $0x48] sm:$0xff]
    %v1721 = vld [vmem:[#allocation10 + $0x50] sm:$0xff]
    %v1722 = vld [vmem:[#allocation10 + $0x58] sm:$0xff]
    %v1723 = vld [vmem:[#allocation10 + $0x60] sm:$0xff]
    %v1724 = vld [vmem:[#allocation10 + $0x68] sm:$0xff]
    %v1725 = vld [vmem:[#allocation10 + $0x70] sm:$0xff]
    %v1726 = vld [vmem:[#allocation10 + $0x78] sm:$0xff]
    %v1727 = vld [vmem:[#allocation10 + $0x80] sm:$0xff]
    %v1728 = vld [vmem:[#allocation10 + $0x88] sm:$0xff]
    %v1729 = vld [vmem:[#allocation10 + $0x90] sm:$0xff]
    %v1730 = vld [vmem:[#allocation10 + $0x98] sm:$0xff]
    %v1731 = vld [vmem:[#allocation10 + $0xa0] sm:$0xff]
    %v1732 = vld [vmem:[#allocation10 + $0xa8] sm:$0xff]
    %v1733 = vld [vmem:[#allocation10 + $0xb0] sm:$0xff]
    %v1734 = vld [vmem:[#allocation10 + $0xb8] sm:$0xff]
    %v1735 = vld [vmem:[#allocation10 + $0xc0] sm:$0xff]
    %v1736 = vld [vmem:[#allocation10 + $0xc8] sm:$0xff]
    %v1737 = vld [vmem:[#allocation10 + $0xd0] sm:$0xff]
    %v1738 = vld [vmem:[#allocation10 + $0xd8] sm:$0xff]
    %v1739 = vld [vmem:[#allocation10 + $0xe0] sm:$0xff]
    %v1740 = vld [vmem:[#allocation10 + $0xe8] sm:$0xff]
    %v1741 = vld [vmem:[#allocation10 + $0xf0] sm:$0xff]
    %v1742 = vld [vmem:[#allocation10 + $0xf8] sm:$0xff]
    %v1775 = vunpack.c.l.b16 %v1711
    %v1776 = vunpack.c.h.b16 %v1711
    %v1777 = vunpack.c.l.b16 %v1712
    %v1778 = vunpack.c.h.b16 %v1712
    %v1779 = vunpack.c.l.b16 %v1713
    %v1780 = vunpack.c.h.b16 %v1713
    %v1781 = vunpack.c.l.b16 %v1714
    %v1782 = vunpack.c.h.b16 %v1714
    %v1783 = vunpack.c.l.b16 %v1715
    %v1784 = vunpack.c.h.b16 %v1715
    %v1785 = vunpack.c.l.b16 %v1716
    %v1786 = vunpack.c.h.b16 %v1716
    %v1787 = vunpack.c.l.b16 %v1717
    %v1788 = vunpack.c.h.b16 %v1717
    %v1789 = vunpack.c.l.b16 %v1718
    %v1790 = vunpack.c.h.b16 %v1718
    %v1791 = vunpack.c.l.b16 %v1719
    %v1792 = vunpack.c.h.b16 %v1719
    %v1793 = vunpack.c.l.b16 %v1720
    %v1794 = vunpack.c.h.b16 %v1720
    %v1795 = vunpack.c.l.b16 %v1721
    %v1796 = vunpack.c.h.b16 %v1721
    %v1797 = vunpack.c.l.b16 %v1722
    %v1798 = vunpack.c.h.b16 %v1722
    %v1799 = vunpack.c.l.b16 %v1723
    %v1800 = vunpack.c.h.b16 %v1723
    %v1801 = vunpack.c.l.b16 %v1724
    %v1802 = vunpack.c.h.b16 %v1724
    %v1803 = vunpack.c.l.b16 %v1725
    %v1804 = vunpack.c.h.b16 %v1725
    %v1805 = vunpack.c.l.b16 %v1726
    %v1806 = vunpack.c.h.b16 %v1726
    %v1807 = vunpack.c.l.b16 %v1727
    %v1808 = vunpack.c.h.b16 %v1727
    %v1809 = vunpack.c.l.b16 %v1728
    %v1810 = vunpack.c.h.b16 %v1728
    %v1811 = vunpack.c.l.b16 %v1729
    %v1812 = vunpack.c.h.b16 %v1729
    %v1813 = vunpack.c.l.b16 %v1730
    %v1814 = vunpack.c.h.b16 %v1730
    %v1815 = vunpack.c.l.b16 %v1731
    %v1816 = vunpack.c.h.b16 %v1731
    %v1817 = vunpack.c.l.b16 %v1732
    %v1818 = vunpack.c.h.b16 %v1732
    %v1819 = vunpack.c.l.b16 %v1733
    %v1820 = vunpack.c.h.b16 %v1733
    %v1821 = vunpack.c.l.b16 %v1734
    %v1822 = vunpack.c.h.b16 %v1734
    %v1823 = vunpack.c.l.b16 %v1735
    %v1824 = vunpack.c.h.b16 %v1735
    %v1825 = vunpack.c.l.b16 %v1736
    %v1826 = vunpack.c.h.b16 %v1736
    %v1827 = vunpack.c.l.b16 %v1737
    %v1828 = vunpack.c.h.b16 %v1737
    %v1829 = vunpack.c.l.b16 %v1738
    %v1830 = vunpack.c.h.b16 %v1738
    %v1831 = vunpack.c.l.b16 %v1739
    %v1832 = vunpack.c.h.b16 %v1739
    %v1833 = vunpack.c.l.b16 %v1740
    %v1834 = vunpack.c.h.b16 %v1740
    %v1835 = vunpack.c.l.b16 %v1741
    %v1836 = vunpack.c.h.b16 %v1741
    %v1837 = vunpack.c.l.b16 %v1742
    %v1838 = vunpack.c.h.b16 %v1742
    %v1839 = vpack.c.b16 %v1777, %v1775
    %v1840 = vpack.c.b16 %v1778, %v1776
    %v1841 = vpack.c.b16 %v1781, %v1779
    %v1842 = vpack.c.b16 %v1782, %v1780
    %v1843 = vpack.c.b16 %v1785, %v1783
    %v1844 = vpack.c.b16 %v1786, %v1784
    %v1845 = vpack.c.b16 %v1789, %v1787
    %v1846 = vpack.c.b16 %v1790, %v1788
    %v1847 = vpack.c.b16 %v1793, %v1791
    %v1848 = vpack.c.b16 %v1794, %v1792
    %v1849 = vpack.c.b16 %v1797, %v1795
    %v1850 = vpack.c.b16 %v1798, %v1796
    %v1851 = vpack.c.b16 %v1801, %v1799
    %v1852 = vpack.c.b16 %v1802, %v1800
    %v1853 = vpack.c.b16 %v1805, %v1803
    %v1854 = vpack.c.b16 %v1806, %v1804
    %v1855 = vpack.c.b16 %v1809, %v1807
    %v1856 = vpack.c.b16 %v1810, %v1808
    %v1857 = vpack.c.b16 %v1813, %v1811
    %v1858 = vpack.c.b16 %v1814, %v1812
    %v1859 = vpack.c.b16 %v1817, %v1815
    %v1860 = vpack.c.b16 %v1818, %v1816
    %v1861 = vpack.c.b16 %v1821, %v1819
    %v1862 = vpack.c.b16 %v1822, %v1820
    %v1863 = vpack.c.b16 %v1825, %v1823
    %v1864 = vpack.c.b16 %v1826, %v1824
    %v1865 = vpack.c.b16 %v1829, %v1827
    %v1866 = vpack.c.b16 %v1830, %v1828
    %v1867 = vpack.c.b16 %v1833, %v1831
    %v1868 = vpack.c.b16 %v1834, %v1832
    %v1869 = vpack.c.b16 %v1837, %v1835
    %v1870 = vpack.c.b16 %v1838, %v1836
    %1903 = vmatpush.bf16.msra.mxu0 %v1853
    %1904 = vmatpush.bf16.msra.mxu0 %v1851
    %1905 = vmatpush.bf16.msra.mxu0 %v1849
    %1906 = vmatpush.bf16.msra.mxu0 %v1847
    %1907 = vmatpush.bf16.msra.mxu0 %v1845
    %1908 = vmatpush.bf16.msra.mxu0 %v1843
    %1909 = vmatpush.bf16.msra.mxu0 %v1841
    %1910 = vmatpush.bf16.msra.mxu0 %v1839
    %1911 = vmatmul.bf16.gmra.mxu0 %v1709
    %v1912 = vpop.f32.mrf.mxu0
    %v1913 = vadd.f32 0.0, %v1912
    %v1914 = vpop.f32.mrf.mxu0
    %1915 = vdwg.mxu0
    %1916 = vmatpush.bf16.msra.mxu0 %v1869
    %1917 = vmatpush.bf16.msra.mxu0 %v1867
    %1918 = vmatpush.bf16.msra.mxu0 %v1865
    %1919 = vmatpush.bf16.msra.mxu0 %v1863
    %1920 = vmatpush.bf16.msra.mxu0 %v1861
    %1921 = vmatpush.bf16.msra.mxu0 %v1859
    %1922 = vmatpush.bf16.msra.mxu0 %v1857
    %1923 = vmatpush.bf16.msra.mxu0 %v1855
    %1924 = vmatmul.bf16.gmra.mxu0 %v1710
    %v1925 = vpop.f32.mrf.mxu0
    %v1926 = vadd.f32 %v1913, %v1925
    %v1927 = vpop.f32.mrf.mxu0
    %1928 = vdwg.mxu0
    %1929 = vmatpush.bf16.msra.mxu0 %v1854
    %1930 = vmatpush.bf16.msra.mxu0 %v1852
    %1931 = vmatpush.bf16.msra.mxu0 %v1850
    %1932 = vmatpush.bf16.msra.mxu0 %v1848
    %1933 = vmatpush.bf16.msra.mxu0 %v1846
    %1934 = vmatpush.bf16.msra.mxu0 %v1844
    %1935 = vmatpush.bf16.msra.mxu0 %v1842
    %1936 = vmatpush.bf16.msra.mxu0 %v1840
    %1937 = vmatmul.bf16.gmra.mxu0 %v1709
    %v1938 = vpop.f32.mrf.mxu0
    %v1939 = vadd.f32 0.0, %v1938
    %v1940 = vpop.f32.mrf.mxu0
    %1941 = vdwg.mxu0
    %1942 = vmatpush.bf16.msra.mxu0 %v1870
    %1943 = vmatpush.bf16.msra.mxu0 %v1868
    %1944 = vmatpush.bf16.msra.mxu0 %v1866
    %1945 = vmatpush.bf16.msra.mxu0 %v1864
    %1946 = vmatpush.bf16.msra.mxu0 %v1862
    %1947 = vmatpush.bf16.msra.mxu0 %v1860
    %1948 = vmatpush.bf16.msra.mxu0 %v1858
    %1949 = vmatpush.bf16.msra.mxu0 %v1856
    %1950 = vmatmul.bf16.gmra.mxu0 %v1710
    %v1951 = vpop.f32.mrf.mxu0
    %v1952 = vadd.f32 %v1939, %v1951
    %v1953 = vpop.f32.mrf.mxu0
    %1954 = vdwg.mxu0
    %v1955 = vadd.f32 %v1707, %v1926
    %v1956 = vadd.f32 %v1708, %v1952
    %v1957 = vtanh.pop %v1955
    %v1958 = vtanh.pop %v1956
    %s1959 = smul.addr %s1704, 8
    %s1960 = scalar_lea.vmem [#allocation3], %s1959
    %1961 = vst [vmem:[%s1960] sm:$0xff] %v1957
    %1962 = vst [vmem:[%s1960 + $0x8] sm:$0xff] %v1958
    %s1963 = smul.u32 5, 2
    %s1964 = smul.addr %s1963, 8
    %s1965 = scalar_lea.vmem [#allocation2], %s1964
    %v1966 = vld [vmem:[%s1965] sm:$0xff]
    %v1967 = vld [vmem:[%s1965 + $0x8] sm:$0xff]
    %v1968 = vpack.c.bf16 %v1957, %v1957
    %v1969 = vpack.c.bf16 %v1958, %v1958
    %v1970 = vld [vmem:[#allocation10] sm:$0xff]
    %v1971 = vld [vmem:[#allocation10 + $0x8] sm:$0xff]
    %v1972 = vld [vmem:[#allocation10 + $0x10] sm:$0xff]
    %v1973 = vld [vmem:[#allocation10 + $0x18] sm:$0xff]
    %v1974 = vld [vmem:[#allocation10 + $0x20] sm:$0xff]
    %v1975 = vld [vmem:[#allocation10 + $0x28] sm:$0xff]
    %v1976 = vld [vmem:[#allocation10 + $0x30] sm:$0xff]
    %v1977 = vld [vmem:[#allocation10 + $0x38] sm:$0xff]
    %v1978 = vld [vmem:[#allocation10 + $0x40] sm:$0xff]
    %v1979 = vld [vmem:[#allocation10 + $0x48] sm:$0xff]
    %v1980 = vld [vmem:[#allocation10 + $0x50] sm:$0xff]
    %v1981 = vld [vmem:[#allocation10 + $0x58] sm:$0xff]
    %v1982 = vld [vmem:[#allocation10 + $0x60] sm:$0xff]
    %v1983 = vld [vmem:[#allocation10 + $0x68] sm:$0xff]
    %v1984 = vld [vmem:[#allocation10 + $0x70] sm:$0xff]
    %v1985 = vld [vmem:[#allocation10 + $0x78] sm:$0xff]
    %v1986 = vld [vmem:[#allocation10 + $0x80] sm:$0xff]
    %v1987 = vld [vmem:[#allocation10 + $0x88] sm:$0xff]
    %v1988 = vld [vmem:[#allocation10 + $0x90] sm:$0xff]
    %v1989 = vld [vmem:[#allocation10 + $0x98] sm:$0xff]
    %v1990 = vld [vmem:[#allocation10 + $0xa0] sm:$0xff]
    %v1991 = vld [vmem:[#allocation10 + $0xa8] sm:$0xff]
    %v1992 = vld [vmem:[#allocation10 + $0xb0] sm:$0xff]
    %v1993 = vld [vmem:[#allocation10 + $0xb8] sm:$0xff]
    %v1994 = vld [vmem:[#allocation10 + $0xc0] sm:$0xff]
    %v1995 = vld [vmem:[#allocation10 + $0xc8] sm:$0xff]
    %v1996 = vld [vmem:[#allocation10 + $0xd0] sm:$0xff]
    %v1997 = vld [vmem:[#allocation10 + $0xd8] sm:$0xff]
    %v1998 = vld [vmem:[#allocation10 + $0xe0] sm:$0xff]
    %v1999 = vld [vmem:[#allocation10 + $0xe8] sm:$0xff]
    %v2000 = vld [vmem:[#allocation10 + $0xf0] sm:$0xff]
    %v2001 = vld [vmem:[#allocation10 + $0xf8] sm:$0xff]
    %v2034 = vunpack.c.l.b16 %v1970
    %v2035 = vunpack.c.h.b16 %v1970
    %v2036 = vunpack.c.l.b16 %v1971
    %v2037 = vunpack.c.h.b16 %v1971
    %v2038 = vunpack.c.l.b16 %v1972
    %v2039 = vunpack.c.h.b16 %v1972
    %v2040 = vunpack.c.l.b16 %v1973
    %v2041 = vunpack.c.h.b16 %v1973
    %v2042 = vunpack.c.l.b16 %v1974
    %v2043 = vunpack.c.h.b16 %v1974
    %v2044 = vunpack.c.l.b16 %v1975
    %v2045 = vunpack.c.h.b16 %v1975
    %v2046 = vunpack.c.l.b16 %v1976
    %v2047 = vunpack.c.h.b16 %v1976
    %v2048 = vunpack.c.l.b16 %v1977
    %v2049 = vunpack.c.h.b16 %v1977
    %v2050 = vunpack.c.l.b16 %v1978
    %v2051 = vunpack.c.h.b16 %v1978
    %v2052 = vunpack.c.l.b16 %v1979
    %v2053 = vunpack.c.h.b16 %v1979
    %v2054 = vunpack.c.l.b16 %v1980
    %v2055 = vunpack.c.h.b16 %v1980
    %v2056 = vunpack.c.l.b16 %v1981
    %v2057 = vunpack.c.h.b16 %v1981
    %v2058 = vunpack.c.l.b16 %v1982
    %v2059 = vunpack.c.h.b16 %v1982
    %v2060 = vunpack.c.l.b16 %v1983
    %v2061 = vunpack.c.h.b16 %v1983
    %v2062 = vunpack.c.l.b16 %v1984
    %v2063 = vunpack.c.h.b16 %v1984
    %v2064 = vunpack.c.l.b16 %v1985
    %v2065 = vunpack.c.h.b16 %v1985
    %v2066 = vunpack.c.l.b16 %v1986
    %v2067 = vunpack.c.h.b16 %v1986
    %v2068 = vunpack.c.l.b16 %v1987
    %v2069 = vunpack.c.h.b16 %v1987
    %v2070 = vunpack.c.l.b16 %v1988
    %v2071 = vunpack.c.h.b16 %v1988
    %v2072 = vunpack.c.l.b16 %v1989
    %v2073 = vunpack.c.h.b16 %v1989
    %v2074 = vunpack.c.l.b16 %v1990
    %v2075 = vunpack.c.h.b16 %v1990
    %v2076 = vunpack.c.l.b16 %v1991
    %v2077 = vunpack.c.h.b16 %v1991
    %v2078 = vunpack.c.l.b16 %v1992
    %v2079 = vunpack.c.h.b16 %v1992
    %v2080 = vunpack.c.l.b16 %v1993
    %v2081 = vunpack.c.h.b16 %v1993
    %v2082 = vunpack.c.l.b16 %v1994
    %v2083 = vunpack.c.h.b16 %v1994
    %v2084 = vunpack.c.l.b16 %v1995
    %v2085 = vunpack.c.h.b16 %v1995
    %v2086 = vunpack.c.l.b16 %v1996
    %v2087 = vunpack.c.h.b16 %v1996
    %v2088 = vunpack.c.l.b16 %v1997
    %v2089 = vunpack.c.h.b16 %v1997
    %v2090 = vunpack.c.l.b16 %v1998
    %v2091 = vunpack.c.h.b16 %v1998
    %v2092 = vunpack.c.l.b16 %v1999
    %v2093 = vunpack.c.h.b16 %v1999
    %v2094 = vunpack.c.l.b16 %v2000
    %v2095 = vunpack.c.h.b16 %v2000
    %v2096 = vunpack.c.l.b16 %v2001
    %v2097 = vunpack.c.h.b16 %v2001
    %v2098 = vpack.c.b16 %v2036, %v2034
    %v2099 = vpack.c.b16 %v2037, %v2035
    %v2100 = vpack.c.b16 %v2040, %v2038
    %v2101 = vpack.c.b16 %v2041, %v2039
    %v2102 = vpack.c.b16 %v2044, %v2042
    %v2103 = vpack.c.b16 %v2045, %v2043
    %v2104 = vpack.c.b16 %v2048, %v2046
    %v2105 = vpack.c.b16 %v2049, %v2047
    %v2106 = vpack.c.b16 %v2052, %v2050
    %v2107 = vpack.c.b16 %v2053, %v2051
    %v2108 = vpack.c.b16 %v2056, %v2054
    %v2109 = vpack.c.b16 %v2057, %v2055
    %v2110 = vpack.c.b16 %v2060, %v2058
    %v2111 = vpack.c.b16 %v2061, %v2059
    %v2112 = vpack.c.b16 %v2064, %v2062
    %v2113 = vpack.c.b16 %v2065, %v2063
    %v2114 = vpack.c.b16 %v2068, %v2066
    %v2115 = vpack.c.b16 %v2069, %v2067
    %v2116 = vpack.c.b16 %v2072, %v2070
    %v2117 = vpack.c.b16 %v2073, %v2071
    %v2118 = vpack.c.b16 %v2076, %v2074
    %v2119 = vpack.c.b16 %v2077, %v2075
    %v2120 = vpack.c.b16 %v2080, %v2078
    %v2121 = vpack.c.b16 %v2081, %v2079
    %v2122 = vpack.c.b16 %v2084, %v2082
    %v2123 = vpack.c.b16 %v2085, %v2083
    %v2124 = vpack.c.b16 %v2088, %v2086
    %v2125 = vpack.c.b16 %v2089, %v2087
    %v2126 = vpack.c.b16 %v2092, %v2090
    %v2127 = vpack.c.b16 %v2093, %v2091
    %v2128 = vpack.c.b16 %v2096, %v2094
    %v2129 = vpack.c.b16 %v2097, %v2095
    %2162 = vmatpush.bf16.msra.mxu0 %v2112
    %2163 = vmatpush.bf16.msra.mxu0 %v2110
    %2164 = vmatpush.bf16.msra.mxu0 %v2108
    %2165 = vmatpush.bf16.msra.mxu0 %v2106
    %2166 = vmatpush.bf16.msra.mxu0 %v2104
    %2167 = vmatpush.bf16.msra.mxu0 %v2102
    %2168 = vmatpush.bf16.msra.mxu0 %v2100
    %2169 = vmatpush.bf16.msra.mxu0 %v2098
    %2170 = vmatmul.bf16.gmra.mxu0 %v1968
    %v2171 = vpop.f32.mrf.mxu0
    %v2172 = vadd.f32 0.0, %v2171
    %v2173 = vpop.f32.mrf.mxu0
    %2174 = vdwg.mxu0
    %2175 = vmatpush.bf16.msra.mxu0 %v2128
    %2176 = vmatpush.bf16.msra.mxu0 %v2126
    %2177 = vmatpush.bf16.msra.mxu0 %v2124
    %2178 = vmatpush.bf16.msra.mxu0 %v2122
    %2179 = vmatpush.bf16.msra.mxu0 %v2120
    %2180 = vmatpush.bf16.msra.mxu0 %v2118
    %2181 = vmatpush.bf16.msra.mxu0 %v2116
    %2182 = vmatpush.bf16.msra.mxu0 %v2114
    %2183 = vmatmul.bf16.gmra.mxu0 %v1969
    %v2184 = vpop.f32.mrf.mxu0
    %v2185 = vadd.f32 %v2172, %v2184
    %v2186 = vpop.f32.mrf.mxu0
    %2187 = vdwg.mxu0
    %2188 = vmatpush.bf16.msra.mxu0 %v2113
    %2189 = vmatpush.bf16.msra.mxu0 %v2111
    %2190 = vmatpush.bf16.msra.mxu0 %v2109
    %2191 = vmatpush.bf16.msra.mxu0 %v2107
    %2192 = vmatpush.bf16.msra.mxu0 %v2105
    %2193 = vmatpush.bf16.msra.mxu0 %v2103
    %2194 = vmatpush.bf16.msra.mxu0 %v2101
    %2195 = vmatpush.bf16.msra.mxu0 %v2099
    %2196 = vmatmul.bf16.gmra.mxu0 %v1968
    %v2197 = vpop.f32.mrf.mxu0
    %v2198 = vadd.f32 0.0, %v2197
    %v2199 = vpop.f32.mrf.mxu0
    %2200 = vdwg.mxu0
    %2201 = vmatpush.bf16.msra.mxu0 %v2129
    %2202 = vmatpush.bf16.msra.mxu0 %v2127
    %2203 = vmatpush.bf16.msra.mxu0 %v2125
    %2204 = vmatpush.bf16.msra.mxu0 %v2123
    %2205 = vmatpush.bf16.msra.mxu0 %v2121
    %2206 = vmatpush.bf16.msra.mxu0 %v2119
    %2207 = vmatpush.bf16.msra.mxu0 %v2117
    %2208 = vmatpush.bf16.msra.mxu0 %v2115
    %2209 = vmatmul.bf16.gmra.mxu0 %v1969
    %v2210 = vpop.f32.mrf.mxu0
    %v2211 = vadd.f32 %v2198, %v2210
    %v2212 = vpop.f32.mrf.mxu0
    %2213 = vdwg.mxu0
    %v2214 = vadd.f32 %v1966, %v2185
    %v2215 = vadd.f32 %v1967, %v2211
    %v2216 = vtanh.pop %v2214
    %v2217 = vtanh.pop %v2215
    %s2218 = smul.addr %s1963, 8
    %s2219 = scalar_lea.vmem [#allocation3], %s2218
    %2220 = vst [vmem:[%s2219] sm:$0xff] %v2216
    %2221 = vst [vmem:[%s2219 + $0x8] sm:$0xff] %v2217
    %s2222 = smul.u32 6, 2
    %s2223 = smul.addr %s2222, 8
    %s2224 = scalar_lea.vmem [#allocation2], %s2223
    %v2225 = vld [vmem:[%s2224] sm:$0xff]
    %v2226 = vld [vmem:[%s2224 + $0x8] sm:$0xff]
    %v2227 = vpack.c.bf16 %v2216, %v2216
    %v2228 = vpack.c.bf16 %v2217, %v2217
    %v2229 = vld [vmem:[#allocation10] sm:$0xff]
    %v2230 = vld [vmem:[#allocation10 + $0x8] sm:$0xff]
    %v2231 = vld [vmem:[#allocation10 + $0x10] sm:$0xff]
    %v2232 = vld [vmem:[#allocation10 + $0x18] sm:$0xff]
    %v2233 = vld [vmem:[#allocation10 + $0x20] sm:$0xff]
    %v2234 = vld [vmem:[#allocation10 + $0x28] sm:$0xff]
    %v2235 = vld [vmem:[#allocation10 + $0x30] sm:$0xff]
    %v2236 = vld [vmem:[#allocation10 + $0x38] sm:$0xff]
    %v2237 = vld [vmem:[#allocation10 + $0x40] sm:$0xff]
    %v2238 = vld [vmem:[#allocation10 + $0x48] sm:$0xff]
    %v2239 = vld [vmem:[#allocation10 + $0x50] sm:$0xff]
    %v2240 = vld [vmem:[#allocation10 + $0x58] sm:$0xff]
    %v2241 = vld [vmem:[#allocation10 + $0x60] sm:$0xff]
    %v2242 = vld [vmem:[#allocation10 + $0x68] sm:$0xff]
    %v2243 = vld [vmem:[#allocation10 + $0x70] sm:$0xff]
    %v2244 = vld [vmem:[#allocation10 + $0x78] sm:$0xff]
    %v2245 = vld [vmem:[#allocation10 + $0x80] sm:$0xff]
    %v2246 = vld [vmem:[#allocation10 + $0x88] sm:$0xff]
    %v2247 = vld [vmem:[#allocation10 + $0x90] sm:$0xff]
    %v2248 = vld [vmem:[#allocation10 + $0x98] sm:$0xff]
    %v2249 = vld [vmem:[#allocation10 + $0xa0] sm:$0xff]
    %v2250 = vld [vmem:[#allocation10 + $0xa8] sm:$0xff]
    %v2251 = vld [vmem:[#allocation10 + $0xb0] sm:$0xff]
    %v2252 = vld [vmem:[#allocation10 + $0xb8] sm:$0xff]
    %v2253 = vld [vmem:[#allocation10 + $0xc0] sm:$0xff]
    %v2254 = vld [vmem:[#allocation10 + $0xc8] sm:$0xff]
    %v2255 = vld [vmem:[#allocation10 + $0xd0] sm:$0xff]
    %v2256 = vld [vmem:[#allocation10 + $0xd8] sm:$0xff]
    %v2257 = vld [vmem:[#allocation10 + $0xe0] sm:$0xff]
    %v2258 = vld [vmem:[#allocation10 + $0xe8] sm:$0xff]
    %v2259 = vld [vmem:[#allocation10 + $0xf0] sm:$0xff]
    %v2260 = vld [vmem:[#allocation10 + $0xf8] sm:$0xff]
    %v2293 = vunpack.c.l.b16 %v2229
    %v2294 = vunpack.c.h.b16 %v2229
    %v2295 = vunpack.c.l.b16 %v2230
    %v2296 = vunpack.c.h.b16 %v2230
    %v2297 = vunpack.c.l.b16 %v2231
    %v2298 = vunpack.c.h.b16 %v2231
    %v2299 = vunpack.c.l.b16 %v2232
    %v2300 = vunpack.c.h.b16 %v2232
    %v2301 = vunpack.c.l.b16 %v2233
    %v2302 = vunpack.c.h.b16 %v2233
    %v2303 = vunpack.c.l.b16 %v2234
    %v2304 = vunpack.c.h.b16 %v2234
    %v2305 = vunpack.c.l.b16 %v2235
    %v2306 = vunpack.c.h.b16 %v2235
    %v2307 = vunpack.c.l.b16 %v2236
    %v2308 = vunpack.c.h.b16 %v2236
    %v2309 = vunpack.c.l.b16 %v2237
    %v2310 = vunpack.c.h.b16 %v2237
    %v2311 = vunpack.c.l.b16 %v2238
    %v2312 = vunpack.c.h.b16 %v2238
    %v2313 = vunpack.c.l.b16 %v2239
    %v2314 = vunpack.c.h.b16 %v2239
    %v2315 = vunpack.c.l.b16 %v2240
    %v2316 = vunpack.c.h.b16 %v2240
    %v2317 = vunpack.c.l.b16 %v2241
    %v2318 = vunpack.c.h.b16 %v2241
    %v2319 = vunpack.c.l.b16 %v2242
    %v2320 = vunpack.c.h.b16 %v2242
    %v2321 = vunpack.c.l.b16 %v2243
    %v2322 = vunpack.c.h.b16 %v2243
    %v2323 = vunpack.c.l.b16 %v2244
    %v2324 = vunpack.c.h.b16 %v2244
    %v2325 = vunpack.c.l.b16 %v2245
    %v2326 = vunpack.c.h.b16 %v2245
    %v2327 = vunpack.c.l.b16 %v2246
    %v2328 = vunpack.c.h.b16 %v2246
    %v2329 = vunpack.c.l.b16 %v2247
    %v2330 = vunpack.c.h.b16 %v2247
    %v2331 = vunpack.c.l.b16 %v2248
    %v2332 = vunpack.c.h.b16 %v2248
    %v2333 = vunpack.c.l.b16 %v2249
    %v2334 = vunpack.c.h.b16 %v2249
    %v2335 = vunpack.c.l.b16 %v2250
    %v2336 = vunpack.c.h.b16 %v2250
    %v2337 = vunpack.c.l.b16 %v2251
    %v2338 = vunpack.c.h.b16 %v2251
    %v2339 = vunpack.c.l.b16 %v2252
    %v2340 = vunpack.c.h.b16 %v2252
    %v2341 = vunpack.c.l.b16 %v2253
    %v2342 = vunpack.c.h.b16 %v2253
    %v2343 = vunpack.c.l.b16 %v2254
    %v2344 = vunpack.c.h.b16 %v2254
    %v2345 = vunpack.c.l.b16 %v2255
    %v2346 = vunpack.c.h.b16 %v2255
    %v2347 = vunpack.c.l.b16 %v2256
    %v2348 = vunpack.c.h.b16 %v2256
    %v2349 = vunpack.c.l.b16 %v2257
    %v2350 = vunpack.c.h.b16 %v2257
    %v2351 = vunpack.c.l.b16 %v2258
    %v2352 = vunpack.c.h.b16 %v2258
    %v2353 = vunpack.c.l.b16 %v2259
    %v2354 = vunpack.c.h.b16 %v2259
    %v2355 = vunpack.c.l.b16 %v2260
    %v2356 = vunpack.c.h.b16 %v2260
    %v2357 = vpack.c.b16 %v2295, %v2293
    %v2358 = vpack.c.b16 %v2296, %v2294
    %v2359 = vpack.c.b16 %v2299, %v2297
    %v2360 = vpack.c.b16 %v2300, %v2298
    %v2361 = vpack.c.b16 %v2303, %v2301
    %v2362 = vpack.c.b16 %v2304, %v2302
    %v2363 = vpack.c.b16 %v2307, %v2305
    %v2364 = vpack.c.b16 %v2308, %v2306
    %v2365 = vpack.c.b16 %v2311, %v2309
    %v2366 = vpack.c.b16 %v2312, %v2310
    %v2367 = vpack.c.b16 %v2315, %v2313
    %v2368 = vpack.c.b16 %v2316, %v2314
    %v2369 = vpack.c.b16 %v2319, %v2317
    %v2370 = vpack.c.b16 %v2320, %v2318
    %v2371 = vpack.c.b16 %v2323, %v2321
    %v2372 = vpack.c.b16 %v2324, %v2322
    %v2373 = vpack.c.b16 %v2327, %v2325
    %v2374 = vpack.c.b16 %v2328, %v2326
    %v2375 = vpack.c.b16 %v2331, %v2329
    %v2376 = vpack.c.b16 %v2332, %v2330
    %v2377 = vpack.c.b16 %v2335, %v2333
    %v2378 = vpack.c.b16 %v2336, %v2334
    %v2379 = vpack.c.b16 %v2339, %v2337
    %v2380 = vpack.c.b16 %v2340, %v2338
    %v2381 = vpack.c.b16 %v2343, %v2341
    %v2382 = vpack.c.b16 %v2344, %v2342
    %v2383 = vpack.c.b16 %v2347, %v2345
    %v2384 = vpack.c.b16 %v2348, %v2346
    %v2385 = vpack.c.b16 %v2351, %v2349
    %v2386 = vpack.c.b16 %v2352, %v2350
    %v2387 = vpack.c.b16 %v2355, %v2353
    %v2388 = vpack.c.b16 %v2356, %v2354
    %2421 = vmatpush.bf16.msra.mxu0 %v2371
    %2422 = vmatpush.bf16.msra.mxu0 %v2369
    %2423 = vmatpush.bf16.msra.mxu0 %v2367
    %2424 = vmatpush.bf16.msra.mxu0 %v2365
    %2425 = vmatpush.bf16.msra.mxu0 %v2363
    %2426 = vmatpush.bf16.msra.mxu0 %v2361
    %2427 = vmatpush.bf16.msra.mxu0 %v2359
    %2428 = vmatpush.bf16.msra.mxu0 %v2357
    %2429 = vmatmul.bf16.gmra.mxu0 %v2227
    %v2430 = vpop.f32.mrf.mxu0
    %v2431 = vadd.f32 0.0, %v2430
    %v2432 = vpop.f32.mrf.mxu0
    %2433 = vdwg.mxu0
    %2434 = vmatpush.bf16.msra.mxu0 %v2387
    %2435 = vmatpush.bf16.msra.mxu0 %v2385
    %2436 = vmatpush.bf16.msra.mxu0 %v2383
    %2437 = vmatpush.bf16.msra.mxu0 %v2381
    %2438 = vmatpush.bf16.msra.mxu0 %v2379
    %2439 = vmatpush.bf16.msra.mxu0 %v2377
    %2440 = vmatpush.bf16.msra.mxu0 %v2375
    %2441 = vmatpush.bf16.msra.mxu0 %v2373
    %2442 = vmatmul.bf16.gmra.mxu0 %v2228
    %v2443 = vpop.f32.mrf.mxu0
    %v2444 = vadd.f32 %v2431, %v2443
    %v2445 = vpop.f32.mrf.mxu0
    %2446 = vdwg.mxu0
    %2447 = vmatpush.bf16.msra.mxu0 %v2372
    %2448 = vmatpush.bf16.msra.mxu0 %v2370
    %2449 = vmatpush.bf16.msra.mxu0 %v2368
    %2450 = vmatpush.bf16.msra.mxu0 %v2366
    %2451 = vmatpush.bf16.msra.mxu0 %v2364
    %2452 = vmatpush.bf16.msra.mxu0 %v2362
    %2453 = vmatpush.bf16.msra.mxu0 %v2360
    %2454 = vmatpush.bf16.msra.mxu0 %v2358
    %2455 = vmatmul.bf16.gmra.mxu0 %v2227
    %v2456 = vpop.f32.mrf.mxu0
    %v2457 = vadd.f32 0.0, %v2456
    %v2458 = vpop.f32.mrf.mxu0
    %2459 = vdwg.mxu0
    %2460 = vmatpush.bf16.msra.mxu0 %v2388
    %2461 = vmatpush.bf16.msra.mxu0 %v2386
    %2462 = vmatpush.bf16.msra.mxu0 %v2384
    %2463 = vmatpush.bf16.msra.mxu0 %v2382
    %2464 = vmatpush.bf16.msra.mxu0 %v2380
    %2465 = vmatpush.bf16.msra.mxu0 %v2378
    %2466 = vmatpush.bf16.msra.mxu0 %v2376
    %2467 = vmatpush.bf16.msra.mxu0 %v2374
    %2468 = vmatmul.bf16.gmra.mxu0 %v2228
    %v2469 = vpop.f32.mrf.mxu0
    %v2470 = vadd.f32 %v2457, %v2469
    %v2471 = vpop.f32.mrf.mxu0
    %2472 = vdwg.mxu0
    %v2473 = vadd.f32 %v2225, %v2444
    %v2474 = vadd.f32 %v2226, %v2470
    %v2475 = vtanh.pop %v2473
    %v2476 = vtanh.pop %v2474
    %s2477 = smul.addr %s2222, 8
    %s2478 = scalar_lea.vmem [#allocation3], %s2477
    %2479 = vst [vmem:[%s2478] sm:$0xff] %v2475
    %2480 = vst [vmem:[%s2478 + $0x8] sm:$0xff] %v2476
    %s2481 = smul.u32 7, 2
    %s2482 = smul.addr %s2481, 8
    %s2483 = scalar_lea.vmem [#allocation2], %s2482
    %v2484 = vld [vmem:[%s2483] sm:$0xff]
    %v2485 = vld [vmem:[%s2483 + $0x8] sm:$0xff]
    %v2486 = vpack.c.bf16 %v2475, %v2475
    %v2487 = vpack.c.bf16 %v2476, %v2476
    %v2488 = vld [vmem:[#allocation10] sm:$0xff]
    %v2489 = vld [vmem:[#allocation10 + $0x8] sm:$0xff]
    %v2490 = vld [vmem:[#allocation10 + $0x10] sm:$0xff]
    %v2491 = vld [vmem:[#allocation10 + $0x18] sm:$0xff]
    %v2492 = vld [vmem:[#allocation10 + $0x20] sm:$0xff]
    %v2493 = vld [vmem:[#allocation10 + $0x28] sm:$0xff]
    %v2494 = vld [vmem:[#allocation10 + $0x30] sm:$0xff]
    %v2495 = vld [vmem:[#allocation10 + $0x38] sm:$0xff]
    %v2496 = vld [vmem:[#allocation10 + $0x40] sm:$0xff]
    %v2497 = vld [vmem:[#allocation10 + $0x48] sm:$0xff]
    %v2498 = vld [vmem:[#allocation10 + $0x50] sm:$0xff]
    %v2499 = vld [vmem:[#allocation10 + $0x58] sm:$0xff]
    %v2500 = vld [vmem:[#allocation10 + $0x60] sm:$0xff]
    %v2501 = vld [vmem:[#allocation10 + $0x68] sm:$0xff]
    %v2502 = vld [vmem:[#allocation10 + $0x70] sm:$0xff]
    %v2503 = vld [vmem:[#allocation10 + $0x78] sm:$0xff]
    %v2504 = vld [vmem:[#allocation10 + $0x80] sm:$0xff]
    %v2505 = vld [vmem:[#allocation10 + $0x88] sm:$0xff]
    %v2506 = vld [vmem:[#allocation10 + $0x90] sm:$0xff]
    %v2507 = vld [vmem:[#allocation10 + $0x98] sm:$0xff]
    %v2508 = vld [vmem:[#allocation10 + $0xa0] sm:$0xff]
    %v2509 = vld [vmem:[#allocation10 + $0xa8] sm:$0xff]
    %v2510 = vld [vmem:[#allocation10 + $0xb0] sm:$0xff]
    %v2511 = vld [vmem:[#allocation10 + $0xb8] sm:$0xff]
    %v2512 = vld [vmem:[#allocation10 + $0xc0] sm:$0xff]
    %v2513 = vld [vmem:[#allocation10 + $0xc8] sm:$0xff]
    %v2514 = vld [vmem:[#allocation10 + $0xd0] sm:$0xff]
    %v2515 = vld [vmem:[#allocation10 + $0xd8] sm:$0xff]
    %v2516 = vld [vmem:[#allocation10 + $0xe0] sm:$0xff]
    %v2517 = vld [vmem:[#allocation10 + $0xe8] sm:$0xff]
    %v2518 = vld [vmem:[#allocation10 + $0xf0] sm:$0xff]
    %v2519 = vld [vmem:[#allocation10 + $0xf8] sm:$0xff]
    %v2552 = vunpack.c.l.b16 %v2488
    %v2553 = vunpack.c.h.b16 %v2488
    %v2554 = vunpack.c.l.b16 %v2489
    %v2555 = vunpack.c.h.b16 %v2489
    %v2556 = vunpack.c.l.b16 %v2490
    %v2557 = vunpack.c.h.b16 %v2490
    %v2558 = vunpack.c.l.b16 %v2491
    %v2559 = vunpack.c.h.b16 %v2491
    %v2560 = vunpack.c.l.b16 %v2492
    %v2561 = vunpack.c.h.b16 %v2492
    %v2562 = vunpack.c.l.b16 %v2493
    %v2563 = vunpack.c.h.b16 %v2493
    %v2564 = vunpack.c.l.b16 %v2494
    %v2565 = vunpack.c.h.b16 %v2494
    %v2566 = vunpack.c.l.b16 %v2495
    %v2567 = vunpack.c.h.b16 %v2495
    %v2568 = vunpack.c.l.b16 %v2496
    %v2569 = vunpack.c.h.b16 %v2496
    %v2570 = vunpack.c.l.b16 %v2497
    %v2571 = vunpack.c.h.b16 %v2497
    %v2572 = vunpack.c.l.b16 %v2498
    %v2573 = vunpack.c.h.b16 %v2498
    %v2574 = vunpack.c.l.b16 %v2499
    %v2575 = vunpack.c.h.b16 %v2499
    %v2576 = vunpack.c.l.b16 %v2500
    %v2577 = vunpack.c.h.b16 %v2500
    %v2578 = vunpack.c.l.b16 %v2501
    %v2579 = vunpack.c.h.b16 %v2501
    %v2580 = vunpack.c.l.b16 %v2502
    %v2581 = vunpack.c.h.b16 %v2502
    %v2582 = vunpack.c.l.b16 %v2503
    %v2583 = vunpack.c.h.b16 %v2503
    %v2584 = vunpack.c.l.b16 %v2504
    %v2585 = vunpack.c.h.b16 %v2504
    %v2586 = vunpack.c.l.b16 %v2505
    %v2587 = vunpack.c.h.b16 %v2505
    %v2588 = vunpack.c.l.b16 %v2506
    %v2589 = vunpack.c.h.b16 %v2506
    %v2590 = vunpack.c.l.b16 %v2507
    %v2591 = vunpack.c.h.b16 %v2507
    %v2592 = vunpack.c.l.b16 %v2508
    %v2593 = vunpack.c.h.b16 %v2508
    %v2594 = vunpack.c.l.b16 %v2509
    %v2595 = vunpack.c.h.b16 %v2509
    %v2596 = vunpack.c.l.b16 %v2510
    %v2597 = vunpack.c.h.b16 %v2510
    %v2598 = vunpack.c.l.b16 %v2511
    %v2599 = vunpack.c.h.b16 %v2511
    %v2600 = vunpack.c.l.b16 %v2512
    %v2601 = vunpack.c.h.b16 %v2512
    %v2602 = vunpack.c.l.b16 %v2513
    %v2603 = vunpack.c.h.b16 %v2513
    %v2604 = vunpack.c.l.b16 %v2514
    %v2605 = vunpack.c.h.b16 %v2514
    %v2606 = vunpack.c.l.b16 %v2515
    %v2607 = vunpack.c.h.b16 %v2515
    %v2608 = vunpack.c.l.b16 %v2516
    %v2609 = vunpack.c.h.b16 %v2516
    %v2610 = vunpack.c.l.b16 %v2517
    %v2611 = vunpack.c.h.b16 %v2517
    %v2612 = vunpack.c.l.b16 %v2518
    %v2613 = vunpack.c.h.b16 %v2518
    %v2614 = vunpack.c.l.b16 %v2519
    %v2615 = vunpack.c.h.b16 %v2519
    %v2616 = vpack.c.b16 %v2554, %v2552
    %v2617 = vpack.c.b16 %v2555, %v2553
    %v2618 = vpack.c.b16 %v2558, %v2556
    %v2619 = vpack.c.b16 %v2559, %v2557
    %v2620 = vpack.c.b16 %v2562, %v2560
    %v2621 = vpack.c.b16 %v2563, %v2561
    %v2622 = vpack.c.b16 %v2566, %v2564
    %v2623 = vpack.c.b16 %v2567, %v2565
    %v2624 = vpack.c.b16 %v2570, %v2568
    %v2625 = vpack.c.b16 %v2571, %v2569
    %v2626 = vpack.c.b16 %v2574, %v2572
    %v2627 = vpack.c.b16 %v2575, %v2573
    %v2628 = vpack.c.b16 %v2578, %v2576
    %v2629 = vpack.c.b16 %v2579, %v2577
    %v2630 = vpack.c.b16 %v2582, %v2580
    %v2631 = vpack.c.b16 %v2583, %v2581
    %v2632 = vpack.c.b16 %v2586, %v2584
    %v2633 = vpack.c.b16 %v2587, %v2585
    %v2634 = vpack.c.b16 %v2590, %v2588
    %v2635 = vpack.c.b16 %v2591, %v2589
    %v2636 = vpack.c.b16 %v2594, %v2592
    %v2637 = vpack.c.b16 %v2595, %v2593
    %v2638 = vpack.c.b16 %v2598, %v2596
    %v2639 = vpack.c.b16 %v2599, %v2597
    %v2640 = vpack.c.b16 %v2602, %v2600
    %v2641 = vpack.c.b16 %v2603, %v2601
    %v2642 = vpack.c.b16 %v2606, %v2604
    %v2643 = vpack.c.b16 %v2607, %v2605
    %v2644 = vpack.c.b16 %v2610, %v2608
    %v2645 = vpack.c.b16 %v2611, %v2609
    %v2646 = vpack.c.b16 %v2614, %v2612
    %v2647 = vpack.c.b16 %v2615, %v2613
    %2680 = vmatpush.bf16.msra.mxu0 %v2630
    %2681 = vmatpush.bf16.msra.mxu0 %v2628
    %2682 = vmatpush.bf16.msra.mxu0 %v2626
    %2683 = vmatpush.bf16.msra.mxu0 %v2624
    %2684 = vmatpush.bf16.msra.mxu0 %v2622
    %2685 = vmatpush.bf16.msra.mxu0 %v2620
    %2686 = vmatpush.bf16.msra.mxu0 %v2618
    %2687 = vmatpush.bf16.msra.mxu0 %v2616
    %2688 = vmatmul.bf16.gmra.mxu0 %v2486
    %v2689 = vpop.f32.mrf.mxu0
    %v2690 = vadd.f32 0.0, %v2689
    %v2691 = vpop.f32.mrf.mxu0
    %2692 = vdwg.mxu0
    %2693 = vmatpush.bf16.msra.mxu0 %v2646
    %2694 = vmatpush.bf16.msra.mxu0 %v2644
    %2695 = vmatpush.bf16.msra.mxu0 %v2642
    %2696 = vmatpush.bf16.msra.mxu0 %v2640
    %2697 = vmatpush.bf16.msra.mxu0 %v2638
    %2698 = vmatpush.bf16.msra.mxu0 %v2636
    %2699 = vmatpush.bf16.msra.mxu0 %v2634
    %2700 = vmatpush.bf16.msra.mxu0 %v2632
    %2701 = vmatmul.bf16.gmra.mxu0 %v2487
    %v2702 = vpop.f32.mrf.mxu0
    %v2703 = vadd.f32 %v2690, %v2702
    %v2704 = vpop.f32.mrf.mxu0
    %2705 = vdwg.mxu0
    %2706 = vmatpush.bf16.msra.mxu0 %v2631
    %2707 = vmatpush.bf16.msra.mxu0 %v2629
    %2708 = vmatpush.bf16.msra.mxu0 %v2627
    %2709 = vmatpush.bf16.msra.mxu0 %v2625
    %2710 = vmatpush.bf16.msra.mxu0 %v2623
    %2711 = vmatpush.bf16.msra.mxu0 %v2621
    %2712 = vmatpush.bf16.msra.mxu0 %v2619
    %2713 = vmatpush.bf16.msra.mxu0 %v2617
    %2714 = vmatmul.bf16.gmra.mxu0 %v2486
    %v2715 = vpop.f32.mrf.mxu0
    %v2716 = vadd.f32 0.0, %v2715
    %v2717 = vpop.f32.mrf.mxu0
    %2718 = vdwg.mxu0
    %2719 = vmatpush.bf16.msra.mxu0 %v2647
    %2720 = vmatpush.bf16.msra.mxu0 %v2645
    %2721 = vmatpush.bf16.msra.mxu0 %v2643
    %2722 = vmatpush.bf16.msra.mxu0 %v2641
    %2723 = vmatpush.bf16.msra.mxu0 %v2639
    %2724 = vmatpush.bf16.msra.mxu0 %v2637
    %2725 = vmatpush.bf16.msra.mxu0 %v2635
    %2726 = vmatpush.bf16.msra.mxu0 %v2633
    %2727 = vmatmul.bf16.gmra.mxu0 %v2487
    %v2728 = vpop.f32.mrf.mxu0
    %v2729 = vadd.f32 %v2716, %v2728
    %v2730 = vpop.f32.mrf.mxu0
    %2731 = vdwg.mxu0
    %v2732 = vadd.f32 %v2484, %v2703
    %v2733 = vadd.f32 %v2485, %v2729
    %v2734 = vtanh.pop %v2732
    %v2735 = vtanh.pop %v2733
    %s2736 = smul.addr %s2481, 8
    %s2737 = scalar_lea.vmem [#allocation3], %s2736
    %2738 = vst [vmem:[%s2737] sm:$0xff] %v2734
    %2739 = vst [vmem:[%s2737 + $0x8] sm:$0xff] %v2735
    %v2740 = vld [vmem:[#allocation3] sm:$0xff]
    %v2741 = vld [vmem:[#allocation3 + $0x8] sm:$0xff]
    %v2742 = vld [vmem:[#allocation3 + $0x10] sm:$0xff]
    %v2743 = vld [vmem:[#allocation3 + $0x18] sm:$0xff]
    %v2744 = vld [vmem:[#allocation3 + $0x20] sm:$0xff]
    %v2745 = vld [vmem:[#allocation3 + $0x28] sm:$0xff]
    %v2746 = vld [vmem:[#allocation3 + $0x30] sm:$0xff]
    %v2747 = vld [vmem:[#allocation3 + $0x38] sm:$0xff]
    %v2748 = vld [vmem:[#allocation3 + $0x40] sm:$0xff]
    %v2749 = vld [vmem:[#allocation3 + $0x48] sm:$0xff]
    %v2750 = vld [vmem:[#allocation3 + $0x50] sm:$0xff]
    %v2751 = vld [vmem:[#allocation3 + $0x58] sm:$0xff]
    %v2752 = vld [vmem:[#allocation3 + $0x60] sm:$0xff]
    %v2753 = vld [vmem:[#allocation3 + $0x68] sm:$0xff]
    %v2754 = vld [vmem:[#allocation3 + $0x70] sm:$0xff]
    %v2755 = vld [vmem:[#allocation3 + $0x78] sm:$0xff]
    %v2756 = vpack.c.bf16 %v2742, %v2740
    %v2757 = vpack.c.bf16 %v2743, %v2741
    %v2758 = vpack.c.bf16 %v2746, %v2744
    %v2759 = vpack.c.bf16 %v2747, %v2745
    %v2760 = vpack.c.bf16 %v2750, %v2748
    %v2761 = vpack.c.bf16 %v2751, %v2749
    %v2762 = vpack.c.bf16 %v2754, %v2752
    %v2763 = vpack.c.bf16 %v2755, %v2753
    %v2764 = vld [vmem:[#allocation11] sm:$0xff]
    %v2765 = vld [vmem:[#allocation11 + $0x8] sm:$0xff]
    %v2766 = vld [vmem:[#allocation11 + $0x10] sm:$0xff]
    %v2767 = vld [vmem:[#allocation11 + $0x18] sm:$0xff]
    %v2768 = vld [vmem:[#allocation11 + $0x20] sm:$0xff]
    %v2769 = vld [vmem:[#allocation11 + $0x28] sm:$0xff]
    %v2770 = vld [vmem:[#allocation11 + $0x30] sm:$0xff]
    %v2771 = vld [vmem:[#allocation11 + $0x38] sm:$0xff]
    %v2772 = vld [vmem:[#allocation11 + $0x40] sm:$0xff]
    %v2773 = vld [vmem:[#allocation11 + $0x48] sm:$0xff]
    %v2774 = vld [vmem:[#allocation11 + $0x50] sm:$0xff]
    %v2775 = vld [vmem:[#allocation11 + $0x58] sm:$0xff]
    %v2776 = vld [vmem:[#allocation11 + $0x60] sm:$0xff]
    %v2777 = vld [vmem:[#allocation11 + $0x68] sm:$0xff]
    %v2778 = vld [vmem:[#allocation11 + $0x70] sm:$0xff]
    %v2779 = vld [vmem:[#allocation11 + $0x78] sm:$0xff]
    %v2780 = vld [vmem:[#allocation11 + $0x80] sm:$0xff]
    %v2781 = vld [vmem:[#allocation11 + $0x88] sm:$0xff]
    %v2782 = vld [vmem:[#allocation11 + $0x90] sm:$0xff]
    %v2783 = vld [vmem:[#allocation11 + $0x98] sm:$0xff]
    %v2784 = vld [vmem:[#allocation11 + $0xa0] sm:$0xff]
    %v2785 = vld [vmem:[#allocation11 + $0xa8] sm:$0xff]
    %v2786 = vld [vmem:[#allocation11 + $0xb0] sm:$0xff]
    %v2787 = vld [vmem:[#allocation11 + $0xb8] sm:$0xff]
    %v2788 = vld [vmem:[#allocation11 + $0xc0] sm:$0xff]
    %v2789 = vld [vmem:[#allocation11 + $0xc8] sm:$0xff]
    %v2790 = vld [vmem:[#allocation11 + $0xd0] sm:$0xff]
    %v2791 = vld [vmem:[#allocation11 + $0xd8] sm:$0xff]
    %v2792 = vld [vmem:[#allocation11 + $0xe0] sm:$0xff]
    %v2793 = vld [vmem:[#allocation11 + $0xe8] sm:$0xff]
    %v2794 = vld [vmem:[#allocation11 + $0xf0] sm:$0xff]
    %v2795 = vld [vmem:[#allocation11 + $0xf8] sm:$0xff]
    %v2796 = vld [vmem:[%s6] sm:$0x3]
    %v2798 = vperm.slane %v2796, 0
    %v2799 = vperm.slane %v2796, 1
    %v2834 = vunpack.c.l.b16 %v2764
    %v2835 = vunpack.c.h.b16 %v2764
    %v2836 = vunpack.c.l.b16 %v2765
    %v2837 = vunpack.c.h.b16 %v2765
    %v2838 = vunpack.c.l.b16 %v2766
    %v2839 = vunpack.c.h.b16 %v2766
    %v2840 = vunpack.c.l.b16 %v2767
    %v2841 = vunpack.c.h.b16 %v2767
    %v2842 = vunpack.c.l.b16 %v2768
    %v2843 = vunpack.c.h.b16 %v2768
    %v2844 = vunpack.c.l.b16 %v2769
    %v2845 = vunpack.c.h.b16 %v2769
    %v2846 = vunpack.c.l.b16 %v2770
    %v2847 = vunpack.c.h.b16 %v2770
    %v2848 = vunpack.c.l.b16 %v2771
    %v2849 = vunpack.c.h.b16 %v2771
    %v2850 = vunpack.c.l.b16 %v2772
    %v2851 = vunpack.c.h.b16 %v2772
    %v2852 = vunpack.c.l.b16 %v2773
    %v2853 = vunpack.c.h.b16 %v2773
    %v2854 = vunpack.c.l.b16 %v2774
    %v2855 = vunpack.c.h.b16 %v2774
    %v2856 = vunpack.c.l.b16 %v2775
    %v2857 = vunpack.c.h.b16 %v2775
    %v2858 = vunpack.c.l.b16 %v2776
    %v2859 = vunpack.c.h.b16 %v2776
    %v2860 = vunpack.c.l.b16 %v2777
    %v2861 = vunpack.c.h.b16 %v2777
    %v2862 = vunpack.c.l.b16 %v2778
    %v2863 = vunpack.c.h.b16 %v2778
    %v2864 = vunpack.c.l.b16 %v2779
    %v2865 = vunpack.c.h.b16 %v2779
    %v2866 = vunpack.c.l.b16 %v2780
    %v2867 = vunpack.c.h.b16 %v2780
    %v2868 = vunpack.c.l.b16 %v2781
    %v2869 = vunpack.c.h.b16 %v2781
    %v2870 = vunpack.c.l.b16 %v2782
    %v2871 = vunpack.c.h.b16 %v2782
    %v2872 = vunpack.c.l.b16 %v2783
    %v2873 = vunpack.c.h.b16 %v2783
    %v2874 = vunpack.c.l.b16 %v2784
    %v2875 = vunpack.c.h.b16 %v2784
    %v2876 = vunpack.c.l.b16 %v2785
    %v2877 = vunpack.c.h.b16 %v2785
    %v2878 = vunpack.c.l.b16 %v2786
    %v2879 = vunpack.c.h.b16 %v2786
    %v2880 = vunpack.c.l.b16 %v2787
    %v2881 = vunpack.c.h.b16 %v2787
    %v2882 = vunpack.c.l.b16 %v2788
    %v2883 = vunpack.c.h.b16 %v2788
    %v2884 = vunpack.c.l.b16 %v2789
    %v2885 = vunpack.c.h.b16 %v2789
    %v2886 = vunpack.c.l.b16 %v2790
    %v2887 = vunpack.c.h.b16 %v2790
    %v2888 = vunpack.c.l.b16 %v2791
    %v2889 = vunpack.c.h.b16 %v2791
    %v2890 = vunpack.c.l.b16 %v2792
    %v2891 = vunpack.c.h.b16 %v2792
    %v2892 = vunpack.c.l.b16 %v2793
    %v2893 = vunpack.c.h.b16 %v2793
    %v2894 = vunpack.c.l.b16 %v2794
    %v2895 = vunpack.c.h.b16 %v2794
    %v2896 = vunpack.c.l.b16 %v2795
    %v2897 = vunpack.c.h.b16 %v2795
    %v2898 = vpack.c.b16 %v2836, %v2834
    %v2899 = vpack.c.b16 %v2837, %v2835
    %v2900 = vpack.c.b16 %v2840, %v2838
    %v2901 = vpack.c.b16 %v2841, %v2839
    %v2902 = vpack.c.b16 %v2844, %v2842
    %v2903 = vpack.c.b16 %v2845, %v2843
    %v2904 = vpack.c.b16 %v2848, %v2846
    %v2905 = vpack.c.b16 %v2849, %v2847
    %v2906 = vpack.c.b16 %v2852, %v2850
    %v2907 = vpack.c.b16 %v2853, %v2851
    %v2908 = vpack.c.b16 %v2856, %v2854
    %v2909 = vpack.c.b16 %v2857, %v2855
    %v2910 = vpack.c.b16 %v2860, %v2858
    %v2911 = vpack.c.b16 %v2861, %v2859
    %v2912 = vpack.c.b16 %v2864, %v2862
    %v2913 = vpack.c.b16 %v2865, %v2863
    %v2914 = vpack.c.b16 %v2868, %v2866
    %v2915 = vpack.c.b16 %v2869, %v2867
    %v2916 = vpack.c.b16 %v2872, %v2870
    %v2917 = vpack.c.b16 %v2873, %v2871
    %v2918 = vpack.c.b16 %v2876, %v2874
    %v2919 = vpack.c.b16 %v2877, %v2875
    %v2920 = vpack.c.b16 %v2880, %v2878
    %v2921 = vpack.c.b16 %v2881, %v2879
    %v2922 = vpack.c.b16 %v2884, %v2882
    %v2923 = vpack.c.b16 %v2885, %v2883
    %v2924 = vpack.c.b16 %v2888, %v2886
    %v2925 = vpack.c.b16 %v2889, %v2887
    %v2926 = vpack.c.b16 %v2892, %v2890
    %v2927 = vpack.c.b16 %v2893, %v2891
    %v2928 = vpack.c.b16 %v2896, %v2894
    %v2929 = vpack.c.b16 %v2897, %v2895
    %2962 = vmatpush.bf16.msra.mxu0 %v2912
    %2963 = vmatpush.bf16.msra.mxu0 %v2910
    %2964 = vmatpush.bf16.msra.mxu0 %v2908
    %2965 = vmatpush.bf16.msra.mxu0 %v2906
    %2966 = vmatpush.bf16.msra.mxu0 %v2904
    %2967 = vmatpush.bf16.msra.mxu0 %v2902
    %2968 = vmatpush.bf16.msra.mxu0 %v2900
    %2969 = vmatpush.bf16.msra.mxu0 %v2898
    %2970 = vmatmul.bf16.gmra.mxu0 %v2756
    %v2971 = vpop.f32.mrf.mxu0
    %v2972 = vadd.f32 %v2798, %v2971
    %v2973 = vpop.f32.mrf.mxu0
    %v2974 = vadd.f32 %v2798, %v2973
    %2975 = vmatmul.bf16.gmra.mxu0 %v2758
    %v2976 = vpop.f32.mrf.mxu0
    %v2977 = vadd.f32 %v2798, %v2976
    %v2978 = vpop.f32.mrf.mxu0
    %v2979 = vadd.f32 %v2798, %v2978
    %2980 = vmatmul.bf16.gmra.mxu0 %v2760
    %v2981 = vpop.f32.mrf.mxu0
    %v2982 = vadd.f32 %v2798, %v2981
    %v2983 = vpop.f32.mrf.mxu0
    %v2984 = vadd.f32 %v2798, %v2983
    %2985 = vmatmul.bf16.gmra.mxu0 %v2762
    %v2986 = vpop.f32.mrf.mxu0
    %v2987 = vadd.f32 %v2798, %v2986
    %v2988 = vpop.f32.mrf.mxu0
    %v2989 = vadd.f32 %v2798, %v2988
    %2990 = vdwg.mxu0
    %2991 = vmatpush.bf16.msra.mxu0 %v2928
    %2992 = vmatpush.bf16.msra.mxu0 %v2926
    %2993 = vmatpush.bf16.msra.mxu0 %v2924
    %2994 = vmatpush.bf16.msra.mxu0 %v2922
    %2995 = vmatpush.bf16.msra.mxu0 %v2920
    %2996 = vmatpush.bf16.msra.mxu0 %v2918
    %2997 = vmatpush.bf16.msra.mxu0 %v2916
    %2998 = vmatpush.bf16.msra.mxu0 %v2914
    %2999 = vmatmul.bf16.gmra.mxu0 %v2757
    %v3000 = vpop.f32.mrf.mxu0
    %v3001 = vadd.f32 %v2972, %v3000
    %v3002 = vpop.f32.mrf.mxu0
    %v3003 = vadd.f32 %v2974, %v3002
    %3004 = vmatmul.bf16.gmra.mxu0 %v2759
    %v3005 = vpop.f32.mrf.mxu0
    %v3006 = vadd.f32 %v2977, %v3005
    %v3007 = vpop.f32.mrf.mxu0
    %v3008 = vadd.f32 %v2979, %v3007
    %3009 = vmatmul.bf16.gmra.mxu0 %v2761
    %v3010 = vpop.f32.mrf.mxu0
    %v3011 = vadd.f32 %v2982, %v3010
    %v3012 = vpop.f32.mrf.mxu0
    %v3013 = vadd.f32 %v2984, %v3012
    %3014 = vmatmul.bf16.gmra.mxu0 %v2763
    %v3015 = vpop.f32.mrf.mxu0
    %v3016 = vadd.f32 %v2987, %v3015
    %v3017 = vpop.f32.mrf.mxu0
    %v3018 = vadd.f32 %v2989, %v3017
    %3019 = vdwg.mxu0
    %3020 = vmatpush.bf16.msra.mxu0 %v2913
    %3021 = vmatpush.bf16.msra.mxu0 %v2911
    %3022 = vmatpush.bf16.msra.mxu0 %v2909
    %3023 = vmatpush.bf16.msra.mxu0 %v2907
    %3024 = vmatpush.bf16.msra.mxu0 %v2905
    %3025 = vmatpush.bf16.msra.mxu0 %v2903
    %3026 = vmatpush.bf16.msra.mxu0 %v2901
    %3027 = vmatpush.bf16.msra.mxu0 %v2899
    %3028 = vmatmul.bf16.gmra.mxu0 %v2756
    %v3029 = vpop.f32.mrf.mxu0
    %v3030 = vadd.f32 %v2799, %v3029
    %v3031 = vpop.f32.mrf.mxu0
    %v3032 = vadd.f32 %v2799, %v3031
    %3033 = vmatmul.bf16.gmra.mxu0 %v2758
    %v3034 = vpop.f32.mrf.mxu0
    %v3035 = vadd.f32 %v2799, %v3034
    %v3036 = vpop.f32.mrf.mxu0
    %v3037 = vadd.f32 %v2799, %v3036
    %3038 = vmatmul.bf16.gmra.mxu0 %v2760
    %v3039 = vpop.f32.mrf.mxu0
    %v3040 = vadd.f32 %v2799, %v3039
    %v3041 = vpop.f32.mrf.mxu0
    %v3042 = vadd.f32 %v2799, %v3041
    %3043 = vmatmul.bf16.gmra.mxu0 %v2762
    %v3044 = vpop.f32.mrf.mxu0
    %v3045 = vadd.f32 %v2799, %v3044
    %v3046 = vpop.f32.mrf.mxu0
    %v3047 = vadd.f32 %v2799, %v3046
    %3048 = vdwg.mxu0
    %3049 = vmatpush.bf16.msra.mxu0 %v2929
    %3050 = vmatpush.bf16.msra.mxu0 %v2927
    %3051 = vmatpush.bf16.msra.mxu0 %v2925
    %3052 = vmatpush.bf16.msra.mxu0 %v2923
    %3053 = vmatpush.bf16.msra.mxu0 %v2921
    %3054 = vmatpush.bf16.msra.mxu0 %v2919
    %3055 = vmatpush.bf16.msra.mxu0 %v2917
    %3056 = vmatpush.bf16.msra.mxu0 %v2915
    %3057 = vmatmul.bf16.gmra.mxu0 %v2757
    %v3058 = vpop.f32.mrf.mxu0
    %v3059 = vadd.f32 %v3030, %v3058
    %v3060 = vpop.f32.mrf.mxu0
    %v3061 = vadd.f32 %v3032, %v3060
    %3062 = vmatmul.bf16.gmra.mxu0 %v2759
    %v3063 = vpop.f32.mrf.mxu0
    %v3064 = vadd.f32 %v3035, %v3063
    %v3065 = vpop.f32.mrf.mxu0
    %v3066 = vadd.f32 %v3037, %v3065
    %3067 = vmatmul.bf16.gmra.mxu0 %v2761
    %v3068 = vpop.f32.mrf.mxu0
    %v3069 = vadd.f32 %v3040, %v3068
    %v3070 = vpop.f32.mrf.mxu0
    %v3071 = vadd.f32 %v3042, %v3070
    %3072 = vmatmul.bf16.gmra.mxu0 %v2763
    %v3073 = vpop.f32.mrf.mxu0
    %v3074 = vadd.f32 %v3045, %v3073
    %v3075 = vpop.f32.mrf.mxu0
    %v3076 = vadd.f32 %v3047, %v3075
    %3077 = vdwg.mxu0
    %3078 = vst [vmem:[#allocation4] sm:$0xff] %v3001
    %3079 = vst [vmem:[#allocation4 + $0x8] sm:$0xff] %v3059
    %3080 = vst [vmem:[#allocation4 + $0x10] sm:$0xff] %v3003
    %3081 = vst [vmem:[#allocation4 + $0x18] sm:$0xff] %v3061
    %3082 = vst [vmem:[#allocation4 + $0x20] sm:$0xff] %v3006
    %3083 = vst [vmem:[#allocation4 + $0x28] sm:$0xff] %v3064
    %3084 = vst [vmem:[#allocation4 + $0x30] sm:$0xff] %v3008
    %3085 = vst [vmem:[#allocation4 + $0x38] sm:$0xff] %v3066
    %3086 = vst [vmem:[#allocation4 + $0x40] sm:$0xff] %v3011
    %3087 = vst [vmem:[#allocation4 + $0x48] sm:$0xff] %v3069
    %3088 = vst [vmem:[#allocation4 + $0x50] sm:$0xff] %v3013
    %3089 = vst [vmem:[#allocation4 + $0x58] sm:$0xff] %v3071
    %3090 = vst [vmem:[#allocation4 + $0x60] sm:$0xff] %v3016
    %3091 = vst [vmem:[#allocation4 + $0x68] sm:$0xff] %v3074
    %3092 = vst [vmem:[#allocation4 + $0x70] sm:$0xff] %v3018
    %3093 = vst [vmem:[#allocation4 + $0x78] sm:$0xff] %v3076
    %v3094 = vld [vmem:[%s0] sm:$0xff]
    %v3095 = vsub.s32 %v3094, 1
    %s3096 = smul.addr %s670, 8
    %s3097 = scalar_lea.vmem [#allocation4], %s3096
    %v3098 = vld [vmem:[%s3097] sm:$0xff]
    %v3099 = vld [vmem:[%s3097 + $0x8] sm:$0xff]
    %v3100 = vld [vmem:[#allocation13] sm:$0xff]
    %v3101 = vld [vmem:[#allocation13 + $0x8] sm:$0xff]
    %v3102 = vld [vmem:[#allocation13 + $0x10] sm:$0xff]
    %v3103 = vld [vmem:[#allocation13 + $0x18] sm:$0xff]
    %v3104 = vld [vmem:[#allocation13 + $0x20] sm:$0xff]
    %v3105 = vld [vmem:[#allocation13 + $0x28] sm:$0xff]
    %v3106 = vld [vmem:[#allocation13 + $0x30] sm:$0xff]
    %v3107 = vld [vmem:[#allocation13 + $0x38] sm:$0xff]
    %v3108 = vld [vmem:[#allocation13 + $0x40] sm:$0xff]
    %v3109 = vld [vmem:[#allocation13 + $0x48] sm:$0xff]
    %v3110 = vld [vmem:[#allocation13 + $0x50] sm:$0xff]
    %v3111 = vld [vmem:[#allocation13 + $0x58] sm:$0xff]
    %v3112 = vld [vmem:[#allocation13 + $0x60] sm:$0xff]
    %v3113 = vld [vmem:[#allocation13 + $0x68] sm:$0xff]
    %v3114 = vld [vmem:[#allocation13 + $0x70] sm:$0xff]
    %v3115 = vld [vmem:[#allocation13 + $0x78] sm:$0xff]
    %v3116 = vld [vmem:[#allocation13 + $0x80] sm:$0xff]
    %v3117 = vld [vmem:[#allocation13 + $0x88] sm:$0xff]
    %v3118 = vld [vmem:[#allocation13 + $0x90] sm:$0xff]
    %v3119 = vld [vmem:[#allocation13 + $0x98] sm:$0xff]
    %v3120 = vld [vmem:[#allocation13 + $0xa0] sm:$0xff]
    %v3121 = vld [vmem:[#allocation13 + $0xa8] sm:$0xff]
    %v3122 = vld [vmem:[#allocation13 + $0xb0] sm:$0xff]
    %v3123 = vld [vmem:[#allocation13 + $0xb8] sm:$0xff]
    %v3124 = vld [vmem:[#allocation13 + $0xc0] sm:$0xff]
    %v3125 = vld [vmem:[#allocation13 + $0xc8] sm:$0xff]
    %v3126 = vld [vmem:[#allocation13 + $0xd0] sm:$0xff]
    %v3127 = vld [vmem:[#allocation13 + $0xd8] sm:$0xff]
    %v3128 = vld [vmem:[#allocation13 + $0xe0] sm:$0xff]
    %v3129 = vld [vmem:[#allocation13 + $0xe8] sm:$0xff]
    %v3130 = vld [vmem:[#allocation13 + $0xf0] sm:$0xff]
    %v3131 = vld [vmem:[#allocation13 + $0xf8] sm:$0xff]
    %v3164 = vunpack.c.l.b16 %v3100
    %v3165 = vunpack.c.h.b16 %v3100
    %v3166 = vunpack.c.l.b16 %v3101
    %v3167 = vunpack.c.h.b16 %v3101
    %v3168 = vunpack.c.l.b16 %v3102
    %v3169 = vunpack.c.h.b16 %v3102
    %v3170 = vunpack.c.l.b16 %v3103
    %v3171 = vunpack.c.h.b16 %v3103
    %v3172 = vunpack.c.l.b16 %v3104
    %v3173 = vunpack.c.h.b16 %v3104
    %v3174 = vunpack.c.l.b16 %v3105
    %v3175 = vunpack.c.h.b16 %v3105
    %v3176 = vunpack.c.l.b16 %v3106
    %v3177 = vunpack.c.h.b16 %v3106
    %v3178 = vunpack.c.l.b16 %v3107
    %v3179 = vunpack.c.h.b16 %v3107
    %v3180 = vunpack.c.l.b16 %v3108
    %v3181 = vunpack.c.h.b16 %v3108
    %v3182 = vunpack.c.l.b16 %v3109
    %v3183 = vunpack.c.h.b16 %v3109
    %v3184 = vunpack.c.l.b16 %v3110
    %v3185 = vunpack.c.h.b16 %v3110
    %v3186 = vunpack.c.l.b16 %v3111
    %v3187 = vunpack.c.h.b16 %v3111
    %v3188 = vunpack.c.l.b16 %v3112
    %v3189 = vunpack.c.h.b16 %v3112
    %v3190 = vunpack.c.l.b16 %v3113
    %v3191 = vunpack.c.h.b16 %v3113
    %v3192 = vunpack.c.l.b16 %v3114
    %v3193 = vunpack.c.h.b16 %v3114
    %v3194 = vunpack.c.l.b16 %v3115
    %v3195 = vunpack.c.h.b16 %v3115
    %v3196 = vunpack.c.l.b16 %v3116
    %v3197 = vunpack.c.h.b16 %v3116
    %v3198 = vunpack.c.l.b16 %v3117
    %v3199 = vunpack.c.h.b16 %v3117
    %v3200 = vunpack.c.l.b16 %v3118
    %v3201 = vunpack.c.h.b16 %v3118
    %v3202 = vunpack.c.l.b16 %v3119
    %v3203 = vunpack.c.h.b16 %v3119
    %v3204 = vunpack.c.l.b16 %v3120
    %v3205 = vunpack.c.h.b16 %v3120
    %v3206 = vunpack.c.l.b16 %v3121
    %v3207 = vunpack.c.h.b16 %v3121
    %v3208 = vunpack.c.l.b16 %v3122
    %v3209 = vunpack.c.h.b16 %v3122
    %v3210 = vunpack.c.l.b16 %v3123
    %v3211 = vunpack.c.h.b16 %v3123
    %v3212 = vunpack.c.l.b16 %v3124
    %v3213 = vunpack.c.h.b16 %v3124
    %v3214 = vunpack.c.l.b16 %v3125
    %v3215 = vunpack.c.h.b16 %v3125
    %v3216 = vunpack.c.l.b16 %v3126
    %v3217 = vunpack.c.h.b16 %v3126
    %v3218 = vunpack.c.l.b16 %v3127
    %v3219 = vunpack.c.h.b16 %v3127
    %v3220 = vunpack.c.l.b16 %v3128
    %v3221 = vunpack.c.h.b16 %v3128
    %v3222 = vunpack.c.l.b16 %v3129
    %v3223 = vunpack.c.h.b16 %v3129
    %v3224 = vunpack.c.l.b16 %v3130
    %v3225 = vunpack.c.h.b16 %v3130
    %v3226 = vunpack.c.l.b16 %v3131
    %v3227 = vunpack.c.h.b16 %v3131
    %v3228 = vpack.c.b16 %v3166, %v3164
    %v3229 = vpack.c.b16 %v3167, %v3165
    %v3230 = vpack.c.b16 %v3170, %v3168
    %v3231 = vpack.c.b16 %v3171, %v3169
    %v3232 = vpack.c.b16 %v3174, %v3172
    %v3233 = vpack.c.b16 %v3175, %v3173
    %v3234 = vpack.c.b16 %v3178, %v3176
    %v3235 = vpack.c.b16 %v3179, %v3177
    %v3236 = vpack.c.b16 %v3182, %v3180
    %v3237 = vpack.c.b16 %v3183, %v3181
    %v3238 = vpack.c.b16 %v3186, %v3184
    %v3239 = vpack.c.b16 %v3187, %v3185
    %v3240 = vpack.c.b16 %v3190, %v3188
    %v3241 = vpack.c.b16 %v3191, %v3189
    %v3242 = vpack.c.b16 %v3194, %v3192
    %v3243 = vpack.c.b16 %v3195, %v3193
    %v3244 = vpack.c.b16 %v3198, %v3196
    %v3245 = vpack.c.b16 %v3199, %v3197
    %v3246 = vpack.c.b16 %v3202, %v3200
    %v3247 = vpack.c.b16 %v3203, %v3201
    %v3248 = vpack.c.b16 %v3206, %v3204
    %v3249 = vpack.c.b16 %v3207, %v3205
    %v3250 = vpack.c.b16 %v3210, %v3208
    %v3251 = vpack.c.b16 %v3211, %v3209
    %v3252 = vpack.c.b16 %v3214, %v3212
    %v3253 = vpack.c.b16 %v3215, %v3213
    %v3254 = vpack.c.b16 %v3218, %v3216
    %v3255 = vpack.c.b16 %v3219, %v3217
    %v3256 = vpack.c.b16 %v3222, %v3220
    %v3257 = vpack.c.b16 %v3223, %v3221
    %v3258 = vpack.c.b16 %v3226, %v3224
    %v3259 = vpack.c.b16 %v3227, %v3225
    %3292 = vmatpush.bf16.msra.mxu0 %v3242
    %3293 = vmatpush.bf16.msra.mxu0 %v3240
    %3294 = vmatpush.bf16.msra.mxu0 %v3238
    %3295 = vmatpush.bf16.msra.mxu0 %v3236
    %3296 = vmatpush.bf16.msra.mxu0 %v3234
    %3297 = vmatpush.bf16.msra.mxu0 %v3232
    %3298 = vmatpush.bf16.msra.mxu0 %v3230
    %3299 = vmatpush.bf16.msra.mxu0 %v3228
    %3300 = vmatmul.bf16.gmra.mxu0 0
    %v3301 = vpop.f32.mrf.mxu0
    %v3302 = vadd.f32 0.0, %v3301
    %v3303 = vpop.f32.mrf.mxu0
    %3304 = vdwg.mxu0
    %3305 = vmatpush.bf16.msra.mxu0 %v3258
    %3306 = vmatpush.bf16.msra.mxu0 %v3256
    %3307 = vmatpush.bf16.msra.mxu0 %v3254
    %3308 = vmatpush.bf16.msra.mxu0 %v3252
    %3309 = vmatpush.bf16.msra.mxu0 %v3250
    %3310 = vmatpush.bf16.msra.mxu0 %v3248
    %3311 = vmatpush.bf16.msra.mxu0 %v3246
    %3312 = vmatpush.bf16.msra.mxu0 %v3244
    %3313 = vmatmul.bf16.gmra.mxu0 0
    %v3314 = vpop.f32.mrf.mxu0
    %v3315 = vadd.f32 %v3302, %v3314
    %v3316 = vpop.f32.mrf.mxu0
    %3317 = vdwg.mxu0
    %3318 = vmatpush.bf16.msra.mxu0 %v3243
    %3319 = vmatpush.bf16.msra.mxu0 %v3241
    %3320 = vmatpush.bf16.msra.mxu0 %v3239
    %3321 = vmatpush.bf16.msra.mxu0 %v3237
    %3322 = vmatpush.bf16.msra.mxu0 %v3235
    %3323 = vmatpush.bf16.msra.mxu0 %v3233
    %3324 = vmatpush.bf16.msra.mxu0 %v3231
    %3325 = vmatpush.bf16.msra.mxu0 %v3229
    %3326 = vmatmul.bf16.gmra.mxu0 0
    %v3327 = vpop.f32.mrf.mxu0
    %v3328 = vadd.f32 0.0, %v3327
    %v3329 = vpop.f32.mrf.mxu0
    %3330 = vdwg.mxu0
    %3331 = vmatpush.bf16.msra.mxu0 %v3259
    %3332 = vmatpush.bf16.msra.mxu0 %v3257
    %3333 = vmatpush.bf16.msra.mxu0 %v3255
    %3334 = vmatpush.bf16.msra.mxu0 %v3253
    %3335 = vmatpush.bf16.msra.mxu0 %v3251
    %3336 = vmatpush.bf16.msra.mxu0 %v3249
    %3337 = vmatpush.bf16.msra.mxu0 %v3247
    %3338 = vmatpush.bf16.msra.mxu0 %v3245
    %3339 = vmatmul.bf16.gmra.mxu0 0
    %v3340 = vpop.f32.mrf.mxu0
    %v3341 = vadd.f32 %v3328, %v3340
    %v3342 = vpop.f32.mrf.mxu0
    %3343 = vdwg.mxu0
    %v3344 = vadd.f32 %v3098, %v3315
    %v3345 = vadd.f32 %v3099, %v3341
    %v3346 = vtanh.pop %v3344
    %v3347 = vtanh.pop %v3345
    %vm3348 = vcmp.eq.s32.totalorder %v3095, 0
    %v3349 = vsel %vm3348, 1, 0
    %3350 = vset.pattern.permute.xlu0 0
    %3351 = vperm.xlu0 %3350, %v3349
    %v3352 = vpop.permute.xlu0 %3351
    %vm3353 = vcmp.eq.s32.totalorder %v3352, 1
    %v3354 = vsel %vm3353, %v3346, 0.0
    %v3355 = vsel %vm3353, %v3347, 0.0
    %s3356 = smul.addr %s927, 8
    %s3357 = scalar_lea.vmem [#allocation4], %s3356
    %v3358 = vld [vmem:[%s3357] sm:$0xff]
    %v3359 = vld [vmem:[%s3357 + $0x8] sm:$0xff]
    %v3360 = vpack.c.bf16 %v3346, %v3346
    %v3361 = vpack.c.bf16 %v3347, %v3347
    %3362 = vmatpush.bf16.msra.mxu0 %v3242
    %3363 = vmatpush.bf16.msra.mxu0 %v3240
    %3364 = vmatpush.bf16.msra.mxu0 %v3238
    %3365 = vmatpush.bf16.msra.mxu0 %v3236
    %3366 = vmatpush.bf16.msra.mxu0 %v3234
    %3367 = vmatpush.bf16.msra.mxu0 %v3232
    %3368 = vmatpush.bf16.msra.mxu0 %v3230
    %3369 = vmatpush.bf16.msra.mxu0 %v3228
    %3370 = vmatmul.bf16.gmra.mxu0 %v3360
    %v3371 = vpop.f32.mrf.mxu0
    %v3372 = vadd.f32 0.0, %v3371
    %v3373 = vpop.f32.mrf.mxu0
    %3374 = vdwg.mxu0
    %3375 = vmatpush.bf16.msra.mxu0 %v3258
    %3376 = vmatpush.bf16.msra.mxu0 %v3256
    %3377 = vmatpush.bf16.msra.mxu0 %v3254
    %3378 = vmatpush.bf16.msra.mxu0 %v3252
    %3379 = vmatpush.bf16.msra.mxu0 %v3250
    %3380 = vmatpush.bf16.msra.mxu0 %v3248
    %3381 = vmatpush.bf16.msra.mxu0 %v3246
    %3382 = vmatpush.bf16.msra.mxu0 %v3244
    %3383 = vmatmul.bf16.gmra.mxu0 %v3361
    %v3384 = vpop.f32.mrf.mxu0
    %v3385 = vadd.f32 %v3372, %v3384
    %v3386 = vpop.f32.mrf.mxu0
    %3387 = vdwg.mxu0
    %3388 = vmatpush.bf16.msra.mxu0 %v3243
    %3389 = vmatpush.bf16.msra.mxu0 %v3241
    %3390 = vmatpush.bf16.msra.mxu0 %v3239
    %3391 = vmatpush.bf16.msra.mxu0 %v3237
    %3392 = vmatpush.bf16.msra.mxu0 %v3235
    %3393 = vmatpush.bf16.msra.mxu0 %v3233
    %3394 = vmatpush.bf16.msra.mxu0 %v3231
    %3395 = vmatpush.bf16.msra.mxu0 %v3229
    %3396 = vmatmul.bf16.gmra.mxu0 %v3360
    %v3397 = vpop.f32.mrf.mxu0
    %v3398 = vadd.f32 0.0, %v3397
    %v3399 = vpop.f32.mrf.mxu0
    %3400 = vdwg.mxu0
    %3401 = vmatpush.bf16.msra.mxu0 %v3259
    %3402 = vmatpush.bf16.msra.mxu0 %v3257
    %3403 = vmatpush.bf16.msra.mxu0 %v3255
    %3404 = vmatpush.bf16.msra.mxu0 %v3253
    %3405 = vmatpush.bf16.msra.mxu0 %v3251
    %3406 = vmatpush.bf16.msra.mxu0 %v3249
    %3407 = vmatpush.bf16.msra.mxu0 %v3247
    %3408 = vmatpush.bf16.msra.mxu0 %v3245
    %3409 = vmatmul.bf16.gmra.mxu0 %v3361
    %v3410 = vpop.f32.mrf.mxu0
    %v3411 = vadd.f32 %v3398, %v3410
    %v3412 = vpop.f32.mrf.mxu0
    %3413 = vdwg.mxu0
    %v3414 = vadd.f32 %v3358, %v3385
    %v3415 = vadd.f32 %v3359, %v3411
    %v3416 = vtanh.pop %v3414
    %v3417 = vtanh.pop %v3415
    %vm3418 = vcmp.eq.s32.totalorder %v3095, 1
    %v3419 = vsel %vm3418, 1, 0
    %3420 = vset.pattern.permute.xlu0 0
    %3421 = vperm.xlu0 %3420, %v3419
    %v3422 = vpop.permute.xlu0 %3421
    %vm3423 = vcmp.eq.s32.totalorder %v3422, 1
    %v3424 = vsel %vm3423, %v3416, %v3354
    %v3425 = vsel %vm3423, %v3417, %v3355
    %s3426 = smul.addr %s1186, 8
    %s3427 = scalar_lea.vmem [#allocation4], %s3426
    %v3428 = vld [vmem:[%s3427] sm:$0xff]
    %v3429 = vld [vmem:[%s3427 + $0x8] sm:$0xff]
    %v3430 = vpack.c.bf16 %v3416, %v3416
    %v3431 = vpack.c.bf16 %v3417, %v3417
    %3432 = vmatpush.bf16.msra.mxu0 %v3242
    %3433 = vmatpush.bf16.msra.mxu0 %v3240
    %3434 = vmatpush.bf16.msra.mxu0 %v3238
    %3435 = vmatpush.bf16.msra.mxu0 %v3236
    %3436 = vmatpush.bf16.msra.mxu0 %v3234
    %3437 = vmatpush.bf16.msra.mxu0 %v3232
    %3438 = vmatpush.bf16.msra.mxu0 %v3230
    %3439 = vmatpush.bf16.msra.mxu0 %v3228
    %3440 = vmatmul.bf16.gmra.mxu0 %v3430
    %v3441 = vpop.f32.mrf.mxu0
    %v3442 = vadd.f32 0.0, %v3441
    %v3443 = vpop.f32.mrf.mxu0
    %3444 = vdwg.mxu0
    %3445 = vmatpush.bf16.msra.mxu0 %v3258
    %3446 = vmatpush.bf16.msra.mxu0 %v3256
    %3447 = vmatpush.bf16.msra.mxu0 %v3254
    %3448 = vmatpush.bf16.msra.mxu0 %v3252
    %3449 = vmatpush.bf16.msra.mxu0 %v3250
    %3450 = vmatpush.bf16.msra.mxu0 %v3248
    %3451 = vmatpush.bf16.msra.mxu0 %v3246
    %3452 = vmatpush.bf16.msra.mxu0 %v3244
    %3453 = vmatmul.bf16.gmra.mxu0 %v3431
    %v3454 = vpop.f32.mrf.mxu0
    %v3455 = vadd.f32 %v3442, %v3454
    %v3456 = vpop.f32.mrf.mxu0
    %3457 = vdwg.mxu0
    %3458 = vmatpush.bf16.msra.mxu0 %v3243
    %3459 = vmatpush.bf16.msra.mxu0 %v3241
    %3460 = vmatpush.bf16.msra.mxu0 %v3239
    %3461 = vmatpush.bf16.msra.mxu0 %v3237
    %3462 = vmatpush.bf16.msra.mxu0 %v3235
    %3463 = vmatpush.bf16.msra.mxu0 %v3233
    %3464 = vmatpush.bf16.msra.mxu0 %v3231
    %3465 = vmatpush.bf16.msra.mxu0 %v3229
    %3466 = vmatmul.bf16.gmra.mxu0 %v3430
    %v3467 = vpop.f32.mrf.mxu0
    %v3468 = vadd.f32 0.0, %v3467
    %v3469 = vpop.f32.mrf.mxu0
    %3470 = vdwg.mxu0
    %3471 = vmatpush.bf16.msra.mxu0 %v3259
    %3472 = vmatpush.bf16.msra.mxu0 %v3257
    %3473 = vmatpush.bf16.msra.mxu0 %v3255
    %3474 = vmatpush.bf16.msra.mxu0 %v3253
    %3475 = vmatpush.bf16.msra.mxu0 %v3251
    %3476 = vmatpush.bf16.msra.mxu0 %v3249
    %3477 = vmatpush.bf16.msra.mxu0 %v3247
    %3478 = vmatpush.bf16.msra.mxu0 %v3245
    %3479 = vmatmul.bf16.gmra.mxu0 %v3431
    %v3480 = vpop.f32.mrf.mxu0
    %v3481 = vadd.f32 %v3468, %v3480
    %v3482 = vpop.f32.mrf.mxu0
    %3483 = vdwg.mxu0
    %v3484 = vadd.f32 %v3428, %v3455
    %v3485 = vadd.f32 %v3429, %v3481
    %v3486 = vtanh.pop %v3484
    %v3487 = vtanh.pop %v3485
    %vm3488 = vcmp.eq.s32.totalorder %v3095, 2
    %v3489 = vsel %vm3488, 1, 0
    %3490 = vset.pattern.permute.xlu0 0
    %3491 = vperm.xlu0 %3490, %v3489
    %v3492 = vpop.permute.xlu0 %3491
    %vm3493 = vcmp.eq.s32.totalorder %v3492, 1
    %v3494 = vsel %vm3493, %v3486, %v3424
    %v3495 = vsel %vm3493, %v3487, %v3425
    %s3496 = smul.addr %s1445, 8
    %s3497 = scalar_lea.vmem [#allocation4], %s3496
    %v3498 = vld [vmem:[%s3497] sm:$0xff]
    %v3499 = vld [vmem:[%s3497 + $0x8] sm:$0xff]
    %v3500 = vpack.c.bf16 %v3486, %v3486
    %v3501 = vpack.c.bf16 %v3487, %v3487
    %3502 = vmatpush.bf16.msra.mxu0 %v3242
    %3503 = vmatpush.bf16.msra.mxu0 %v3240
    %3504 = vmatpush.bf16.msra.mxu0 %v3238
    %3505 = vmatpush.bf16.msra.mxu0 %v3236
    %3506 = vmatpush.bf16.msra.mxu0 %v3234
    %3507 = vmatpush.bf16.msra.mxu0 %v3232
    %3508 = vmatpush.bf16.msra.mxu0 %v3230
    %3509 = vmatpush.bf16.msra.mxu0 %v3228
    %3510 = vmatmul.bf16.gmra.mxu0 %v3500
    %v3511 = vpop.f32.mrf.mxu0
    %v3512 = vadd.f32 0.0, %v3511
    %v3513 = vpop.f32.mrf.mxu0
    %3514 = vdwg.mxu0
    %3515 = vmatpush.bf16.msra.mxu0 %v3258
    %3516 = vmatpush.bf16.msra.mxu0 %v3256
    %3517 = vmatpush.bf16.msra.mxu0 %v3254
    %3518 = vmatpush.bf16.msra.mxu0 %v3252
    %3519 = vmatpush.bf16.msra.mxu0 %v3250
    %3520 = vmatpush.bf16.msra.mxu0 %v3248
    %3521 = vmatpush.bf16.msra.mxu0 %v3246
    %3522 = vmatpush.bf16.msra.mxu0 %v3244
    %3523 = vmatmul.bf16.gmra.mxu0 %v3501
    %v3524 = vpop.f32.mrf.mxu0
    %v3525 = vadd.f32 %v3512, %v3524
    %v3526 = vpop.f32.mrf.mxu0
    %3527 = vdwg.mxu0
    %3528 = vmatpush.bf16.msra.mxu0 %v3243
    %3529 = vmatpush.bf16.msra.mxu0 %v3241
    %3530 = vmatpush.bf16.msra.mxu0 %v3239
    %3531 = vmatpush.bf16.msra.mxu0 %v3237
    %3532 = vmatpush.bf16.msra.mxu0 %v3235
    %3533 = vmatpush.bf16.msra.mxu0 %v3233
    %3534 = vmatpush.bf16.msra.mxu0 %v3231
    %3535 = vmatpush.bf16.msra.mxu0 %v3229
    %3536 = vmatmul.bf16.gmra.mxu0 %v3500
    %v3537 = vpop.f32.mrf.mxu0
    %v3538 = vadd.f32 0.0, %v3537
    %v3539 = vpop.f32.mrf.mxu0
    %3540 = vdwg.mxu0
    %3541 = vmatpush.bf16.msra.mxu0 %v3259
    %3542 = vmatpush.bf16.msra.mxu0 %v3257
    %3543 = vmatpush.bf16.msra.mxu0 %v3255
    %3544 = vmatpush.bf16.msra.mxu0 %v3253
    %3545 = vmatpush.bf16.msra.mxu0 %v3251
    %3546 = vmatpush.bf16.msra.mxu0 %v3249
    %3547 = vmatpush.bf16.msra.mxu0 %v3247
    %3548 = vmatpush.bf16.msra.mxu0 %v3245
    %3549 = vmatmul.bf16.gmra.mxu0 %v3501
    %v3550 = vpop.f32.mrf.mxu0
    %v3551 = vadd.f32 %v3538, %v3550
    %v3552 = vpop.f32.mrf.mxu0
    %3553 = vdwg.mxu0
    %v3554 = vadd.f32 %v3498, %v3525
    %v3555 = vadd.f32 %v3499, %v3551
    %v3556 = vtanh.pop %v3554
    %v3557 = vtanh.pop %v3555
    %vm3558 = vcmp.eq.s32.totalorder %v3095, 3
    %v3559 = vsel %vm3558, 1, 0
    %3560 = vset.pattern.permute.xlu0 0
    %3561 = vperm.xlu0 %3560, %v3559
    %v3562 = vpop.permute.xlu0 %3561
    %vm3563 = vcmp.eq.s32.totalorder %v3562, 1
    %v3564 = vsel %vm3563, %v3556, %v3494
    %v3565 = vsel %vm3563, %v3557, %v3495
    %s3566 = smul.addr %s1704, 8
    %s3567 = scalar_lea.vmem [#allocation4], %s3566
    %v3568 = vld [vmem:[%s3567] sm:$0xff]
    %v3569 = vld [vmem:[%s3567 + $0x8] sm:$0xff]
    %v3570 = vpack.c.bf16 %v3556, %v3556
    %v3571 = vpack.c.bf16 %v3557, %v3557
    %3572 = vmatpush.bf16.msra.mxu0 %v3242
    %3573 = vmatpush.bf16.msra.mxu0 %v3240
    %3574 = vmatpush.bf16.msra.mxu0 %v3238
    %3575 = vmatpush.bf16.msra.mxu0 %v3236
    %3576 = vmatpush.bf16.msra.mxu0 %v3234
    %3577 = vmatpush.bf16.msra.mxu0 %v3232
    %3578 = vmatpush.bf16.msra.mxu0 %v3230
    %3579 = vmatpush.bf16.msra.mxu0 %v3228
    %3580 = vmatmul.bf16.gmra.mxu0 %v3570
    %v3581 = vpop.f32.mrf.mxu0
    %v3582 = vadd.f32 0.0, %v3581
    %v3583 = vpop.f32.mrf.mxu0
    %3584 = vdwg.mxu0
    %3585 = vmatpush.bf16.msra.mxu0 %v3258
    %3586 = vmatpush.bf16.msra.mxu0 %v3256
    %3587 = vmatpush.bf16.msra.mxu0 %v3254
    %3588 = vmatpush.bf16.msra.mxu0 %v3252
    %3589 = vmatpush.bf16.msra.mxu0 %v3250
    %3590 = vmatpush.bf16.msra.mxu0 %v3248
    %3591 = vmatpush.bf16.msra.mxu0 %v3246
    %3592 = vmatpush.bf16.msra.mxu0 %v3244
    %3593 = vmatmul.bf16.gmra.mxu0 %v3571
    %v3594 = vpop.f32.mrf.mxu0
    %v3595 = vadd.f32 %v3582, %v3594
    %v3596 = vpop.f32.mrf.mxu0
    %3597 = vdwg.mxu0
    %3598 = vmatpush.bf16.msra.mxu0 %v3243
    %3599 = vmatpush.bf16.msra.mxu0 %v3241
    %3600 = vmatpush.bf16.msra.mxu0 %v3239
    %3601 = vmatpush.bf16.msra.mxu0 %v3237
    %3602 = vmatpush.bf16.msra.mxu0 %v3235
    %3603 = vmatpush.bf16.msra.mxu0 %v3233
    %3604 = vmatpush.bf16.msra.mxu0 %v3231
    %3605 = vmatpush.bf16.msra.mxu0 %v3229
    %3606 = vmatmul.bf16.gmra.mxu0 %v3570
    %v3607 = vpop.f32.mrf.mxu0
    %v3608 = vadd.f32 0.0, %v3607
    %v3609 = vpop.f32.mrf.mxu0
    %3610 = vdwg.mxu0
    %3611 = vmatpush.bf16.msra.mxu0 %v3259
    %3612 = vmatpush.bf16.msra.mxu0 %v3257
    %3613 = vmatpush.bf16.msra.mxu0 %v3255
    %3614 = vmatpush.bf16.msra.mxu0 %v3253
    %3615 = vmatpush.bf16.msra.mxu0 %v3251
    %3616 = vmatpush.bf16.msra.mxu0 %v3249
    %3617 = vmatpush.bf16.msra.mxu0 %v3247
    %3618 = vmatpush.bf16.msra.mxu0 %v3245
    %3619 = vmatmul.bf16.gmra.mxu0 %v3571
    %v3620 = vpop.f32.mrf.mxu0
    %v3621 = vadd.f32 %v3608, %v3620
    %v3622 = vpop.f32.mrf.mxu0
    %3623 = vdwg.mxu0
    %v3624 = vadd.f32 %v3568, %v3595
    %v3625 = vadd.f32 %v3569, %v3621
    %v3626 = vtanh.pop %v3624
    %v3627 = vtanh.pop %v3625
    %vm3628 = vcmp.eq.s32.totalorder %v3095, 4
    %v3629 = vsel %vm3628, 1, 0
    %3630 = vset.pattern.permute.xlu0 0
    %3631 = vperm.xlu0 %3630, %v3629
    %v3632 = vpop.permute.xlu0 %3631
    %vm3633 = vcmp.eq.s32.totalorder %v3632, 1
    %v3634 = vsel %vm3633, %v3626, %v3564
    %v3635 = vsel %vm3633, %v3627, %v3565
    %s3636 = smul.addr %s1963, 8
    %s3637 = scalar_lea.vmem [#allocation4], %s3636
    %v3638 = vld [vmem:[%s3637] sm:$0xff]
    %v3639 = vld [vmem:[%s3637 + $0x8] sm:$0xff]
    %v3640 = vpack.c.bf16 %v3626, %v3626
    %v3641 = vpack.c.bf16 %v3627, %v3627
    %3642 = vmatpush.bf16.msra.mxu0 %v3242
    %3643 = vmatpush.bf16.msra.mxu0 %v3240
    %3644 = vmatpush.bf16.msra.mxu0 %v3238
    %3645 = vmatpush.bf16.msra.mxu0 %v3236
    %3646 = vmatpush.bf16.msra.mxu0 %v3234
    %3647 = vmatpush.bf16.msra.mxu0 %v3232
    %3648 = vmatpush.bf16.msra.mxu0 %v3230
    %3649 = vmatpush.bf16.msra.mxu0 %v3228
    %3650 = vmatmul.bf16.gmra.mxu0 %v3640
    %v3651 = vpop.f32.mrf.mxu0
    %v3652 = vadd.f32 0.0, %v3651
    %v3653 = vpop.f32.mrf.mxu0
    %3654 = vdwg.mxu0
    %3655 = vmatpush.bf16.msra.mxu0 %v3258
    %3656 = vmatpush.bf16.msra.mxu0 %v3256
    %3657 = vmatpush.bf16.msra.mxu0 %v3254
    %3658 = vmatpush.bf16.msra.mxu0 %v3252
    %3659 = vmatpush.bf16.msra.mxu0 %v3250
    %3660 = vmatpush.bf16.msra.mxu0 %v3248
    %3661 = vmatpush.bf16.msra.mxu0 %v3246
    %3662 = vmatpush.bf16.msra.mxu0 %v3244
    %3663 = vmatmul.bf16.gmra.mxu0 %v3641
    %v3664 = vpop.f32.mrf.mxu0
    %v3665 = vadd.f32 %v3652, %v3664
    %v3666 = vpop.f32.mrf.mxu0
    %3667 = vdwg.mxu0
    %3668 = vmatpush.bf16.msra.mxu0 %v3243
    %3669 = vmatpush.bf16.msra.mxu0 %v3241
    %3670 = vmatpush.bf16.msra.mxu0 %v3239
    %3671 = vmatpush.bf16.msra.mxu0 %v3237
    %3672 = vmatpush.bf16.msra.mxu0 %v3235
    %3673 = vmatpush.bf16.msra.mxu0 %v3233
    %3674 = vmatpush.bf16.msra.mxu0 %v3231
    %3675 = vmatpush.bf16.msra.mxu0 %v3229
    %3676 = vmatmul.bf16.gmra.mxu0 %v3640
    %v3677 = vpop.f32.mrf.mxu0
    %v3678 = vadd.f32 0.0, %v3677
    %v3679 = vpop.f32.mrf.mxu0
    %3680 = vdwg.mxu0
    %3681 = vmatpush.bf16.msra.mxu0 %v3259
    %3682 = vmatpush.bf16.msra.mxu0 %v3257
    %3683 = vmatpush.bf16.msra.mxu0 %v3255
    %3684 = vmatpush.bf16.msra.mxu0 %v3253
    %3685 = vmatpush.bf16.msra.mxu0 %v3251
    %3686 = vmatpush.bf16.msra.mxu0 %v3249
    %3687 = vmatpush.bf16.msra.mxu0 %v3247
    %3688 = vmatpush.bf16.msra.mxu0 %v3245
    %3689 = vmatmul.bf16.gmra.mxu0 %v3641
    %v3690 = vpop.f32.mrf.mxu0
    %v3691 = vadd.f32 %v3678, %v3690
    %v3692 = vpop.f32.mrf.mxu0
    %3693 = vdwg.mxu0
    %v3694 = vadd.f32 %v3638, %v3665
    %v3695 = vadd.f32 %v3639, %v3691
    %v3696 = vtanh.pop %v3694
    %v3697 = vtanh.pop %v3695
    %vm3698 = vcmp.eq.s32.totalorder %v3095, 5
    %v3699 = vsel %vm3698, 1, 0
    %3700 = vset.pattern.permute.xlu0 0
    %3701 = vperm.xlu0 %3700, %v3699
    %v3702 = vpop.permute.xlu0 %3701
    %vm3703 = vcmp.eq.s32.totalorder %v3702, 1
    %v3704 = vsel %vm3703, %v3696, %v3634
    %v3705 = vsel %vm3703, %v3697, %v3635
    %s3706 = smul.addr %s2222, 8
    %s3707 = scalar_lea.vmem [#allocation4], %s3706
    %v3708 = vld [vmem:[%s3707] sm:$0xff]
    %v3709 = vld [vmem:[%s3707 + $0x8] sm:$0xff]
    %v3710 = vpack.c.bf16 %v3696, %v3696
    %v3711 = vpack.c.bf16 %v3697, %v3697
    %3712 = vmatpush.bf16.msra.mxu0 %v3242
    %3713 = vmatpush.bf16.msra.mxu0 %v3240
    %3714 = vmatpush.bf16.msra.mxu0 %v3238
    %3715 = vmatpush.bf16.msra.mxu0 %v3236
    %3716 = vmatpush.bf16.msra.mxu0 %v3234
    %3717 = vmatpush.bf16.msra.mxu0 %v3232
    %3718 = vmatpush.bf16.msra.mxu0 %v3230
    %3719 = vmatpush.bf16.msra.mxu0 %v3228
    %3720 = vmatmul.bf16.gmra.mxu0 %v3710
    %v3721 = vpop.f32.mrf.mxu0
    %v3722 = vadd.f32 0.0, %v3721
    %v3723 = vpop.f32.mrf.mxu0
    %3724 = vdwg.mxu0
    %3725 = vmatpush.bf16.msra.mxu0 %v3258
    %3726 = vmatpush.bf16.msra.mxu0 %v3256
    %3727 = vmatpush.bf16.msra.mxu0 %v3254
    %3728 = vmatpush.bf16.msra.mxu0 %v3252
    %3729 = vmatpush.bf16.msra.mxu0 %v3250
    %3730 = vmatpush.bf16.msra.mxu0 %v3248
    %3731 = vmatpush.bf16.msra.mxu0 %v3246
    %3732 = vmatpush.bf16.msra.mxu0 %v3244
    %3733 = vmatmul.bf16.gmra.mxu0 %v3711
    %v3734 = vpop.f32.mrf.mxu0
    %v3735 = vadd.f32 %v3722, %v3734
    %v3736 = vpop.f32.mrf.mxu0
    %3737 = vdwg.mxu0
    %3738 = vmatpush.bf16.msra.mxu0 %v3243
    %3739 = vmatpush.bf16.msra.mxu0 %v3241
    %3740 = vmatpush.bf16.msra.mxu0 %v3239
    %3741 = vmatpush.bf16.msra.mxu0 %v3237
    %3742 = vmatpush.bf16.msra.mxu0 %v3235
    %3743 = vmatpush.bf16.msra.mxu0 %v3233
    %3744 = vmatpush.bf16.msra.mxu0 %v3231
    %3745 = vmatpush.bf16.msra.mxu0 %v3229
    %3746 = vmatmul.bf16.gmra.mxu0 %v3710
    %v3747 = vpop.f32.mrf.mxu0
    %v3748 = vadd.f32 0.0, %v3747
    %v3749 = vpop.f32.mrf.mxu0
    %3750 = vdwg.mxu0
    %3751 = vmatpush.bf16.msra.mxu0 %v3259
    %3752 = vmatpush.bf16.msra.mxu0 %v3257
    %3753 = vmatpush.bf16.msra.mxu0 %v3255
    %3754 = vmatpush.bf16.msra.mxu0 %v3253
    %3755 = vmatpush.bf16.msra.mxu0 %v3251
    %3756 = vmatpush.bf16.msra.mxu0 %v3249
    %3757 = vmatpush.bf16.msra.mxu0 %v3247
    %3758 = vmatpush.bf16.msra.mxu0 %v3245
    %3759 = vmatmul.bf16.gmra.mxu0 %v3711
    %v3760 = vpop.f32.mrf.mxu0
    %v3761 = vadd.f32 %v3748, %v3760
    %v3762 = vpop.f32.mrf.mxu0
    %3763 = vdwg.mxu0
    %v3764 = vadd.f32 %v3708, %v3735
    %v3765 = vadd.f32 %v3709, %v3761
    %v3766 = vtanh.pop %v3764
    %v3767 = vtanh.pop %v3765
    %vm3768 = vcmp.eq.s32.totalorder %v3095, 6
    %v3769 = vsel %vm3768, 1, 0
    %3770 = vset.pattern.permute.xlu0 0
    %3771 = vperm.xlu0 %3770, %v3769
    %v3772 = vpop.permute.xlu0 %3771
    %vm3773 = vcmp.eq.s32.totalorder %v3772, 1
    %v3774 = vsel %vm3773, %v3766, %v3704
    %v3775 = vsel %vm3773, %v3767, %v3705
    %s3776 = smul.addr %s2481, 8
    %s3777 = scalar_lea.vmem [#allocation4], %s3776
    %v3778 = vld [vmem:[%s3777] sm:$0xff]
    %v3779 = vld [vmem:[%s3777 + $0x8] sm:$0xff]
    %v3780 = vpack.c.bf16 %v3766, %v3766
    %v3781 = vpack.c.bf16 %v3767, %v3767
    %3782 = vmatpush.bf16.msra.mxu0 %v3242
    %3783 = vmatpush.bf16.msra.mxu0 %v3240
    %3784 = vmatpush.bf16.msra.mxu0 %v3238
    %3785 = vmatpush.bf16.msra.mxu0 %v3236
    %3786 = vmatpush.bf16.msra.mxu0 %v3234
    %3787 = vmatpush.bf16.msra.mxu0 %v3232
    %3788 = vmatpush.bf16.msra.mxu0 %v3230
    %3789 = vmatpush.bf16.msra.mxu0 %v3228
    %3790 = vmatmul.bf16.gmra.mxu0 %v3780
    %v3791 = vpop.f32.mrf.mxu0
    %v3792 = vadd.f32 0.0, %v3791
    %v3793 = vpop.f32.mrf.mxu0
    %3794 = vdwg.mxu0
    %3795 = vmatpush.bf16.msra.mxu0 %v3258
    %3796 = vmatpush.bf16.msra.mxu0 %v3256
    %3797 = vmatpush.bf16.msra.mxu0 %v3254
    %3798 = vmatpush.bf16.msra.mxu0 %v3252
    %3799 = vmatpush.bf16.msra.mxu0 %v3250
    %3800 = vmatpush.bf16.msra.mxu0 %v3248
    %3801 = vmatpush.bf16.msra.mxu0 %v3246
    %3802 = vmatpush.bf16.msra.mxu0 %v3244
    %3803 = vmatmul.bf16.gmra.mxu0 %v3781
    %v3804 = vpop.f32.mrf.mxu0
    %v3805 = vadd.f32 %v3792, %v3804
    %v3806 = vpop.f32.mrf.mxu0
    %3807 = vdwg.mxu0
    %3808 = vmatpush.bf16.msra.mxu0 %v3243
    %3809 = vmatpush.bf16.msra.mxu0 %v3241
    %3810 = vmatpush.bf16.msra.mxu0 %v3239
    %3811 = vmatpush.bf16.msra.mxu0 %v3237
    %3812 = vmatpush.bf16.msra.mxu0 %v3235
    %3813 = vmatpush.bf16.msra.mxu0 %v3233
    %3814 = vmatpush.bf16.msra.mxu0 %v3231
    %3815 = vmatpush.bf16.msra.mxu0 %v3229
    %3816 = vmatmul.bf16.gmra.mxu0 %v3780
    %v3817 = vpop.f32.mrf.mxu0
    %v3818 = vadd.f32 0.0, %v3817
    %v3819 = vpop.f32.mrf.mxu0
    %3820 = vdwg.mxu0
    %3821 = vmatpush.bf16.msra.mxu0 %v3259
    %3822 = vmatpush.bf16.msra.mxu0 %v3257
    %3823 = vmatpush.bf16.msra.mxu0 %v3255
    %3824 = vmatpush.bf16.msra.mxu0 %v3253
    %3825 = vmatpush.bf16.msra.mxu0 %v3251
    %3826 = vmatpush.bf16.msra.mxu0 %v3249
    %3827 = vmatpush.bf16.msra.mxu0 %v3247
    %3828 = vmatpush.bf16.msra.mxu0 %v3245
    %3829 = vmatmul.bf16.gmra.mxu0 %v3781
    %v3830 = vpop.f32.mrf.mxu0
    %v3831 = vadd.f32 %v3818, %v3830
    %v3832 = vpop.f32.mrf.mxu0
    %3833 = vdwg.mxu0
    %v3834 = vadd.f32 %v3778, %v3805
    %v3835 = vadd.f32 %v3779, %v3831
    %v3836 = vtanh.pop %v3834
    %v3837 = vtanh.pop %v3835
    %vm3838 = vcmp.eq.s32.totalorder %v3095, 7
    %v3839 = vsel %vm3838, 1, 0
    %3840 = vset.pattern.permute.xlu0 0
    %3841 = vperm.xlu0 %3840, %v3839
    %v3842 = vpop.permute.xlu0 %3841
    %vm3843 = vcmp.eq.s32.totalorder %v3842, 1
    %v3844 = vsel %vm3843, %v3836, %v3774
    %v3845 = vsel %vm3843, %v3837, %v3775
    %v3846 = vpack.c.bf16 %v3844, %v3844
    %v3847 = vpack.c.bf16 %v3845, %v3845
    %v3848 = vld [vmem:[#allocation14] sm:$0xff]
    %v3849 = vld [vmem:[#allocation14 + $0x8] sm:$0xff]
    %v3850 = vld [vmem:[#allocation14 + $0x10] sm:$0xff]
    %v3851 = vld [vmem:[#allocation14 + $0x18] sm:$0xff]
    %v3852 = vld [vmem:[#allocation14 + $0x20] sm:$0xff]
    %v3853 = vld [vmem:[#allocation14 + $0x28] sm:$0xff]
    %v3854 = vld [vmem:[#allocation14 + $0x30] sm:$0xff]
    %v3855 = vld [vmem:[#allocation14 + $0x38] sm:$0xff]
    %v3856 = vld [vmem:[#allocation14 + $0x40] sm:$0xff]
    %v3857 = vld [vmem:[#allocation14 + $0x48] sm:$0xff]
    %v3858 = vld [vmem:[#allocation14 + $0x50] sm:$0xff]
    %v3859 = vld [vmem:[#allocation14 + $0x58] sm:$0xff]
    %v3860 = vld [vmem:[#allocation14 + $0x60] sm:$0xff]
    %v3861 = vld [vmem:[#allocation14 + $0x68] sm:$0xff]
    %v3862 = vld [vmem:[#allocation14 + $0x70] sm:$0xff]
    %v3863 = vld [vmem:[#allocation14 + $0x78] sm:$0xff]
    %v3864 = vld [vmem:[#allocation14 + $0x80] sm:$0xff]
    %v3865 = vld [vmem:[#allocation14 + $0x88] sm:$0xff]
    %v3866 = vld [vmem:[#allocation14 + $0x90] sm:$0xff]
    %v3867 = vld [vmem:[#allocation14 + $0x98] sm:$0xff]
    %v3868 = vld [vmem:[#allocation14 + $0xa0] sm:$0xff]
    %v3869 = vld [vmem:[#allocation14 + $0xa8] sm:$0xff]
    %v3870 = vld [vmem:[#allocation14 + $0xb0] sm:$0xff]
    %v3871 = vld [vmem:[#allocation14 + $0xb8] sm:$0xff]
    %v3872 = vld [vmem:[#allocation14 + $0xc0] sm:$0xff]
    %v3873 = vld [vmem:[#allocation14 + $0xc8] sm:$0xff]
    %v3874 = vld [vmem:[#allocation14 + $0xd0] sm:$0xff]
    %v3875 = vld [vmem:[#allocation14 + $0xd8] sm:$0xff]
    %v3876 = vld [vmem:[#allocation14 + $0xe0] sm:$0xff]
    %v3877 = vld [vmem:[#allocation14 + $0xe8] sm:$0xff]
    %v3878 = vld [vmem:[#allocation14 + $0xf0] sm:$0xff]
    %v3879 = vld [vmem:[#allocation14 + $0xf8] sm:$0xff]
    %v3880 = vld [vmem:[%s9] sm:$0x3]
    %v3882 = vperm.slane %v3880, 0
    %v3883 = vperm.slane %v3880, 1
    %v3918 = vunpack.c.l.b16 %v3848
    %v3919 = vunpack.c.h.b16 %v3848
    %v3920 = vunpack.c.l.b16 %v3849
    %v3921 = vunpack.c.h.b16 %v3849
    %v3922 = vunpack.c.l.b16 %v3850
    %v3923 = vunpack.c.h.b16 %v3850
    %v3924 = vunpack.c.l.b16 %v3851
    %v3925 = vunpack.c.h.b16 %v3851
    %v3926 = vunpack.c.l.b16 %v3852
    %v3927 = vunpack.c.h.b16 %v3852
    %v3928 = vunpack.c.l.b16 %v3853
    %v3929 = vunpack.c.h.b16 %v3853
    %v3930 = vunpack.c.l.b16 %v3854
    %v3931 = vunpack.c.h.b16 %v3854
    %v3932 = vunpack.c.l.b16 %v3855
    %v3933 = vunpack.c.h.b16 %v3855
    %v3934 = vunpack.c.l.b16 %v3856
    %v3935 = vunpack.c.h.b16 %v3856
    %v3936 = vunpack.c.l.b16 %v3857
    %v3937 = vunpack.c.h.b16 %v3857
    %v3938 = vunpack.c.l.b16 %v3858
    %v3939 = vunpack.c.h.b16 %v3858
    %v3940 = vunpack.c.l.b16 %v3859
    %v3941 = vunpack.c.h.b16 %v3859
    %v3942 = vunpack.c.l.b16 %v3860
    %v3943 = vunpack.c.h.b16 %v3860
    %v3944 = vunpack.c.l.b16 %v3861
    %v3945 = vunpack.c.h.b16 %v3861
    %v3946 = vunpack.c.l.b16 %v3862
    %v3947 = vunpack.c.h.b16 %v3862
    %v3948 = vunpack.c.l.b16 %v3863
    %v3949 = vunpack.c.h.b16 %v3863
    %v3950 = vunpack.c.l.b16 %v3864
    %v3951 = vunpack.c.h.b16 %v3864
    %v3952 = vunpack.c.l.b16 %v3865
    %v3953 = vunpack.c.h.b16 %v3865
    %v3954 = vunpack.c.l.b16 %v3866
    %v3955 = vunpack.c.h.b16 %v3866
    %v3956 = vunpack.c.l.b16 %v3867
    %v3957 = vunpack.c.h.b16 %v3867
    %v3958 = vunpack.c.l.b16 %v3868
    %v3959 = vunpack.c.h.b16 %v3868
    %v3960 = vunpack.c.l.b16 %v3869
    %v3961 = vunpack.c.h.b16 %v3869
    %v3962 = vunpack.c.l.b16 %v3870
    %v3963 = vunpack.c.h.b16 %v3870
    %v3964 = vunpack.c.l.b16 %v3871
    %v3965 = vunpack.c.h.b16 %v3871
    %v3966 = vunpack.c.l.b16 %v3872
    %v3967 = vunpack.c.h.b16 %v3872
    %v3968 = vunpack.c.l.b16 %v3873
    %v3969 = vunpack.c.h.b16 %v3873
    %v3970 = vunpack.c.l.b16 %v3874
    %v3971 = vunpack.c.h.b16 %v3874
    %v3972 = vunpack.c.l.b16 %v3875
    %v3973 = vunpack.c.h.b16 %v3875
    %v3974 = vunpack.c.l.b16 %v3876
    %v3975 = vunpack.c.h.b16 %v3876
    %v3976 = vunpack.c.l.b16 %v3877
    %v3977 = vunpack.c.h.b16 %v3877
    %v3978 = vunpack.c.l.b16 %v3878
    %v3979 = vunpack.c.h.b16 %v3878
    %v3980 = vunpack.c.l.b16 %v3879
    %v3981 = vunpack.c.h.b16 %v3879
    %v3982 = vpack.c.b16 %v3920, %v3918
    %v3983 = vpack.c.b16 %v3921, %v3919
    %v3984 = vpack.c.b16 %v3924, %v3922
    %v3985 = vpack.c.b16 %v3925, %v3923
    %v3986 = vpack.c.b16 %v3928, %v3926
    %v3987 = vpack.c.b16 %v3929, %v3927
    %v3988 = vpack.c.b16 %v3932, %v3930
    %v3989 = vpack.c.b16 %v3933, %v3931
    %v3990 = vpack.c.b16 %v3936, %v3934
    %v3991 = vpack.c.b16 %v3937, %v3935
    %v3992 = vpack.c.b16 %v3940, %v3938
    %v3993 = vpack.c.b16 %v3941, %v3939
    %v3994 = vpack.c.b16 %v3944, %v3942
    %v3995 = vpack.c.b16 %v3945, %v3943
    %v3996 = vpack.c.b16 %v3948, %v3946
    %v3997 = vpack.c.b16 %v3949, %v3947
    %v3998 = vpack.c.b16 %v3952, %v3950
    %v3999 = vpack.c.b16 %v3953, %v3951
    %v4000 = vpack.c.b16 %v3956, %v3954
    %v4001 = vpack.c.b16 %v3957, %v3955
    %v4002 = vpack.c.b16 %v3960, %v3958
    %v4003 = vpack.c.b16 %v3961, %v3959
    %v4004 = vpack.c.b16 %v3964, %v3962
    %v4005 = vpack.c.b16 %v3965, %v3963
    %v4006 = vpack.c.b16 %v3968, %v3966
    %v4007 = vpack.c.b16 %v3969, %v3967
    %v4008 = vpack.c.b16 %v3972, %v3970
    %v4009 = vpack.c.b16 %v3973, %v3971
    %v4010 = vpack.c.b16 %v3976, %v3974
    %v4011 = vpack.c.b16 %v3977, %v3975
    %v4012 = vpack.c.b16 %v3980, %v3978
    %v4013 = vpack.c.b16 %v3981, %v3979
    %4046 = vmatpush.bf16.msra.mxu0 %v3996
    %4047 = vmatpush.bf16.msra.mxu0 %v3994
    %4048 = vmatpush.bf16.msra.mxu0 %v3992
    %4049 = vmatpush.bf16.msra.mxu0 %v3990
    %4050 = vmatpush.bf16.msra.mxu0 %v3988
    %4051 = vmatpush.bf16.msra.mxu0 %v3986
    %4052 = vmatpush.bf16.msra.mxu0 %v3984
    %4053 = vmatpush.bf16.msra.mxu0 %v3982
    %4054 = vmatmul.bf16.gmra.mxu0 %v3846
    %v4055 = vpop.f32.mrf.mxu0
    %v4056 = vadd.f32 %v3882, %v4055
    %v4057 = vpop.f32.mrf.mxu0
    %4058 = vdwg.mxu0
    %4059 = vmatpush.bf16.msra.mxu0 %v4012
    %4060 = vmatpush.bf16.msra.mxu0 %v4010
    %4061 = vmatpush.bf16.msra.mxu0 %v4008
    %4062 = vmatpush.bf16.msra.mxu0 %v4006
    %4063 = vmatpush.bf16.msra.mxu0 %v4004
    %4064 = vmatpush.bf16.msra.mxu0 %v4002
    %4065 = vmatpush.bf16.msra.mxu0 %v4000
    %4066 = vmatpush.bf16.msra.mxu0 %v3998
    %4067 = vmatmul.bf16.gmra.mxu0 %v3847
    %v4068 = vpop.f32.mrf.mxu0
    %v4069 = vadd.f32 %v4056, %v4068
    %v4070 = vpop.f32.mrf.mxu0
    %4071 = vdwg.mxu0
    %4072 = vmatpush.bf16.msra.mxu0 %v3997
    %4073 = vmatpush.bf16.msra.mxu0 %v3995
    %4074 = vmatpush.bf16.msra.mxu0 %v3993
    %4075 = vmatpush.bf16.msra.mxu0 %v3991
    %4076 = vmatpush.bf16.msra.mxu0 %v3989
    %4077 = vmatpush.bf16.msra.mxu0 %v3987
    %4078 = vmatpush.bf16.msra.mxu0 %v3985
    %4079 = vmatpush.bf16.msra.mxu0 %v3983
    %4080 = vmatmul.bf16.gmra.mxu0 %v3846
    %v4081 = vpop.f32.mrf.mxu0
    %v4082 = vadd.f32 %v3883, %v4081
    %v4083 = vpop.f32.mrf.mxu0
    %4084 = vdwg.mxu0
    %4085 = vmatpush.bf16.msra.mxu0 %v4013
    %4086 = vmatpush.bf16.msra.mxu0 %v4011
    %4087 = vmatpush.bf16.msra.mxu0 %v4009
    %4088 = vmatpush.bf16.msra.mxu0 %v4007
    %4089 = vmatpush.bf16.msra.mxu0 %v4005
    %4090 = vmatpush.bf16.msra.mxu0 %v4003
    %4091 = vmatpush.bf16.msra.mxu0 %v4001
    %4092 = vmatpush.bf16.msra.mxu0 %v3999
    %4093 = vmatmul.bf16.gmra.mxu0 %v3847
    %v4094 = vpop.f32.mrf.mxu0
    %v4095 = vadd.f32 %v4082, %v4094
    %v4096 = vpop.f32.mrf.mxu0
    %4097 = vdwg.mxu0
    %v4098 = vmax.f32 %v4069, 0.0
    %v4099 = vmax.f32 %v4095, 0.0
    %v4100 = vpack.c.bf16 %v4098, %v4098
    %v4101 = vpack.c.bf16 %v4099, %v4099
    %v4102 = vld [vmem:[#allocation16] sm:$0xf]
    %v4103 = vld [vmem:[#allocation16 + $0x4] sm:$0xf]
    %v4104 = vld [vmem:[#allocation16 + $0x8] sm:$0xf]
    %v4105 = vld [vmem:[#allocation16 + $0xc] sm:$0xf]
    %v4106 = vld [vmem:[#allocation16 + $0x10] sm:$0xf]
    %v4107 = vld [vmem:[#allocation16 + $0x14] sm:$0xf]
    %v4108 = vld [vmem:[#allocation16 + $0x18] sm:$0xf]
    %v4109 = vld [vmem:[#allocation16 + $0x1c] sm:$0xf]
    %v4110 = vld [vmem:[#allocation16 + $0x20] sm:$0xf]
    %v4111 = vld [vmem:[#allocation16 + $0x24] sm:$0xf]
    %v4112 = vld [vmem:[#allocation16 + $0x28] sm:$0xf]
    %v4113 = vld [vmem:[#allocation16 + $0x2c] sm:$0xf]
    %v4114 = vld [vmem:[#allocation16 + $0x30] sm:$0xf]
    %v4115 = vld [vmem:[#allocation16 + $0x34] sm:$0xf]
    %v4116 = vld [vmem:[#allocation16 + $0x38] sm:$0xf]
    %v4117 = vld [vmem:[#allocation16 + $0x3c] sm:$0xf]
    %v4118 = vld [vmem:[#allocation16 + $0x40] sm:$0xf]
    %v4119 = vld [vmem:[#allocation16 + $0x44] sm:$0xf]
    %v4120 = vld [vmem:[#allocation16 + $0x48] sm:$0xf]
    %v4121 = vld [vmem:[#allocation16 + $0x4c] sm:$0xf]
    %v4122 = vld [vmem:[#allocation16 + $0x50] sm:$0xf]
    %v4123 = vld [vmem:[#allocation16 + $0x54] sm:$0xf]
    %v4124 = vld [vmem:[#allocation16 + $0x58] sm:$0xf]
    %v4125 = vld [vmem:[#allocation16 + $0x5c] sm:$0xf]
    %v4126 = vld [vmem:[#allocation16 + $0x60] sm:$0xf]
    %v4127 = vld [vmem:[#allocation16 + $0x64] sm:$0xf]
    %v4128 = vld [vmem:[#allocation16 + $0x68] sm:$0xf]
    %v4129 = vld [vmem:[#allocation16 + $0x6c] sm:$0xf]
    %v4130 = vld [vmem:[#allocation16 + $0x70] sm:$0xf]
    %v4131 = vld [vmem:[#allocation16 + $0x74] sm:$0xf]
    %v4132 = vld [vmem:[#allocation16 + $0x78] sm:$0xf]
    %v4133 = vld [vmem:[#allocation16 + $0x7c] sm:$0xf]
    %v4134 = vld [vmem:[%s11] sm:$0x1]
    %v4136 = vperm.slane %v4134, 0
    %v4170 = vunpack.c.l.b16 %v4102
    %v4171 = vunpack.c.l.b16 %v4103
    %v4172 = vunpack.c.l.b16 %v4104
    %v4173 = vunpack.c.l.b16 %v4105
    %v4174 = vunpack.c.l.b16 %v4106
    %v4175 = vunpack.c.l.b16 %v4107
    %v4176 = vunpack.c.l.b16 %v4108
    %v4177 = vunpack.c.l.b16 %v4109
    %v4178 = vunpack.c.l.b16 %v4110
    %v4179 = vunpack.c.l.b16 %v4111
    %v4180 = vunpack.c.l.b16 %v4112
    %v4181 = vunpack.c.l.b16 %v4113
    %v4182 = vunpack.c.l.b16 %v4114
    %v4183 = vunpack.c.l.b16 %v4115
    %v4184 = vunpack.c.l.b16 %v4116
    %v4185 = vunpack.c.l.b16 %v4117
    %v4186 = vunpack.c.l.b16 %v4118
    %v4187 = vunpack.c.l.b16 %v4119
    %v4188 = vunpack.c.l.b16 %v4120
    %v4189 = vunpack.c.l.b16 %v4121
    %v4190 = vunpack.c.l.b16 %v4122
    %v4191 = vunpack.c.l.b16 %v4123
    %v4192 = vunpack.c.l.b16 %v4124
    %v4193 = vunpack.c.l.b16 %v4125
    %v4194 = vunpack.c.l.b16 %v4126
    %v4195 = vunpack.c.l.b16 %v4127
    %v4196 = vunpack.c.l.b16 %v4128
    %v4197 = vunpack.c.l.b16 %v4129
    %v4198 = vunpack.c.l.b16 %v4130
    %v4199 = vunpack.c.l.b16 %v4131
    %v4200 = vunpack.c.l.b16 %v4132
    %v4201 = vunpack.c.l.b16 %v4133
    %v4202 = vpack.c.b16 %v4171, %v4170
    %v4203 = vpack.c.b16 %v4173, %v4172
    %v4204 = vpack.c.b16 %v4175, %v4174
    %v4205 = vpack.c.b16 %v4177, %v4176
    %v4206 = vpack.c.b16 %v4179, %v4178
    %v4207 = vpack.c.b16 %v4181, %v4180
    %v4208 = vpack.c.b16 %v4183, %v4182
    %v4209 = vpack.c.b16 %v4185, %v4184
    %v4210 = vpack.c.b16 %v4187, %v4186
    %v4211 = vpack.c.b16 %v4189, %v4188
    %v4212 = vpack.c.b16 %v4191, %v4190
    %v4213 = vpack.c.b16 %v4193, %v4192
    %v4214 = vpack.c.b16 %v4195, %v4194
    %v4215 = vpack.c.b16 %v4197, %v4196
    %v4216 = vpack.c.b16 %v4199, %v4198
    %v4217 = vpack.c.b16 %v4201, %v4200
    %4234 = vmatpush.bf16.msra.mxu0 %v4209
    %4235 = vmatpush.bf16.msra.mxu0 %v4208
    %4236 = vmatpush.bf16.msra.mxu0 %v4207
    %4237 = vmatpush.bf16.msra.mxu0 %v4206
    %4238 = vmatpush.bf16.msra.mxu0 %v4205
    %4239 = vmatpush.bf16.msra.mxu0 %v4204
    %4240 = vmatpush.bf16.msra.mxu0 %v4203
    %4241 = vmatpush.bf16.msra.mxu0 %v4202
    %4242 = vmatmul.bf16.gmra.mxu0 %v4100
    %v4243 = vpop.f32.mrf.mxu0
    %v4244 = vadd.f32 %v4136, %v4243
    %v4245 = vpop.f32.mrf.mxu0
    %4246 = vdwg.mxu0
    %4247 = vmatpush.bf16.msra.mxu0 %v4217
    %4248 = vmatpush.bf16.msra.mxu0 %v4216
    %4249 = vmatpush.bf16.msra.mxu0 %v4215
    %4250 = vmatpush.bf16.msra.mxu0 %v4214
    %4251 = vmatpush.bf16.msra.mxu0 %v4213
    %4252 = vmatpush.bf16.msra.mxu0 %v4212
    %4253 = vmatpush.bf16.msra.mxu0 %v4211
    %4254 = vmatpush.bf16.msra.mxu0 %v4210
    %4255 = vmatmul.bf16.gmra.mxu0 %v4101
    %v4256 = vpop.f32.mrf.mxu0
    %v4257 = vadd.f32 %v4244, %v4256
    %v4258 = vpop.f32.mrf.mxu0
    %4259 = vdwg.mxu0
    %4260 = vst [vmem:[#allocation17] sm:$0xff] %v4257
    // Predicated region
    $region78: #{tpu_custom_call.1} parent=1 // pred_check
      _
    $region79: #{tpu_custom_call.1} parent=1 // pred_check_branch
      %4262 = sbr.rel (0) target = $region81
    $region80: #{tpu_custom_call.1} parent=1 // pred_region
      %4264 = vsyncadd [#allocation7], 0
      %s4266 = sshll.u32 [#allocation17], 4
      %s4267 = int_to_ptr.vmem [resolvable:$true] %s4266
      %s4268 = sshll.u32 %s12, 4
      %s4269 = int_to_ptr.hbm [resolvable:$true] %s4268
      %4271 = dma.vmem_to_hbm [thread:$0]  %s4267, 128, %s4269, [#allocation7]
    $region81: #{tpu_custom_call.1} parent=1 // pred_fallthru
      _
    // Predicated region
    $region82: #{tpu_custom_call.1} parent=1 // pred_check
      _
    $region83: #{tpu_custom_call.1} parent=1 // pred_check_branch
      %4273 = sbr.rel (0) target = $region85
    $region84: #{tpu_custom_call.1} parent=1 // pred_region
      %4275 = dma.done [#allocation7], 128
    $region85: #{tpu_custom_call.1} parent=1 // pred_fallthru
      _
    %4276 = vsyncpa [#allocation6], 1
    %4277 = vsyncpa [#allocation9], 1
    %4278 = vsyncpa [#allocation12], 1
    %4279 = vsyncpa [#allocation15], 1
    %4280 = vsyncpa [#allocation7], 1

</llo_original>
